<compile_context>
chip_gen: v5e
topology: v5e:2x2
jax: 0.10.0
libtpu: 0.0.40
codegen_flags: <defaults>
</compile_context>

<pallas_src>
import jax
import jax.numpy as jnp
from jax import lax
from jax.experimental import pallas as pl
from jax.experimental.pallas import tpu as pltpu

EPS = 1e-5                      # nn.BatchNorm2d default eps
LANE = 128                      # TPU lane width


def _round_up(x, m):
    return (x + m - 1) // m * m


def _vmem_limit_bytes():
    """Generation-aware scoped-VMEM limit (~60% of capacity, capped)."""
    try:
        info = pltpu.get_tpu_info()
        cap = getattr(info, "vmem_capacity_bytes", None)
        if cap:
            return min((int(cap) * 3) // 5, 96 * 1024 * 1024)
    except Exception:
        pass
    return 48 * 1024 * 1024


_VMEM_LIMIT = _vmem_limit_bytes()


def _compiler_params():
    return pltpu.CompilerParams(
        dimension_semantics=("parallel",),   # image axis -> shard across TCs
        vmem_limit_bytes=_VMEM_LIMIT,
    )


def _img_spec(shape):
    """Per-grid-step block: one image (leading dim 1), everything else full."""
    nd = len(shape)
    return pl.BlockSpec((1,) + tuple(shape[1:]),
                        lambda n, _nd=nd: (n,) + (0,) * (_nd - 1))


def _full_spec(shape):
    """Grid-resident block: the whole array every step (weights / affine)."""
    nd = len(shape)
    return pl.BlockSpec(tuple(shape), lambda n, _nd=nd: (0,) * _nd)


def _partial_stats(acc, inv_n):
    """Per-image (sum, centered sum-of-squares) -> (2, cp), for Chan combine."""
    s = jnp.sum(acc, axis=0, keepdims=True)
    d = acc - s * inv_n
    return jnp.concatenate([s, jnp.sum(d * d, axis=0, keepdims=True)], axis=0)


# ----------------------------- Pallas kernels ------------------------------ #
def _make_conv1_kernel(stride, Ho, Wo, cin_p, proj):
    """conv1 (3x3, stride s) as 3 K-stacked bf16 matmuls + BN partial stats.

    proj=True additionally computes the 1x1-projection-shortcut BN partial
    stats (the projection itself is recomputed, fused, in the output kernel).
    """
    n_pix = Ho * Wo
    inv_n = 1.0 / n_pix

    def _tap(x_ref, kh, kw):
        if stride == 1:
            # x_ref: (1, H+2, W+2, cin_p) bf16
            return x_ref[0, pl.ds(kh, Ho), pl.ds(kw, Wo), :]
        # x_ref: (1, Hp/s, s, Wp/s, s*cin_p) bf16 (phase-folded)
        return x_ref[0,
                     pl.ds(kh // stride, Ho),
                     kh % stride,
                     pl.ds(kw // stride, Wo),
                     pl.ds((kw % stride) * cin_p, cin_p)]

    def _lhs(x_ref, kh):
        # stack the three kw taps along the channel axis -> K = 3*cin_p
        taps = [_tap(x_ref, kh, kw) for kw in range(3)]
        return jnp.concatenate(taps, axis=-1).reshape(n_pix, 3 * cin_p)

    def kernel(*refs):
        if proj:
            x_ref, w_ref, xs_ref, wsc_ref, y_ref, st_ref, scst_ref = refs
        else:
            x_ref, w_ref, y_ref, st_ref = refs
        cp = y_ref.shape[-1]

        acc = jnp.dot(_lhs(x_ref, 0), w_ref[0],
                      preferred_element_type=jnp.float32)
        for kh in (1, 2):
            acc = acc + jnp.dot(_lhs(x_ref, kh), w_ref[kh],
                                preferred_element_type=jnp.float32)

        y_ref[0] = acc.reshape(Ho, Wo, cp).astype(y_ref.dtype)
        st_ref[0] = _partial_stats(acc, inv_n)

        if proj:
            ysc = jnp.dot(xs_ref[0].reshape(n_pix, cin_p), wsc_ref[...],
                          preferred_element_type=jnp.float32)
            scst_ref[0] = _partial_stats(ysc, inv_n)
    return kernel


def _make_conv2_kernel(Ho, Wo, cp):
    """bn1-affine + relu + conv2 (3x3, stride 1) + BN2 partial stats, fused.

    The relu'd activation is written once (as bf16) into a spatially padded
    VMEM scratch so conv2 reads its own zero halo without any HBM round trip.
    Only the halo ring is zeroed per step; the interior is fully overwritten.
    """
    n_pix = Ho * Wo
    inv_n = 1.0 / n_pix

    def kernel(y1_ref, sc_ref, sh_ref, w_ref, y2_ref, st_ref, apad_ref):
        # zero only the 1-pixel halo ring (interior rewritten every step)
        zrow = jnp.zeros((1, Wo + 2, cp), jnp.bfloat16)
        apad_ref[pl.ds(0, 1)] = zrow
        apad_ref[pl.ds(Ho + 1, 1)] = zrow
        zcol = jnp.zeros((Ho, 1, cp), jnp.bfloat16)
        apad_ref[pl.ds(1, Ho), pl.ds(0, 1), :] = zcol
        apad_ref[pl.ds(1, Ho), pl.ds(Wo + 1, 1), :] = zcol

        # bn1 affine + relu, cast to bf16 exactly once
        a = jnp.maximum(sc_ref[...] * y1_ref[0] + sh_ref[...], 0.0)
        apad_ref[pl.ds(1, Ho), pl.ds(1, Wo), :] = a.astype(jnp.bfloat16)

        def _lhs(kh):
            taps = [apad_ref[pl.ds(kh, Ho), pl.ds(kw, Wo), :] for kw in range(3)]
            return jnp.concatenate(taps, axis=-1).reshape(n_pix, 3 * cp)

        acc = jnp.dot(_lhs(0), w_ref[0], preferred_element_type=jnp.float32)
        for kh in (1, 2):
            acc = acc + jnp.dot(_lhs(kh), w_ref[kh],
                                preferred_element_type=jnp.float32)

        y2_ref[0] = acc.reshape(Ho, Wo, cp).astype(y2_ref.dtype)
        st_ref[0] = _partial_stats(acc, inv_n)
    return kernel


def _make_out_kernel(proj, Ho, Wo, cin_p):
    """bn2-affine + shortcut add + relu, fused (projection 1x1 recomputed)."""
    if proj:
        def kernel(y2_ref, sc2_ref, sh2_ref, xs_ref, wsc_ref, scs_ref, shs_ref, o_ref):
            cp = o_ref.shape[-1]
            ysc = jnp.dot(xs_ref[0].reshape(Ho * Wo, cin_p), wsc_ref[...],
                          preferred_element_type=jnp.float32)
            sc = scs_ref[...] * ysc.reshape(Ho, Wo, cp) + shs_ref[...]
            o_ref[0] = jnp.maximum(sc2_ref[...] * y2_ref[0] + sh2_ref[...] + sc, 0.0)
    else:
        def kernel(y2_ref, sc2_ref, sh2_ref, xs_ref, o_ref):
            o_ref[0] = jnp.maximum(
                sc2_ref[...] * y2_ref[0] + sh2_ref[...] + xs_ref[0], 0.0)
    return kernel


# ------------------------------- JAX glue ---------------------------------- #
def _bn_affine(stats, gamma, beta, n_pix, cp):
    """Fold per-image (sum, M2) partials (Chan combine) into (scale, shift)."""
    st = stats.astype(jnp.float32)            # (N, 2, cp)
    sums = st[:, 0, :]                         # per-image sums
    m2s = st[:, 1, :]                          # per-image centered SSQ
    n_img = st.shape[0]
    total = n_img * n_pix
    mean = jnp.sum(sums, axis=0) / total
    mean_i = sums / n_pix
    m2 = jnp.sum(m2s, axis=0) + n_pix * jnp.sum(jnp.square(mean_i - mean), axis=0)
    var = jnp.maximum(m2 / total, 0.0)         # biased batch var (BN training)
    inv = lax.rsqrt(var + EPS)
    g = jnp.pad(gamma, (0, cp - gamma.shape[0]))
    b = jnp.pad(beta, (0, cp - beta.shape[0]))
    scale = g * inv
    shift = b - mean * scale
    return (scale.reshape(1, cp).astype(jnp.float32),
            shift.reshape(1, cp).astype(jnp.float32))


def init_basic_block_params(key, in_planes, planes, stride):
    ks = jax.random.split(key, 9)
    p = {
        "conv1_w": 0.1 * jax.random.normal(ks[0], (planes, in_planes, 3, 3), jnp.float32),
        "bn1_g": 1.0 + 0.1 * jax.random.normal(ks[1], (planes,), jnp.float32),
        "bn1_b": 0.1 * jax.random.normal(ks[2], (planes,), jnp.float32),
        "conv2_w": 0.1 * jax.random.normal(ks[3], (planes, planes, 3, 3), jnp.float32),
        "bn2_g": 1.0 + 0.1 * jax.random.normal(ks[4], (planes,), jnp.float32),
        "bn2_b": 0.1 * jax.random.normal(ks[5], (planes,), jnp.float32),
    }
    if stride != 1 or in_planes != planes:
        p["sc_w"] = 0.1 * jax.random.normal(ks[6], (planes, in_planes, 1, 1), jnp.float32)
        p["sc_g"] = 1.0 + 0.1 * jax.random.normal(ks[7], (planes,), jnp.float32)
        p["sc_b"] = 0.1 * jax.random.normal(ks[8], (planes,), jnp.float32)
    return p


def basic_block_forward_nhwc(x_nhwc, params, stride):
    """BasicBlock forward, NHWC in / NHWC out (chain this across blocks)."""
    N, H, W, Cin = x_nhwc.shape
    planes = params["conv1_w"].shape[0]
    s = int(stride)
    cin_p = _round_up(Cin, LANE)
    cp = _round_up(planes, LANE)
    Ho = (H - 1) // s + 1
    Wo = (W - 1) // s + 1
    n_pix = Ho * Wo
    M = N * n_pix
    proj = (s != 1) or (Cin != planes)

    # lane-dense channel padding
    x_cp = jnp.pad(x_nhwc, ((0, 0), (0, 0), (0, 0), (0, cin_p - Cin)))

    # spatially padded (and, for stride>1, phase-folded) bf16 conv1 input
    xp = jnp.pad(x_cp, ((0, 0), (1, 1), (1, 1), (0, 0)))
    if s == 1:
        x5 = xp.astype(jnp.bfloat16)                                   # (N,H+2,W+2,cin_p)
    else:
        Hp = _round_up(H + 2, s)
        Wp = _round_up(W + 2, s)
        xp = jnp.pad(xp, ((0, 0), (0, Hp - (H + 2)), (0, Wp - (W + 2)), (0, 0)))
        x5 = xp.astype(jnp.bfloat16).reshape(N, Hp // s, s, Wp // s, s * cin_p)

    # shortcut source (strided spatial subsample, no padding)
    xs = x_cp[:, ::s, ::s, :][:, :Ho, :Wo, :]

    # --- weights: K-stacked (kh, 3*cin, cout) bf16, zero padded ---
    w1 = jnp.transpose(params["conv1_w"], (2, 3, 1, 0))                # (3,3,Cin,planes)
    w1 = jnp.pad(w1, ((0, 0), (0, 0), (0, cin_p - Cin), (0, cp - planes)))
    w1 = w1.reshape(3, 3 * cin_p, cp).astype(jnp.bfloat16)
    w2 = jnp.transpose(params["conv2_w"], (2, 3, 1, 0))
    w2 = jnp.pad(w2, ((0, 0), (0, 0), (0, cp - planes), (0, cp - planes)))
    w2 = w2.reshape(3, 3 * cp, cp).astype(jnp.bfloat16)

    y_shape = (N, Ho, Wo, cp)
    st_shape = (N, 2, cp)

    # ------------------ pass 1: conv1 (+ shortcut stats) ------------------ #
    if proj:
        xs_bf = xs.astype(jnp.bfloat16)
        wsc = jnp.transpose(params["sc_w"].reshape(planes, Cin), (1, 0))
        wsc = jnp.pad(wsc, ((0, cin_p - Cin), (0, cp - planes))).astype(jnp.bfloat16)
        flops_a = 2 * M * (9 * cin_p + cin_p) * cp
        bytes_a = 2 * (x5.size + w1.size + xs_bf.size + wsc.size) + 2 * M * cp + 4 * 4 * N * cp
        y1, stats1, sc_stats = pl.pallas_call(
            _make_conv1_kernel(s, Ho, Wo, cin_p, True),
            grid=(N,),
            in_specs=[_img_spec(x5.shape), _full_spec(w1.shape),
                      _img_spec(xs_bf.shape), _full_spec(wsc.shape)],
            out_specs=(_img_spec(y_shape), _img_spec(st_shape), _img_spec(st_shape)),
            out_shape=(jax.ShapeDtypeStruct(y_shape, jnp.bfloat16),
                       jax.ShapeDtypeStruct(st_shape, jnp.float32),
                       jax.ShapeDtypeStruct(st_shape, jnp.float32)),
            compiler_params=_compiler_params(),
            cost_estimate=pl.CostEstimate(flops=flops_a, transcendentals=0,
                                          bytes_accessed=bytes_a),
        )(x5, w1, xs_bf, wsc)
    else:
        flops_a = 2 * M * 9 * cin_p * cp
        bytes_a = 2 * (x5.size + w1.size) + 2 * M * cp + 4 * 2 * N * cp
        y1, stats1 = pl.pallas_call(
            _make_conv1_kernel(s, Ho, Wo, cin_p, False),
            grid=(N,),
            in_specs=[_img_spec(x5.shape), _full_spec(w1.shape)],
            out_specs=(_img_spec(y_shape), _img_spec(st_shape)),
            out_shape=(jax.ShapeDtypeStruct(y_shape, jnp.bfloat16),
                       jax.ShapeDtypeStruct(st_shape, jnp.float32)),
            compiler_params=_compiler_params(),
            cost_estimate=pl.CostEstimate(flops=flops_a, transcendentals=0,
                                          bytes_accessed=bytes_a),
        )(x5, w1)

    scale1, shift1 = _bn_affine(stats1, params["bn1_g"], params["bn1_b"], n_pix, cp)

    # ---------------- pass 2: bn1+relu+conv2 (fused in VMEM) --------------- #
    flops_b = 2 * M * 9 * cp * cp
    bytes_b = 2 * 2 * M * cp + 2 * w2.size + 4 * 2 * N * cp
    y2, stats2 = pl.pallas_call(
        _make_conv2_kernel(Ho, Wo, cp),
        grid=(N,),
        in_specs=[_img_spec(y_shape), _full_spec(scale1.shape),
                  _full_spec(shift1.shape), _full_spec(w2.shape)],
        out_specs=(_img_spec(y_shape), _img_spec(st_shape)),
        out_shape=(jax.ShapeDtypeStruct(y_shape, jnp.bfloat16),
                   jax.ShapeDtypeStruct(st_shape, jnp.float32)),
        scratch_shapes=[pltpu.VMEM((Ho + 2, Wo + 2, cp), jnp.bfloat16)],
        compiler_params=_compiler_params(),
        cost_estimate=pl.CostEstimate(flops=flops_b, transcendentals=0,
                                      bytes_accessed=bytes_b),
    )(y1, scale1, shift1, w2)

    scale2, shift2 = _bn_affine(stats2, params["bn2_g"], params["bn2_b"], n_pix, cp)

    # --------------- pass 3: bn2 + shortcut + add + relu ------------------- #
    if proj:
        sc_scale, sc_shift = _bn_affine(sc_stats, params["sc_g"], params["sc_b"], n_pix, cp)
        out = pl.pallas_call(
            _make_out_kernel(True, Ho, Wo, cin_p),
            grid=(N,),
            in_specs=[_img_spec(y_shape), _full_spec(scale2.shape), _full_spec(shift2.shape),
                      _img_spec(xs_bf.shape), _full_spec(wsc.shape),
                      _full_spec(sc_scale.shape), _full_spec(sc_shift.shape)],
            out_specs=_img_spec(y_shape),
            out_shape=jax.ShapeDtypeStruct(y_shape, jnp.float32),
            compiler_params=_compiler_params(),
            cost_estimate=pl.CostEstimate(flops=2 * M * cin_p * cp, transcendentals=0,
                                          bytes_accessed=2 * 2 * M * cp + 4 * M * cp),
        )(y2, scale2, shift2, xs_bf, wsc, sc_scale, sc_shift)
    else:
        out = pl.pallas_call(
            _make_out_kernel(False, Ho, Wo, cin_p),
            grid=(N,),
            in_specs=[_img_spec(y_shape), _full_spec(scale2.shape), _full_spec(shift2.shape),
                      _img_spec(xs.shape)],
            out_specs=_img_spec(y_shape),
            out_shape=jax.ShapeDtypeStruct(y_shape, jnp.float32),
            compiler_params=_compiler_params(),
            cost_estimate=pl.CostEstimate(flops=4 * M * cp, transcendentals=0,
                                          bytes_accessed=2 * M * cp + 4 * 2 * M * cp),
        )(y2, scale2, shift2, xs)

    return out[:, :, :, :planes]                # drop lane padding, stay NHWC


def basic_block_forward(x_nchw, params, stride):
    """ResNet BasicBlock forward; x: (N, Cin, H, W) f32 -> (N, planes, Ho, Wo)."""
    x_nhwc = jnp.transpose(x_nchw, (0, 2, 3, 1))
    out = basic_block_forward_nhwc(x_nhwc, params, stride)
    return jnp.transpose(out, (0, 3, 1, 2))     # back to NCHW


# ------------------------- pure-JAX reference (f32) ------------------------ #
def _ref_forward(x, params, stride):
    def conv(z, w, s, pad):
        return lax.conv_general_dilated(z, w, (s, s), (pad, pad),
                                        dimension_numbers=("NCHW", "OIHW", "NCHW"))

    def bn(y, g, b):
        mean = jnp.mean(y, axis=(0, 2, 3), keepdims=True)
        var = jnp.mean(jnp.square(y - mean), axis=(0, 2, 3), keepdims=True)
        return g.reshape(1, -1, 1, 1) * (y - mean) * lax.rsqrt(var + EPS) + b.reshape(1, -1, 1, 1)

    out = jax.nn.relu(bn(conv(x, params["conv1_w"], stride, (1, 1)),
                         params["bn1_g"], params["bn1_b"]))
    out = bn(conv(out, params["conv2_w"], 1, (1, 1)), params["bn2_g"], params["bn2_b"])
    if "sc_w" in params:
        sc = bn(conv(x, params["sc_w"], stride, (0, 0)), params["sc_g"], params["sc_b"])
    else:
        sc = x
    return jax.nn.relu(out + sc)


if __name__ == "__main__":
    key = jax.random.PRNGKey(0)
    kx, kp1, kp2 = jax.random.split(key, 3)
    x = jax.random.normal(kx, (2, 4, 16, 16), jnp.float32)   # NCHW

    fwd = jax.jit(basic_block_forward, static_argnums=2)

    # case 1: stride=2, channel change -> projection shortcut (1x1 conv + BN)
    params_a = init_basic_block_params(kp1, in_planes=4, planes=8, stride=2)
    out_a = fwd(x, params_a, 2)
    jax.block_until_ready(out_a)
    assert out_a.shape == (2, 8, 8, 8)
    assert bool(jnp.all(jnp.isfinite(out_a)))
    assert bool(jnp.all(out_a >= 0.0))
    err_a = float(jnp.max(jnp.abs(out_a - _ref_forward(x, params_a, 2))))
    assert err_a < 0.2, f"projection block mismatch vs reference: {err_a}"

    # case 2: stride=1, same channels -> identity shortcut
    params_b = init_basic_block_params(kp2, in_planes=4, planes=4, stride=1)
    out_b = fwd(x, params_b, 1)
    jax.block_until_ready(out_b)
    assert out_b.shape == (2, 4, 16, 16)
    assert bool(jnp.all(jnp.isfinite(out_b)))
    assert bool(jnp.all(out_b >= 0.0))
    err_b = float(jnp.max(jnp.abs(out_b - _ref_forward(x, params_b, 1))))
    assert err_b < 0.2, f"identity block mismatch vs reference: {err_b}"

    print("KERNEL_OK")
</pallas_src>

<mosaic_0001>
module attributes {stable_mosaic.version = 11 : i64} {
  func.func @kernel(%arg0: i32, %arg1: memref<1x9x2x9x256xbf16, #tpu.memory_space<vmem>>, %arg2: memref<3x384x128xbf16, #tpu.memory_space<vmem>>, %arg3: memref<1x8x8x128xbf16, #tpu.memory_space<vmem>>, %arg4: memref<128x128xbf16, #tpu.memory_space<vmem>>, %arg5: memref<1x8x8x128xbf16, #tpu.memory_space<vmem>>, %arg6: memref<1x2x128xf32, #tpu.memory_space<vmem>>, %arg7: memref<1x2x128xf32, #tpu.memory_space<vmem>>) attributes {dimension_semantics = [#tpu.dimension_semantics<parallel>], iteration_bounds = array<i64: 2>, scalar_prefetch = 0 : i64, scratch_operands = 0 : i64, tpu.core_type = #tpu.core_type<tc>, window_params = [{transform_indices = @transform_0, window_bounds = array<i64: 1, 9, 2, 9, 256>}, {pipeline_mode = #tpu.pipeline_mode<synchronous>, transform_indices = @transform_1, window_bounds = array<i64: 3, 384, 128>}, {transform_indices = @transform_2, window_bounds = array<i64: 1, 8, 8, 128>}, {pipeline_mode = #tpu.pipeline_mode<synchronous>, transform_indices = @transform_3, window_bounds = array<i64: 128, 128>}, {transform_indices = @transform_4, window_bounds = array<i64: 1, 8, 8, 128>}, {transform_indices = @transform_5, window_bounds = array<i64: 1, 2, 128>}, {transform_indices = @transform_6, window_bounds = array<i64: 1, 2, 128>}]} {
    %c0 = arith.constant 0 : index
    %c0_0 = arith.constant 0 : index
    %c0_1 = arith.constant 0 : index
    %c0_2 = arith.constant 0 : index
    %c0_3 = arith.constant 0 : index
    %0 = vector.load %arg1[%c0, %c0_0, %c0_1, %c0_2, %c0_3] : memref<1x9x2x9x256xbf16, #tpu.memory_space<vmem>>, vector<1x8x1x8x128xbf16>
    %1 = vector.shape_cast %0 : vector<1x8x1x8x128xbf16> to vector<8x8x128xbf16>
    %c0_4 = arith.constant 0 : index
    %c0_5 = arith.constant 0 : index
    %c0_6 = arith.constant 0 : index
    %c0_7 = arith.constant 0 : index
    %c128 = arith.constant 128 : index
    %2 = vector.load %arg1[%c0_4, %c0_5, %c0_6, %c0_7, %c128] : memref<1x9x2x9x256xbf16, #tpu.memory_space<vmem>>, vector<1x8x1x8x128xbf16>
    %3 = vector.shape_cast %2 : vector<1x8x1x8x128xbf16> to vector<8x8x128xbf16>
    %c0_8 = arith.constant 0 : index
    %c0_9 = arith.constant 0 : index
    %c0_10 = arith.constant 0 : index
    %c1 = arith.constant 1 : index
    %c0_11 = arith.constant 0 : index
    %4 = vector.load %arg1[%c0_8, %c0_9, %c0_10, %c1, %c0_11] : memref<1x9x2x9x256xbf16, #tpu.memory_space<vmem>>, vector<1x8x1x8x128xbf16>
    %5 = vector.shape_cast %4 : vector<1x8x1x8x128xbf16> to vector<8x8x128xbf16>
    %6 = tpu.concatenate %1, %3, %5 in 2 : vector<8x8x128xbf16>, vector<8x8x128xbf16>, vector<8x8x128xbf16> -> vector<8x8x384xbf16>
    %7 = vector.shape_cast %6 : vector<8x8x384xbf16> to vector<64x384xbf16>
    %c0_12 = arith.constant 0 : index
    %c0_13 = arith.constant 0 : index
    %c0_14 = arith.constant 0 : index
    %8 = vector.load %arg2[%c0_12, %c0_13, %c0_14] : memref<3x384x128xbf16, #tpu.memory_space<vmem>>, vector<1x384x128xbf16>
    %9 = vector.shape_cast %8 : vector<1x384x128xbf16> to vector<384x128xbf16>
    %cst = arith.constant dense<0.000000e+00> : vector<64x128xf32>
    %10 = tpu.matmul %7, %9, %cst {dimension_numbers = #tpu.dot_dimension_numbers<[1], [0], [0], [1], [0, 0, 1, 1], [], []>} : vector<64x384xbf16>, vector<384x128xbf16>, vector<64x128xf32> -> vector<64x128xf32>
    %c0_15 = arith.constant 0 : index
    %c0_16 = arith.constant 0 : index
    %c1_17 = arith.constant 1 : index
    %c0_18 = arith.constant 0 : index
    %c0_19 = arith.constant 0 : index
    %11 = vector.load %arg1[%c0_15, %c0_16, %c1_17, %c0_18, %c0_19] : memref<1x9x2x9x256xbf16, #tpu.memory_space<vmem>>, vector<1x8x1x8x128xbf16>
    %12 = vector.shape_cast %11 : vector<1x8x1x8x128xbf16> to vector<8x8x128xbf16>
    %c0_20 = arith.constant 0 : index
    %c0_21 = arith.constant 0 : index
    %c1_22 = arith.constant 1 : index
    %c0_23 = arith.constant 0 : index
    %c128_24 = arith.constant 128 : index
    %13 = vector.load %arg1[%c0_20, %c0_21, %c1_22, %c0_23, %c128_24] : memref<1x9x2x9x256xbf16, #tpu.memory_space<vmem>>, vector<1x8x1x8x128xbf16>
    %14 = vector.shape_cast %13 : vector<1x8x1x8x128xbf16> to vector<8x8x128xbf16>
    %c0_25 = arith.constant 0 : index
    %c0_26 = arith.constant 0 : index
    %c1_27 = arith.constant 1 : index
    %c1_28 = arith.constant 1 : index
    %c0_29 = arith.constant 0 : index
    %15 = vector.load %arg1[%c0_25, %c0_26, %c1_27, %c1_28, %c0_29] : memref<1x9x2x9x256xbf16, #tpu.memory_space<vmem>>, vector<1x8x1x8x128xbf16>
    %16 = vector.shape_cast %15 : vector<1x8x1x8x128xbf16> to vector<8x8x128xbf16>
    %17 = tpu.concatenate %12, %14, %16 in 2 : vector<8x8x128xbf16>, vector<8x8x128xbf16>, vector<8x8x128xbf16> -> vector<8x8x384xbf16>
    %18 = vector.shape_cast %17 : vector<8x8x384xbf16> to vector<64x384xbf16>
    %c1_30 = arith.constant 1 : index
    %c0_31 = arith.constant 0 : index
    %c0_32 = arith.constant 0 : index
    %19 = vector.load %arg2[%c1_30, %c0_31, %c0_32] : memref<3x384x128xbf16, #tpu.memory_space<vmem>>, vector<1x384x128xbf16>
    %20 = vector.shape_cast %19 : vector<1x384x128xbf16> to vector<384x128xbf16>
    %cst_33 = arith.constant dense<0.000000e+00> : vector<64x128xf32>
    %21 = tpu.matmul %18, %20, %cst_33 {dimension_numbers = #tpu.dot_dimension_numbers<[1], [0], [0], [1], [0, 0, 1, 1], [], []>} : vector<64x384xbf16>, vector<384x128xbf16>, vector<64x128xf32> -> vector<64x128xf32>
    %22 = arith.addf %10, %21 : vector<64x128xf32>
    %c0_34 = arith.constant 0 : index
    %c1_35 = arith.constant 1 : index
    %c0_36 = arith.constant 0 : index
    %c0_37 = arith.constant 0 : index
    %c0_38 = arith.constant 0 : index
    %23 = vector.load %arg1[%c0_34, %c1_35, %c0_36, %c0_37, %c0_38] : memref<1x9x2x9x256xbf16, #tpu.memory_space<vmem>>, vector<1x8x1x8x128xbf16>
    %24 = vector.shape_cast %23 : vector<1x8x1x8x128xbf16> to vector<8x8x128xbf16>
    %c0_39 = arith.constant 0 : index
    %c1_40 = arith.constant 1 : index
    %c0_41 = arith.constant 0 : index
    %c0_42 = arith.constant 0 : index
    %c128_43 = arith.constant 128 : index
    %25 = vector.load %arg1[%c0_39, %c1_40, %c0_41, %c0_42, %c128_43] : memref<1x9x2x9x256xbf16, #tpu.memory_space<vmem>>, vector<1x8x1x8x128xbf16>
    %26 = vector.shape_cast %25 : vector<1x8x1x8x128xbf16> to vector<8x8x128xbf16>
    %c0_44 = arith.constant 0 : index
    %c1_45 = arith.constant 1 : index
    %c0_46 = arith.constant 0 : index
    %c1_47 = arith.constant 1 : index
    %c0_48 = arith.constant 0 : index
    %27 = vector.load %arg1[%c0_44, %c1_45, %c0_46, %c1_47, %c0_48] : memref<1x9x2x9x256xbf16, #tpu.memory_space<vmem>>, vector<1x8x1x8x128xbf16>
    %28 = vector.shape_cast %27 : vector<1x8x1x8x128xbf16> to vector<8x8x128xbf16>
    %29 = tpu.concatenate %24, %26, %28 in 2 : vector<8x8x128xbf16>, vector<8x8x128xbf16>, vector<8x8x128xbf16> -> vector<8x8x384xbf16>
    %30 = vector.shape_cast %29 : vector<8x8x384xbf16> to vector<64x384xbf16>
    %c2 = arith.constant 2 : index
    %c0_49 = arith.constant 0 : index
    %c0_50 = arith.constant 0 : index
    %31 = vector.load %arg2[%c2, %c0_49, %c0_50] : memref<3x384x128xbf16, #tpu.memory_space<vmem>>, vector<1x384x128xbf16>
    %32 = vector.shape_cast %31 : vector<1x384x128xbf16> to vector<384x128xbf16>
    %cst_51 = arith.constant dense<0.000000e+00> : vector<64x128xf32>
    %33 = tpu.matmul %30, %32, %cst_51 {dimension_numbers = #tpu.dot_dimension_numbers<[1], [0], [0], [1], [0, 0, 1, 1], [], []>} : vector<64x384xbf16>, vector<384x128xbf16>, vector<64x128xf32> -> vector<64x128xf32>
    %34 = arith.addf %22, %33 : vector<64x128xf32>
    %35 = vector.shape_cast %34 : vector<64x128xf32> to vector<8x8x128xf32>
    %36 = arith.truncf %35 : vector<8x8x128xf32> to vector<8x8x128xbf16>
    %c0_52 = arith.constant 0 : index
    %c0_53 = arith.constant 0 : index
    %c0_54 = arith.constant 0 : index
    %c0_55 = arith.constant 0 : index
    %37 = vector.load %arg5[%c0_52, %c0_53, %c0_54, %c0_55] : memref<1x8x8x128xbf16, #tpu.memory_space<vmem>>, vector<1x8x8x128xbf16>
    %38 = vector.shape_cast %37 : vector<1x8x8x128xbf16> to vector<8x8x128xbf16>
    %39 = vector.shape_cast %36 : vector<8x8x128xbf16> to vector<1x8x8x128xbf16>
    tpu.vector_store %arg5[%c0_52, %c0_53, %c0_54, %c0_55], %39 {strides = array<i32>} : memref<1x8x8x128xbf16, #tpu.memory_space<vmem>>, vector<1x8x8x128xbf16>,
    %cst_56 = arith.constant dense<0.000000e+00> : vector<128xf32>
    %40 = vector.multi_reduction <add>, %34, %cst_56 [0] : vector<64x128xf32> to vector<128xf32>
    %41 = vector.shape_cast %40 : vector<128xf32> to vector<1x128xf32>
    %cst_57 = arith.constant 1.562500e-02 : f32
    %42 = vector.broadcast %cst_57 : f32 to vector<1x128xf32>
    %43 = arith.mulf %41, %42 : vector<1x128xf32>
    %44 = vector.broadcast %43 : vector<1x128xf32> to vector<64x128xf32>
    %45 = arith.subf %34, %44 : vector<64x128xf32>
    %46 = arith.mulf %45, %45 : vector<64x128xf32>
    %cst_58 = arith.constant dense<0.000000e+00> : vector<128xf32>
    %47 = vector.multi_reduction <add>, %46, %cst_58 [0] : vector<64x128xf32> to vector<128xf32>
    %48 = vector.shape_cast %47 : vector<128xf32> to vector<1x128xf32>
    %49 = tpu.concatenate %41, %48 in 0 : vector<1x128xf32>, vector<1x128xf32> -> vector<2x128xf32>
    %c0_59 = arith.constant 0 : index
    %c0_60 = arith.constant 0 : index
    %c0_61 = arith.constant 0 : index
    %50 = vector.load %arg6[%c0_59, %c0_60, %c0_61] : memref<1x2x128xf32, #tpu.memory_space<vmem>>, vector<1x2x128xf32>
    %51 = vector.shape_cast %50 : vector<1x2x128xf32> to vector<2x128xf32>
    %52 = vector.shape_cast %49 : vector<2x128xf32> to vector<1x2x128xf32>
    tpu.vector_store %arg6[%c0_59, %c0_60, %c0_61], %52 {strides = array<i32>} : memref<1x2x128xf32, #tpu.memory_space<vmem>>, vector<1x2x128xf32>,
    %c0_62 = arith.constant 0 : index
    %c0_63 = arith.constant 0 : index
    %c0_64 = arith.constant 0 : index
    %c0_65 = arith.constant 0 : index
    %53 = vector.load %arg3[%c0_62, %c0_63, %c0_64, %c0_65] : memref<1x8x8x128xbf16, #tpu.memory_space<vmem>>, vector<1x8x8x128xbf16>
    %54 = vector.shape_cast %53 : vector<1x8x8x128xbf16> to vector<8x8x128xbf16>
    %55 = vector.shape_cast %54 : vector<8x8x128xbf16> to vector<64x128xbf16>
    %c0_66 = arith.constant 0 : index
    %c0_67 = arith.constant 0 : index
    %56 = vector.load %arg4[%c0_66, %c0_67] : memref<128x128xbf16, #tpu.memory_space<vmem>>, vector<128x128xbf16>
    %cst_68 = arith.constant dense<0.000000e+00> : vector<64x128xf32>
    %57 = tpu.matmul %55, %56, %cst_68 {dimension_numbers = #tpu.dot_dimension_numbers<[1], [0], [0], [1], [0, 0, 1, 1], [], []>} : vector<64x128xbf16>, vector<128x128xbf16>, vector<64x128xf32> -> vector<64x128xf32>
    %cst_69 = arith.constant dense<0.000000e+00> : vector<128xf32>
    %58 = vector.multi_reduction <add>, %57, %cst_69 [0] : vector<64x128xf32> to vector<128xf32>
    %59 = vector.shape_cast %58 : vector<128xf32> to vector<1x128xf32>
    %cst_70 = arith.constant 1.562500e-02 : f32
    %60 = vector.broadcast %cst_70 : f32 to vector<1x128xf32>
    %61 = arith.mulf %59, %60 : vector<1x128xf32>
    %62 = vector.broadcast %61 : vector<1x128xf32> to vector<64x128xf32>
    %63 = arith.subf %57, %62 : vector<64x128xf32>
    %64 = arith.mulf %63, %63 : vector<64x128xf32>
    %cst_71 = arith.constant dense<0.000000e+00> : vector<128xf32>
    %65 = vector.multi_reduction <add>, %64, %cst_71 [0] : vector<64x128xf32> to vector<128xf32>
    %66 = vector.shape_cast %65 : vector<128xf32> to vector<1x128xf32>
    %67 = tpu.concatenate %59, %66 in 0 : vector<1x128xf32>, vector<1x128xf32> -> vector<2x128xf32>
    %c0_72 = arith.constant 0 : index
    %c0_73 = arith.constant 0 : index
    %c0_74 = arith.constant 0 : index
    %68 = vector.load %arg7[%c0_72, %c0_73, %c0_74] : memref<1x2x128xf32, #tpu.memory_space<vmem>>, vector<1x2x128xf32>
    %69 = vector.shape_cast %68 : vector<1x2x128xf32> to vector<2x128xf32>
    %70 = vector.shape_cast %67 : vector<2x128xf32> to vector<1x2x128xf32>
    tpu.vector_store %arg7[%c0_72, %c0_73, %c0_74], %70 {strides = array<i32>} : memref<1x2x128xf32, #tpu.memory_space<vmem>>, vector<1x2x128xf32>,
    return
  }
  func.func @transform_0(%arg0: i32) -> (i32, i32, i32, i32, i32) {
    %c0_i32 = arith.constant 0 : i32
    %c0_i32_0 = arith.constant 0 : i32
    %c0_i32_1 = arith.constant 0 : i32
    %c0_i32_2 = arith.constant 0 : i32
    %c0_i32_3 = arith.constant 0 : i32
    return %arg0, %c0_i32, %c0_i32_0, %c0_i32_1, %c0_i32_2 : i32, i32, i32, i32, i32
  }
  func.func @transform_1(%arg0: i32) -> (i32, i32, i32) {
    %c0_i32 = arith.constant 0 : i32
    %c0_i32_0 = arith.constant 0 : i32
    %c0_i32_1 = arith.constant 0 : i32
    %c0_i32_2 = arith.constant 0 : i32
    return %c0_i32, %c0_i32_0, %c0_i32_1 : i32, i32, i32
  }
  func.func @transform_2(%arg0: i32) -> (i32, i32, i32, i32) {
    %c0_i32 = arith.constant 0 : i32
    %c0_i32_0 = arith.constant 0 : i32
    %c0_i32_1 = arith.constant 0 : i32
    %c0_i32_2 = arith.constant 0 : i32
    return %arg0, %c0_i32, %c0_i32_0, %c0_i32_1 : i32, i32, i32, i32
  }
  func.func @transform_3(%arg0: i32) -> (i32, i32) {
    %c0_i32 = arith.constant 0 : i32
    %c0_i32_0 = arith.constant 0 : i32
    %c0_i32_1 = arith.constant 0 : i32
    return %c0_i32, %c0_i32_0 : i32, i32
  }
  func.func @transform_4(%arg0: i32) -> (i32, i32, i32, i32) {
    %c0_i32 = arith.constant 0 : i32
    %c0_i32_0 = arith.constant 0 : i32
    %c0_i32_1 = arith.constant 0 : i32
    %c0_i32_2 = arith.constant 0 : i32
    return %arg0, %c0_i32, %c0_i32_0, %c0_i32_1 : i32, i32, i32, i32
  }
  func.func @transform_5(%arg0: i32) -> (i32, i32, i32) {
    %c0_i32 = arith.constant 0 : i32
    %c0_i32_0 = arith.constant 0 : i32
    %c0_i32_1 = arith.constant 0 : i32
    return %arg0, %c0_i32, %c0_i32_0 : i32, i32, i32
  }
  func.func @transform_6(%arg0: i32) -> (i32, i32, i32) {
    %c0_i32 = arith.constant 0 : i32
    %c0_i32_0 = arith.constant 0 : i32
    %c0_i32_1 = arith.constant 0 : i32
    return %arg0, %c0_i32, %c0_i32_0 : i32, i32, i32
  }
}

module attributes {stable_mosaic.version = 11 : i64} {
  func.func @kernel(%arg0: i32, %arg1: memref<1x8x8x128xbf16, #tpu.memory_space<vmem>>, %arg2: memref<1x128xf32, #tpu.memory_space<vmem>>, %arg3: memref<1x128xf32, #tpu.memory_space<vmem>>, %arg4: memref<3x384x128xbf16, #tpu.memory_space<vmem>>, %arg5: memref<1x8x8x128xbf16, #tpu.memory_space<vmem>>, %arg6: memref<1x2x128xf32, #tpu.memory_space<vmem>>, %arg7: memref<10x10x128xbf16, #tpu.memory_space<vmem>>) attributes {dimension_semantics = [#tpu.dimension_semantics<parallel>], iteration_bounds = array<i64: 2>, scalar_prefetch = 0 : i64, scratch_operands = 1 : i64, tpu.core_type = #tpu.core_type<tc>, window_params = [{transform_indices = @transform_0, window_bounds = array<i64: 1, 8, 8, 128>}, {pipeline_mode = #tpu.pipeline_mode<synchronous>, transform_indices = @transform_1, window_bounds = array<i64: 1, 128>}, {pipeline_mode = #tpu.pipeline_mode<synchronous>, transform_indices = @transform_2, window_bounds = array<i64: 1, 128>}, {pipeline_mode = #tpu.pipeline_mode<synchronous>, transform_indices = @transform_3, window_bounds = array<i64: 3, 384, 128>}, {transform_indices = @transform_4, window_bounds = array<i64: 1, 8, 8, 128>}, {transform_indices = @transform_5, window_bounds = array<i64: 1, 2, 128>}]} {
    %cst = arith.constant 0.000000e+00 : bf16
    %0 = vector.broadcast %cst : bf16 to vector<1x10x128xbf16>
    %c0 = arith.constant 0 : index
    %c0_0 = arith.constant 0 : index
    %c0_1 = arith.constant 0 : index
    %1 = vector.load %arg7[%c0, %c0_0, %c0_1] : memref<10x10x128xbf16, #tpu.memory_space<vmem>>, vector<1x10x128xbf16>
    tpu.vector_store %arg7[%c0, %c0_0, %c0_1], %0 {strides = array<i32>} : memref<10x10x128xbf16, #tpu.memory_space<vmem>>, vector<1x10x128xbf16>,
    %c9 = arith.constant 9 : index
    %c0_2 = arith.constant 0 : index
    %c0_3 = arith.constant 0 : index
    %2 = vector.load %arg7[%c9, %c0_2, %c0_3] : memref<10x10x128xbf16, #tpu.memory_space<vmem>>, vector<1x10x128xbf16>
    tpu.vector_store %arg7[%c9, %c0_2, %c0_3], %0 {strides = array<i32>} : memref<10x10x128xbf16, #tpu.memory_space<vmem>>, vector<1x10x128xbf16>,
    %cst_4 = arith.constant 0.000000e+00 : bf16
    %3 = vector.broadcast %cst_4 : bf16 to vector<8x1x128xbf16>
    %c1 = arith.constant 1 : index
    %c0_5 = arith.constant 0 : index
    %c0_6 = arith.constant 0 : index
    %4 = vector.load %arg7[%c1, %c0_5, %c0_6] : memref<10x10x128xbf16, #tpu.memory_space<vmem>>, vector<8x1x128xbf16>
    tpu.vector_store %arg7[%c1, %c0_5, %c0_6], %3 {strides = array<i32>} : memref<10x10x128xbf16, #tpu.memory_space<vmem>>, vector<8x1x128xbf16>,
    %c1_7 = arith.constant 1 : index
    %c9_8 = arith.constant 9 : index
    %c0_9 = arith.constant 0 : index
    %5 = vector.load %arg7[%c1_7, %c9_8, %c0_9] : memref<10x10x128xbf16, #tpu.memory_space<vmem>>, vector<8x1x128xbf16>
    tpu.vector_store %arg7[%c1_7, %c9_8, %c0_9], %3 {strides = array<i32>} : memref<10x10x128xbf16, #tpu.memory_space<vmem>>, vector<8x1x128xbf16>,
    %c0_10 = arith.constant 0 : index
    %c0_11 = arith.constant 0 : index
    %6 = vector.load %arg2[%c0_10, %c0_11] : memref<1x128xf32, #tpu.memory_space<vmem>>, vector<1x128xf32>
    %c0_12 = arith.constant 0 : index
    %c0_13 = arith.constant 0 : index
    %c0_14 = arith.constant 0 : index
    %c0_15 = arith.constant 0 : index
    %7 = vector.load %arg1[%c0_12, %c0_13, %c0_14, %c0_15] : memref<1x8x8x128xbf16, #tpu.memory_space<vmem>>, vector<1x8x8x128xbf16>
    %8 = vector.shape_cast %7 : vector<1x8x8x128xbf16> to vector<8x8x128xbf16>
    %9 = arith.extf %8 : vector<8x8x128xbf16> to vector<8x8x128xf32>
    %10 = vector.shape_cast %6 : vector<1x128xf32> to vector<1x1x128xf32>
    %11 = vector.broadcast %10 : vector<1x1x128xf32> to vector<8x8x128xf32>
    %12 = arith.mulf %11, %9 : vector<8x8x128xf32>
    %c0_16 = arith.constant 0 : index
    %c0_17 = arith.constant 0 : index
    %13 = vector.load %arg3[%c0_16, %c0_17] : memref<1x128xf32, #tpu.memory_space<vmem>>, vector<1x128xf32>
    %14 = vector.shape_cast %13 : vector<1x128xf32> to vector<1x1x128xf32>
    %15 = vector.broadcast %14 : vector<1x1x128xf32> to vector<8x8x128xf32>
    %16 = arith.addf %12, %15 : vector<8x8x128xf32>
    %cst_18 = arith.constant 0.000000e+00 : f32
    %17 = vector.broadcast %cst_18 : f32 to vector<8x8x128xf32>
    %18 = arith.maximumf %16, %17 : vector<8x8x128xf32>
    %19 = arith.truncf %18 : vector<8x8x128xf32> to vector<8x8x128xbf16>
    %c1_19 = arith.constant 1 : index
    %c1_20 = arith.constant 1 : index
    %c0_21 = arith.constant 0 : index
    %20 = vector.load %arg7[%c1_19, %c1_20, %c0_21] : memref<10x10x128xbf16, #tpu.memory_space<vmem>>, vector<8x8x128xbf16>
    tpu.vector_store %arg7[%c1_19, %c1_20, %c0_21], %19 {strides = array<i32>} : memref<10x10x128xbf16, #tpu.memory_space<vmem>>, vector<8x8x128xbf16>,
    %c0_22 = arith.constant 0 : index
    %c0_23 = arith.constant 0 : index
    %c0_24 = arith.constant 0 : index
    %21 = vector.load %arg7[%c0_22, %c0_23, %c0_24] : memref<10x10x128xbf16, #tpu.memory_space<vmem>>, vector<8x8x128xbf16>
    %c0_25 = arith.constant 0 : index
    %c1_26 = arith.constant 1 : index
    %c0_27 = arith.constant 0 : index
    %22 = vector.load %arg7[%c0_25, %c1_26, %c0_27] : memref<10x10x128xbf16, #tpu.memory_space<vmem>>, vector<8x8x128xbf16>
    %c0_28 = arith.constant 0 : index
    %c2 = arith.constant 2 : index
    %c0_29 = arith.constant 0 : index
    %23 = vector.load %arg7[%c0_28, %c2, %c0_29] : memref<10x10x128xbf16, #tpu.memory_space<vmem>>, vector<8x8x128xbf16>
    %24 = tpu.concatenate %21, %22, %23 in 2 : vector<8x8x128xbf16>, vector<8x8x128xbf16>, vector<8x8x128xbf16> -> vector<8x8x384xbf16>
    %25 = vector.shape_cast %24 : vector<8x8x384xbf16> to vector<64x384xbf16>
    %c0_30 = arith.constant 0 : index
    %c0_31 = arith.constant 0 : index
    %c0_32 = arith.constant 0 : index
    %26 = vector.load %arg4[%c0_30, %c0_31, %c0_32] : memref<3x384x128xbf16, #tpu.memory_space<vmem>>, vector<1x384x128xbf16>
    %27 = vector.shape_cast %26 : vector<1x384x128xbf16> to vector<384x128xbf16>
    %cst_33 = arith.constant dense<0.000000e+00> : vector<64x128xf32>
    %28 = tpu.matmul %25, %27, %cst_33 {dimension_numbers = #tpu.dot_dimension_numbers<[1], [0], [0], [1], [0, 0, 1, 1], [], []>} : vector<64x384xbf16>, vector<384x128xbf16>, vector<64x128xf32> -> vector<64x128xf32>
    %c1_34 = arith.constant 1 : index
    %c0_35 = arith.constant 0 : index
    %c0_36 = arith.constant 0 : index
    %29 = vector.load %arg7[%c1_34, %c0_35, %c0_36] : memref<10x10x128xbf16, #tpu.memory_space<vmem>>, vector<8x8x128xbf16>
    %c1_37 = arith.constant 1 : index
    %c1_38 = arith.constant 1 : index
    %c0_39 = arith.constant 0 : index
    %30 = vector.load %arg7[%c1_37, %c1_38, %c0_39] : memref<10x10x128xbf16, #tpu.memory_space<vmem>>, vector<8x8x128xbf16>
    %c1_40 = arith.constant 1 : index
    %c2_41 = arith.constant 2 : index
    %c0_42 = arith.constant 0 : index
    %31 = vector.load %arg7[%c1_40, %c2_41, %c0_42] : memref<10x10x128xbf16, #tpu.memory_space<vmem>>, vector<8x8x128xbf16>
    %32 = tpu.concatenate %29, %30, %31 in 2 : vector<8x8x128xbf16>, vector<8x8x128xbf16>, vector<8x8x128xbf16> -> vector<8x8x384xbf16>
    %33 = vector.shape_cast %32 : vector<8x8x384xbf16> to vector<64x384xbf16>
    %c1_43 = arith.constant 1 : index
    %c0_44 = arith.constant 0 : index
    %c0_45 = arith.constant 0 : index
    %34 = vector.load %arg4[%c1_43, %c0_44, %c0_45] : memref<3x384x128xbf16, #tpu.memory_space<vmem>>, vector<1x384x128xbf16>
    %35 = vector.shape_cast %34 : vector<1x384x128xbf16> to vector<384x128xbf16>
    %cst_46 = arith.constant dense<0.000000e+00> : vector<64x128xf32>
    %36 = tpu.matmul %33, %35, %cst_46 {dimension_numbers = #tpu.dot_dimension_numbers<[1], [0], [0], [1], [0, 0, 1, 1], [], []>} : vector<64x384xbf16>, vector<384x128xbf16>, vector<64x128xf32> -> vector<64x128xf32>
    %37 = arith.addf %28, %36 : vector<64x128xf32>
    %c2_47 = arith.constant 2 : index
    %c0_48 = arith.constant 0 : index
    %c0_49 = arith.constant 0 : index
    %38 = vector.load %arg7[%c2_47, %c0_48, %c0_49] : memref<10x10x128xbf16, #tpu.memory_space<vmem>>, vector<8x8x128xbf16>
    %c2_50 = arith.constant 2 : index
    %c1_51 = arith.constant 1 : index
    %c0_52 = arith.constant 0 : index
    %39 = vector.load %arg7[%c2_50, %c1_51, %c0_52] : memref<10x10x128xbf16, #tpu.memory_space<vmem>>, vector<8x8x128xbf16>
    %c2_53 = arith.constant 2 : index
    %c2_54 = arith.constant 2 : index
    %c0_55 = arith.constant 0 : index
    %40 = vector.load %arg7[%c2_53, %c2_54, %c0_55] : memref<10x10x128xbf16, #tpu.memory_space<vmem>>, vector<8x8x128xbf16>
    %41 = tpu.concatenate %38, %39, %40 in 2 : vector<8x8x128xbf16>, vector<8x8x128xbf16>, vector<8x8x128xbf16> -> vector<8x8x384xbf16>
    %42 = vector.shape_cast %41 : vector<8x8x384xbf16> to vector<64x384xbf16>
    %c2_56 = arith.constant 2 : index
    %c0_57 = arith.constant 0 : index
    %c0_58 = arith.constant 0 : index
    %43 = vector.load %arg4[%c2_56, %c0_57, %c0_58] : memref<3x384x128xbf16, #tpu.memory_space<vmem>>, vector<1x384x128xbf16>
    %44 = vector.shape_cast %43 : vector<1x384x128xbf16> to vector<384x128xbf16>
    %cst_59 = arith.constant dense<0.000000e+00> : vector<64x128xf32>
    %45 = tpu.matmul %42, %44, %cst_59 {dimension_numbers = #tpu.dot_dimension_numbers<[1], [0], [0], [1], [0, 0, 1, 1], [], []>} : vector<64x384xbf16>, vector<384x128xbf16>, vector<64x128xf32> -> vector<64x128xf32>
    %46 = arith.addf %37, %45 : vector<64x128xf32>
    %47 = vector.shape_cast %46 : vector<64x128xf32> to vector<8x8x128xf32>
    %48 = arith.truncf %47 : vector<8x8x128xf32> to vector<8x8x128xbf16>
    %c0_60 = arith.constant 0 : index
    %c0_61 = arith.constant 0 : index
    %c0_62 = arith.constant 0 : index
    %c0_63 = arith.constant 0 : index
    %49 = vector.load %arg5[%c0_60, %c0_61, %c0_62, %c0_63] : memref<1x8x8x128xbf16, #tpu.memory_space<vmem>>, vector<1x8x8x128xbf16>
    %50 = vector.shape_cast %49 : vector<1x8x8x128xbf16> to vector<8x8x128xbf16>
    %51 = vector.shape_cast %48 : vector<8x8x128xbf16> to vector<1x8x8x128xbf16>
    tpu.vector_store %arg5[%c0_60, %c0_61, %c0_62, %c0_63], %51 {strides = array<i32>} : memref<1x8x8x128xbf16, #tpu.memory_space<vmem>>, vector<1x8x8x128xbf16>,
    %cst_64 = arith.constant dense<0.000000e+00> : vector<128xf32>
    %52 = vector.multi_reduction <add>, %46, %cst_64 [0] : vector<64x128xf32> to vector<128xf32>
    %53 = vector.shape_cast %52 : vector<128xf32> to vector<1x128xf32>
    %cst_65 = arith.constant 1.562500e-02 : f32
    %54 = vector.broadcast %cst_65 : f32 to vector<1x128xf32>
    %55 = arith.mulf %53, %54 : vector<1x128xf32>
    %56 = vector.broadcast %55 : vector<1x128xf32> to vector<64x128xf32>
    %57 = arith.subf %46, %56 : vector<64x128xf32>
    %58 = arith.mulf %57, %57 : vector<64x128xf32>
    %cst_66 = arith.constant dense<0.000000e+00> : vector<128xf32>
    %59 = vector.multi_reduction <add>, %58, %cst_66 [0] : vector<64x128xf32> to vector<128xf32>
    %60 = vector.shape_cast %59 : vector<128xf32> to vector<1x128xf32>
    %61 = tpu.concatenate %53, %60 in 0 : vector<1x128xf32>, vector<1x128xf32> -> vector<2x128xf32>
    %c0_67 = arith.constant 0 : index
    %c0_68 = arith.constant 0 : index
    %c0_69 = arith.constant 0 : index
    %62 = vector.load %arg6[%c0_67, %c0_68, %c0_69] : memref<1x2x128xf32, #tpu.memory_space<vmem>>, vector<1x2x128xf32>
    %63 = vector.shape_cast %62 : vector<1x2x128xf32> to vector<2x128xf32>
    %64 = vector.shape_cast %61 : vector<2x128xf32> to vector<1x2x128xf32>
    tpu.vector_store %arg6[%c0_67, %c0_68, %c0_69], %64 {strides = array<i32>} : memref<1x2x128xf32, #tpu.memory_space<vmem>>, vector<1x2x128xf32>,
    return
  }
  func.func @transform_0(%arg0: i32) -> (i32, i32, i32, i32) {
    %c0_i32 = arith.constant 0 : i32
    %c0_i32_0 = arith.constant 0 : i32
    %c0_i32_1 = arith.constant 0 : i32
    %c0_i32_2 = arith.constant 0 : i32
    return %arg0, %c0_i32, %c0_i32_0, %c0_i32_1 : i32, i32, i32, i32
  }
  func.func @transform_1(%arg0: i32) -> (i32, i32) {
    %c0_i32 = arith.constant 0 : i32
    %c0_i32_0 = arith.constant 0 : i32
    %c0_i32_1 = arith.constant 0 : i32
    return %c0_i32, %c0_i32_0 : i32, i32
  }
  func.func @transform_2(%arg0: i32) -> (i32, i32) {
    %c0_i32 = arith.constant 0 : i32
    %c0_i32_0 = arith.constant 0 : i32
    %c0_i32_1 = arith.constant 0 : i32
    return %c0_i32, %c0_i32_0 : i32, i32
  }
  func.func @transform_3(%arg0: i32) -> (i32, i32, i32) {
    %c0_i32 = arith.constant 0 : i32
    %c0_i32_0 = arith.constant 0 : i32
    %c0_i32_1 = arith.constant 0 : i32
    %c0_i32_2 = arith.constant 0 : i32
    return %c0_i32, %c0_i32_0, %c0_i32_1 : i32, i32, i32
  }
  func.func @transform_4(%arg0: i32) -> (i32, i32, i32, i32) {
    %c0_i32 = arith.constant 0 : i32
    %c0_i32_0 = arith.constant 0 : i32
    %c0_i32_1 = arith.constant 0 : i32
    %c0_i32_2 = arith.constant 0 : i32
    return %arg0, %c0_i32, %c0_i32_0, %c0_i32_1 : i32, i32, i32, i32
  }
  func.func @transform_5(%arg0: i32) -> (i32, i32, i32) {
    %c0_i32 = arith.constant 0 : i32
    %c0_i32_0 = arith.constant 0 : i32
    %c0_i32_1 = arith.constant 0 : i32
    return %arg0, %c0_i32, %c0_i32_0 : i32, i32, i32
  }
}

module attributes {stable_mosaic.version = 11 : i64} {
  func.func @kernel(%arg0: i32, %arg1: memref<1x8x8x128xbf16, #tpu.memory_space<vmem>>, %arg2: memref<1x128xf32, #tpu.memory_space<vmem>>, %arg3: memref<1x128xf32, #tpu.memory_space<vmem>>, %arg4: memref<1x8x8x128xbf16, #tpu.memory_space<vmem>>, %arg5: memref<128x128xbf16, #tpu.memory_space<vmem>>, %arg6: memref<1x128xf32, #tpu.memory_space<vmem>>, %arg7: memref<1x128xf32, #tpu.memory_space<vmem>>, %arg8: memref<1x8x8x128xf32, #tpu.memory_space<vmem>>) attributes {dimension_semantics = [#tpu.dimension_semantics<parallel>], iteration_bounds = array<i64: 2>, scalar_prefetch = 0 : i64, scratch_operands = 0 : i64, tpu.core_type = #tpu.core_type<tc>, window_params = [{transform_indices = @transform_0, window_bounds = array<i64: 1, 8, 8, 128>}, {pipeline_mode = #tpu.pipeline_mode<synchronous>, transform_indices = @transform_1, window_bounds = array<i64: 1, 128>}, {pipeline_mode = #tpu.pipeline_mode<synchronous>, transform_indices = @transform_2, window_bounds = array<i64: 1, 128>}, {transform_indices = @transform_3, window_bounds = array<i64: 1, 8, 8, 128>}, {pipeline_mode = #tpu.pipeline_mode<synchronous>, transform_indices = @transform_4, window_bounds = array<i64: 128, 128>}, {pipeline_mode = #tpu.pipeline_mode<synchronous>, transform_indices = @transform_5, window_bounds = array<i64: 1, 128>}, {pipeline_mode = #tpu.pipeline_mode<synchronous>, transform_indices = @transform_6, window_bounds = array<i64: 1, 128>}, {transform_indices = @transform_7, window_bounds = array<i64: 1, 8, 8, 128>}]} {
    %c0 = arith.constant 0 : index
    %c0_0 = arith.constant 0 : index
    %c0_1 = arith.constant 0 : index
    %c0_2 = arith.constant 0 : index
    %0 = vector.load %arg4[%c0, %c0_0, %c0_1, %c0_2] : memref<1x8x8x128xbf16, #tpu.memory_space<vmem>>, vector<1x8x8x128xbf16>
    %1 = vector.shape_cast %0 : vector<1x8x8x128xbf16> to vector<8x8x128xbf16>
    %2 = vector.shape_cast %1 : vector<8x8x128xbf16> to vector<64x128xbf16>
    %c0_3 = arith.constant 0 : index
    %c0_4 = arith.constant 0 : index
    %3 = vector.load %arg5[%c0_3, %c0_4] : memref<128x128xbf16, #tpu.memory_space<vmem>>, vector<128x128xbf16>
    %cst = arith.constant dense<0.000000e+00> : vector<64x128xf32>
    %4 = tpu.matmul %2, %3, %cst {dimension_numbers = #tpu.dot_dimension_numbers<[1], [0], [0], [1], [0, 0, 1, 1], [], []>} : vector<64x128xbf16>, vector<128x128xbf16>, vector<64x128xf32> -> vector<64x128xf32>
    %c0_5 = arith.constant 0 : index
    %c0_6 = arith.constant 0 : index
    %5 = vector.load %arg6[%c0_5, %c0_6] : memref<1x128xf32, #tpu.memory_space<vmem>>, vector<1x128xf32>
    %6 = vector.shape_cast %4 : vector<64x128xf32> to vector<8x8x128xf32>
    %7 = vector.shape_cast %5 : vector<1x128xf32> to vector<1x1x128xf32>
    %8 = vector.broadcast %7 : vector<1x1x128xf32> to vector<8x8x128xf32>
    %9 = arith.mulf %8, %6 : vector<8x8x128xf32>
    %c0_7 = arith.constant 0 : index
    %c0_8 = arith.constant 0 : index
    %10 = vector.load %arg7[%c0_7, %c0_8] : memref<1x128xf32, #tpu.memory_space<vmem>>, vector<1x128xf32>
    %11 = vector.shape_cast %10 : vector<1x128xf32> to vector<1x1x128xf32>
    %12 = vector.broadcast %11 : vector<1x1x128xf32> to vector<8x8x128xf32>
    %13 = arith.addf %9, %12 : vector<8x8x128xf32>
    %c0_9 = arith.constant 0 : index
    %c0_10 = arith.constant 0 : index
    %14 = vector.load %arg2[%c0_9, %c0_10] : memref<1x128xf32, #tpu.memory_space<vmem>>, vector<1x128xf32>
    %c0_11 = arith.constant 0 : index
    %c0_12 = arith.constant 0 : index
    %c0_13 = arith.constant 0 : index
    %c0_14 = arith.constant 0 : index
    %15 = vector.load %arg1[%c0_11, %c0_12, %c0_13, %c0_14] : memref<1x8x8x128xbf16, #tpu.memory_space<vmem>>, vector<1x8x8x128xbf16>
    %16 = vector.shape_cast %15 : vector<1x8x8x128xbf16> to vector<8x8x128xbf16>
    %17 = arith.extf %16 : vector<8x8x128xbf16> to vector<8x8x128xf32>
    %18 = vector.shape_cast %14 : vector<1x128xf32> to vector<1x1x128xf32>
    %19 = vector.broadcast %18 : vector<1x1x128xf32> to vector<8x8x128xf32>
    %20 = arith.mulf %19, %17 : vector<8x8x128xf32>
    %c0_15 = arith.constant 0 : index
    %c0_16 = arith.constant 0 : index
    %21 = vector.load %arg3[%c0_15, %c0_16] : memref<1x128xf32, #tpu.memory_space<vmem>>, vector<1x128xf32>
    %22 = vector.shape_cast %21 : vector<1x128xf32> to vector<1x1x128xf32>
    %23 = vector.broadcast %22 : vector<1x1x128xf32> to vector<8x8x128xf32>
    %24 = arith.addf %20, %23 : vector<8x8x128xf32>
    %25 = arith.addf %24, %13 : vector<8x8x128xf32>
    %cst_17 = arith.constant 0.000000e+00 : f32
    %26 = vector.broadcast %cst_17 : f32 to vector<8x8x128xf32>
    %27 = arith.maximumf %25, %26 : vector<8x8x128xf32>
    %c0_18 = arith.constant 0 : index
    %c0_19 = arith.constant 0 : index
    %c0_20 = arith.constant 0 : index
    %c0_21 = arith.constant 0 : index
    %28 = vector.load %arg8[%c0_18, %c0_19, %c0_20, %c0_21] : memref<1x8x8x128xf32, #tpu.memory_space<vmem>>, vector<1x8x8x128xf32>
    %29 = vector.shape_cast %28 : vector<1x8x8x128xf32> to vector<8x8x128xf32>
    %30 = vector.shape_cast %27 : vector<8x8x128xf32> to vector<1x8x8x128xf32>
    tpu.vector_store %arg8[%c0_18, %c0_19, %c0_20, %c0_21], %30 {strides = array<i32>} : memref<1x8x8x128xf32, #tpu.memory_space<vmem>>, vector<1x8x8x128xf32>,
    return
  }
  func.func @transform_0(%arg0: i32) -> (i32, i32, i32, i32) {
    %c0_i32 = arith.constant 0 : i32
    %c0_i32_0 = arith.constant 0 : i32
    %c0_i32_1 = arith.constant 0 : i32
    %c0_i32_2 = arith.constant 0 : i32
    return %arg0, %c0_i32, %c0_i32_0, %c0_i32_1 : i32, i32, i32, i32
  }
  func.func @transform_1(%arg0: i32) -> (i32, i32) {
    %c0_i32 = arith.constant 0 : i32
    %c0_i32_0 = arith.constant 0 : i32
    %c0_i32_1 = arith.constant 0 : i32
    return %c0_i32, %c0_i32_0 : i32, i32
  }
  func.func @transform_2(%arg0: i32) -> (i32, i32) {
    %c0_i32 = arith.constant 0 : i32
    %c0_i32_0 = arith.constant 0 : i32
    %c0_i32_1 = arith.constant 0 : i32
    return %c0_i32, %c0_i32_0 : i32, i32
  }
  func.func @transform_3(%arg0: i32) -> (i32, i32, i32, i32) {
    %c0_i32 = arith.constant 0 : i32
    %c0_i32_0 = arith.constant 0 : i32
    %c0_i32_1 = arith.constant 0 : i32
    %c0_i32_2 = arith.constant 0 : i32
    return %arg0, %c0_i32, %c0_i32_0, %c0_i32_1 : i32, i32, i32, i32
  }
  func.func @transform_4(%arg0: i32) -> (i32, i32) {
    %c0_i32 = arith.constant 0 : i32
    %c0_i32_0 = arith.constant 0 : i32
    %c0_i32_1 = arith.constant 0 : i32
    return %c0_i32, %c0_i32_0 : i32, i32
  }
  func.func @transform_5(%arg0: i32) -> (i32, i32) {
    %c0_i32 = arith.constant 0 : i32
    %c0_i32_0 = arith.constant 0 : i32
    %c0_i32_1 = arith.constant 0 : i32
    return %c0_i32, %c0_i32_0 : i32, i32
  }
  func.func @transform_6(%arg0: i32) -> (i32, i32) {
    %c0_i32 = arith.constant 0 : i32
    %c0_i32_0 = arith.constant 0 : i32
    %c0_i32_1 = arith.constant 0 : i32
    return %c0_i32, %c0_i32_0 : i32, i32
  }
  func.func @transform_7(%arg0: i32) -> (i32, i32, i32, i32) {
    %c0_i32 = arith.constant 0 : i32
    %c0_i32_0 = arith.constant 0 : i32
    %c0_i32_1 = arith.constant 0 : i32
    %c0_i32_2 = arith.constant 0 : i32
    return %arg0, %c0_i32, %c0_i32_0, %c0_i32_1 : i32, i32, i32, i32
  }
}

</mosaic_0001>

<llo_original>
// kernel: basic_block_forward.5
$region0: #{basic_block_forward.5}
  #allocation0 [shape = 'u32[]', space=smem, size = 0x4, offset = 0x4, fixed_abs, tag = 'smem constant byte address 0x4 - core index']
  #allocation1 [shape = 'u32[72,128]{1,0:T(1,128)}', space=vmem, size = 0x9000, scoped, tag = 'internal scratch']
  %s0 = inlined_call_operand.vmem [shape: bf16[2,8,8,128], index: 0, kind: input, shape index: {}]
  %s1 = inlined_call_operand.vmem [shape: f32[1,128], index: 1, kind: input, shape index: {}]
  %s2 = inlined_call_operand.vmem [shape: f32[1,128], index: 2, kind: input, shape index: {}]
  %s3 = inlined_call_operand.vmem [shape: bf16[2,8,8,128], index: 3, kind: input, shape index: {}]
  %s4 = inlined_call_operand.vmem [shape: bf16[128,128], index: 4, kind: input, shape index: {}]
  %s5 = inlined_call_operand.vmem [shape: f32[1,128], index: 5, kind: input, shape index: {}]
  %s6 = inlined_call_operand.vmem [shape: f32[1,128], index: 6, kind: input, shape index: {}]
  %s7 = inlined_call_operand.vmem [shape: f32[2,8,8,128], index: 7, kind: output, shape index: {}]
  %s8 = sld [smem:[#allocation0]]
  $region61: #{basic_block_forward.5} parent=0
    _
  %s10 = ssub.s32 1, %s8
  %s11 = scalar_select 0, %s10, %s8
  loop: start=0, step=1, limit=4
  $region2: #{basic_block_forward.5} parent=0 // loop_pre_header
    _
  $region3: #{basic_block_forward.5} parent=0 // loop_header
    %s13 = sphi 0, %s17
    %p14 = scmp.ge.s32.totalorder %s13, 4
    %s23 = sphi 0, %s25
    %s26 = sphi 0, %s23
    %s27 = sphi 0, %s26
    %s43 = sphi 0, %s27
    %s47 = sphi 0, %s47
    %s49 = sphi 0, %s47
    %s50 = sphi 0, %s49
    %s64 = sphi 0, %s50
    %s68 = sphi 0, %s68
    %s70 = sphi 0, %s68
    %s71 = sphi 0, %s70
    %s85 = sphi 0, %s71
    %s91 = sphi 0, %s93
    %s94 = sphi 0, %s91
    %s95 = sphi 0, %s94
    %s111 = sphi 0, %s95
    %s115 = sphi 0, %s115
    %s117 = sphi 0, %s115
    %s118 = sphi 0, %s117
    %s132 = sphi 0, %s118
    %s136 = sphi 0, %s136
    %s138 = sphi 0, %s136
    %s139 = sphi 0, %s138
    %s153 = sphi 0, %s139
    %s157 = sphi 0, %s157
    %s159 = sphi 0, %s157
    %s160 = sphi 0, %s159
    %s174 = sphi 0, %s160
    %s180 = sphi 0, %s182
    %s183 = sphi 0, %s180
    %s184 = sphi 0, %s183
    %s200 = sphi 0, %s184
  $region4: #{basic_block_forward.5} parent=0 // loop_header_branch
    %16 = sbr.rel (%p14) target = $region8
  $region5: #{basic_block_forward.5} parent=0 // loop_body
    %s18 = ssub.s32 %s13, 1
    %s19 = ssub.s32 %s13, 2
    %s20 = sadd.s32 %s13, 1
    %s21 = ssub.s32 %s13, %s20
    %p22 = scmp.eq.s32.totalorder %s21, 0
    %s24 = sadd.s32 %s23, 1
    %s25 = scalar_select %p22, %s23, %s24
    %p28 = pneg %p22
    %p29 = scmp.eq.s32.totalorder %s13, 1
    %p30 = por %p28, %p29
    %p31 = scmp.ne.s32.totalorder %s23, %s26
    %p32 = scmp.eq.s32.totalorder %s13, 0
    %p33 = por %p31, %p32
    %p34 = scmp.ne.s32.totalorder %s23, %s26
    %p35 = scmp.eq.s32.totalorder %s18, 1
    %p36 = por %p34, %p35
    %p37 = scmp.ne.s32.totalorder %s26, %s27
    %p38 = scmp.eq.s32.totalorder %s18, 0
    %p39 = por %p37, %p38
    %p40 = scmp.ne.s32.totalorder %s26, %s27
    %p41 = scmp.eq.s32.totalorder %s19, 1
    %p42 = por %p40, %p41
    %p44 = scmp.ne.s32.totalorder %s27, %s43
    %p45 = scmp.eq.s32.totalorder %s19, 0
    %p46 = por %p44, %p45
    %s48 = sadd.s32 %s47, 1
    %p51 = scmp.eq.s32.totalorder %s13, 1
    %p52 = scmp.ne.s32.totalorder %s47, %s49
    %p53 = scmp.eq.s32.totalorder %s13, 0
    %p54 = por %p52, %p53
    %p55 = scmp.ne.s32.totalorder %s47, %s49
    %p56 = scmp.eq.s32.totalorder %s18, 1
    %p57 = por %p55, %p56
    %p58 = scmp.ne.s32.totalorder %s49, %s50
    %p59 = scmp.eq.s32.totalorder %s18, 0
    %p60 = por %p58, %p59
    %p61 = scmp.ne.s32.totalorder %s49, %s50
    %p62 = scmp.eq.s32.totalorder %s19, 1
    %p63 = por %p61, %p62
    %p65 = scmp.ne.s32.totalorder %s50, %s64
    %p66 = scmp.eq.s32.totalorder %s19, 0
    %p67 = por %p65, %p66
    %s69 = sadd.s32 %s68, 1
    %p72 = scmp.eq.s32.totalorder %s13, 1
    %p73 = scmp.ne.s32.totalorder %s68, %s70
    %p74 = scmp.eq.s32.totalorder %s13, 0
    %p75 = por %p73, %p74
    %p76 = scmp.ne.s32.totalorder %s68, %s70
    %p77 = scmp.eq.s32.totalorder %s18, 1
    %p78 = por %p76, %p77
    %p79 = scmp.ne.s32.totalorder %s70, %s71
    %p80 = scmp.eq.s32.totalorder %s18, 0
    %p81 = por %p79, %p80
    %p82 = scmp.ne.s32.totalorder %s70, %s71
    %p83 = scmp.eq.s32.totalorder %s19, 1
    %p84 = por %p82, %p83
    %p86 = scmp.ne.s32.totalorder %s71, %s85
    %p87 = scmp.eq.s32.totalorder %s19, 0
    %p88 = por %p86, %p87
    %s89 = ssub.s32 %s13, %s20
    %p90 = scmp.eq.s32.totalorder %s89, 0
    %s92 = sadd.s32 %s91, 1
    %s93 = scalar_select %p90, %s91, %s92
    %p96 = pneg %p90
    %p97 = scmp.eq.s32.totalorder %s13, 1
    %p98 = por %p96, %p97
    %p99 = scmp.ne.s32.totalorder %s91, %s94
    %p100 = scmp.eq.s32.totalorder %s13, 0
    %p101 = por %p99, %p100
    %p102 = scmp.ne.s32.totalorder %s91, %s94
    %p103 = scmp.eq.s32.totalorder %s18, 1
    %p104 = por %p102, %p103
    %p105 = scmp.ne.s32.totalorder %s94, %s95
    %p106 = scmp.eq.s32.totalorder %s18, 0
    %p107 = por %p105, %p106
    %p108 = scmp.ne.s32.totalorder %s94, %s95
    %p109 = scmp.eq.s32.totalorder %s19, 1
    %p110 = por %p108, %p109
    %p112 = scmp.ne.s32.totalorder %s95, %s111
    %p113 = scmp.eq.s32.totalorder %s19, 0
    %p114 = por %p112, %p113
    %s116 = sadd.s32 %s115, 1
    %p119 = scmp.eq.s32.totalorder %s13, 1
    %p120 = scmp.ne.s32.totalorder %s115, %s117
    %p121 = scmp.eq.s32.totalorder %s13, 0
    %p122 = por %p120, %p121
    %p123 = scmp.ne.s32.totalorder %s115, %s117
    %p124 = scmp.eq.s32.totalorder %s18, 1
    %p125 = por %p123, %p124
    %p126 = scmp.ne.s32.totalorder %s117, %s118
    %p127 = scmp.eq.s32.totalorder %s18, 0
    %p128 = por %p126, %p127
    %p129 = scmp.ne.s32.totalorder %s117, %s118
    %p130 = scmp.eq.s32.totalorder %s19, 1
    %p131 = por %p129, %p130
    %p133 = scmp.ne.s32.totalorder %s118, %s132
    %p134 = scmp.eq.s32.totalorder %s19, 0
    %p135 = por %p133, %p134
    %s137 = sadd.s32 %s136, 1
    %p140 = scmp.eq.s32.totalorder %s13, 1
    %p141 = scmp.ne.s32.totalorder %s136, %s138
    %p142 = scmp.eq.s32.totalorder %s13, 0
    %p143 = por %p141, %p142
    %p144 = scmp.ne.s32.totalorder %s136, %s138
    %p145 = scmp.eq.s32.totalorder %s18, 1
    %p146 = por %p144, %p145
    %p147 = scmp.ne.s32.totalorder %s138, %s139
    %p148 = scmp.eq.s32.totalorder %s18, 0
    %p149 = por %p147, %p148
    %p150 = scmp.ne.s32.totalorder %s138, %s139
    %p151 = scmp.eq.s32.totalorder %s19, 1
    %p152 = por %p150, %p151
    %p154 = scmp.ne.s32.totalorder %s139, %s153
    %p155 = scmp.eq.s32.totalorder %s19, 0
    %p156 = por %p154, %p155
    %s158 = sadd.s32 %s157, 1
    %p161 = scmp.eq.s32.totalorder %s13, 1
    %p162 = scmp.ne.s32.totalorder %s157, %s159
    %p163 = scmp.eq.s32.totalorder %s13, 0
    %p164 = por %p162, %p163
    %p165 = scmp.ne.s32.totalorder %s157, %s159
    %p166 = scmp.eq.s32.totalorder %s18, 1
    %p167 = por %p165, %p166
    %p168 = scmp.ne.s32.totalorder %s159, %s160
    %p169 = scmp.eq.s32.totalorder %s18, 0
    %p170 = por %p168, %p169
    %p171 = scmp.ne.s32.totalorder %s159, %s160
    %p172 = scmp.eq.s32.totalorder %s19, 1
    %p173 = por %p171, %p172
    %p175 = scmp.ne.s32.totalorder %s160, %s174
    %p176 = scmp.eq.s32.totalorder %s19, 0
    %p177 = por %p175, %p176
    %s178 = ssub.s32 %s13, %s20
    %p179 = scmp.eq.s32.totalorder %s178, 0
    %s181 = sadd.s32 %s180, 1
    %s182 = scalar_select %p179, %s180, %s181
    %p185 = pneg %p179
    %p186 = scmp.eq.s32.totalorder %s13, 1
    %p187 = por %p185, %p186
    %p188 = scmp.ne.s32.totalorder %s180, %s183
    %p189 = scmp.eq.s32.totalorder %s13, 0
    %p190 = por %p188, %p189
    %p191 = scmp.ne.s32.totalorder %s180, %s183
    %p192 = scmp.eq.s32.totalorder %s18, 1
    %p193 = por %p191, %p192
    %p194 = scmp.ne.s32.totalorder %s183, %s184
    %p195 = scmp.eq.s32.totalorder %s18, 0
    %p196 = por %p194, %p195
    %p197 = scmp.ne.s32.totalorder %s183, %s184
    %p198 = scmp.eq.s32.totalorder %s19, 1
    %p199 = por %p197, %p198
    %p201 = scmp.ne.s32.totalorder %s184, %s200
    %p202 = scmp.eq.s32.totalorder %s19, 0
    %p203 = por %p201, %p202
    %p204 = scmp.le.s32.totalorder 1, %s13
    %p205 = scmp.lt.s32.totalorder %s13, 3
    %p206 = pnand %p204, %p205
    %p207 = pneg %p206
    // Predicated region
    $region9: #{basic_block_forward.5} parent=5 // pred_check
      _
    $region10: #{basic_block_forward.5} parent=5 // pred_check_branch
      %209 = sbr.rel (%p206) target = $region12
    $region11: #{basic_block_forward.5} parent=5 // pred_region
      %s210 = ssub.s32 %s13, 1
      // Predicated region
      $region13: #{basic_block_forward.5} parent=11 // pred_check
        %p211 = pneg %p60
      $region14: #{basic_block_forward.5} parent=11 // pred_check_branch
        %213 = sbr.rel (%p211) target = $region16
      $region15: #{basic_block_forward.5} parent=11 // pred_region
        _
      $region16: #{basic_block_forward.5} parent=11 // pred_fallthru
        _
      // Predicated region
      $region17: #{basic_block_forward.5} parent=11 // pred_check
        %p214 = pneg %p81
      $region18: #{basic_block_forward.5} parent=11 // pred_check_branch
        %216 = sbr.rel (%p214) target = $region20
      $region19: #{basic_block_forward.5} parent=11 // pred_region
        _
      $region20: #{basic_block_forward.5} parent=11 // pred_fallthru
        _
      // Predicated region
      $region21: #{basic_block_forward.5} parent=11 // pred_check
        %p217 = pneg %p128
      $region22: #{basic_block_forward.5} parent=11 // pred_check_branch
        %219 = sbr.rel (%p217) target = $region24
      $region23: #{basic_block_forward.5} parent=11 // pred_region
        _
      $region24: #{basic_block_forward.5} parent=11 // pred_fallthru
        _
      // Predicated region
      $region25: #{basic_block_forward.5} parent=11 // pred_check
        %p220 = pneg %p149
      $region26: #{basic_block_forward.5} parent=11 // pred_check_branch
        %222 = sbr.rel (%p220) target = $region28
      $region27: #{basic_block_forward.5} parent=11 // pred_region
        _
      $region28: #{basic_block_forward.5} parent=11 // pred_fallthru
        _
      // Predicated region
      $region29: #{basic_block_forward.5} parent=11 // pred_check
        %p223 = pneg %p170
      $region30: #{basic_block_forward.5} parent=11 // pred_check_branch
        %225 = sbr.rel (%p223) target = $region32
      $region31: #{basic_block_forward.5} parent=11 // pred_region
        _
      $region32: #{basic_block_forward.5} parent=11 // pred_fallthru
        _
    $region12: #{basic_block_forward.5} parent=5 // pred_fallthru
      _
    %p226 = scmp.lt.s32.totalorder %s13, 2
    // Predicated region
    $region33: #{basic_block_forward.5} parent=5 // pred_check
      %p227 = pneg %p226
    $region34: #{basic_block_forward.5} parent=5 // pred_check_branch
      %229 = sbr.rel (%p227) target = $region36
    $region35: #{basic_block_forward.5} parent=5 // pred_region
      // Predicated region
      $region37: #{basic_block_forward.5} parent=35 // pred_check
        %p230 = pneg %p33
      $region38: #{basic_block_forward.5} parent=35 // pred_check_branch
        %232 = sbr.rel (%p230) target = $region40
      $region39: #{basic_block_forward.5} parent=35 // pred_region
        %p233 = scmp.lt.s32.totalorder %s13, 1
        %s234 = scalar_select %p233, %s13, 1
        %s235 = smul.addr %s234, 8
        %s236 = smul.addr %s235, 4
        %s237 = scalar_lea.vmem %s0, %s236
      $region40: #{basic_block_forward.5} parent=35 // pred_fallthru
        _
      // Predicated region
      $region41: #{basic_block_forward.5} parent=35 // pred_check
        %p238 = pneg %p101
      $region42: #{basic_block_forward.5} parent=35 // pred_check_branch
        %240 = sbr.rel (%p238) target = $region44
      $region43: #{basic_block_forward.5} parent=35 // pred_region
        %p241 = scmp.lt.s32.totalorder %s13, 1
        %s242 = scalar_select %p241, %s13, 1
        %s243 = smul.addr %s242, 8
        %s244 = smul.addr %s243, 4
        %s245 = scalar_lea.vmem %s3, %s244
      $region44: #{basic_block_forward.5} parent=35 // pred_fallthru
        _
    $region36: #{basic_block_forward.5} parent=5 // pred_fallthru
      _
    %p246 = scmp.le.s32.totalorder 1, %s13
    %p247 = scmp.lt.s32.totalorder %s13, 3
    %p248 = pnand %p246, %p247
    %p249 = pneg %p248
    // Predicated region
    $region45: #{basic_block_forward.5} parent=5 // pred_check
      _
    $region46: #{basic_block_forward.5} parent=5 // pred_check_branch
      %251 = sbr.rel (%p248) target = $region48
    $region47: #{basic_block_forward.5} parent=5 // pred_region
      %s252 = ssub.s32 %s13, 1
      %p253 = scmp.lt.s32.totalorder %s18, 1
      %s254 = scalar_select %p253, %s18, 1
      %s255 = smul.addr %s254, 8
      %s256 = smul.addr %s255, 4
      %s257 = scalar_lea.vmem %s0, %s256
      %p258 = pneg %p39
      %p259 = pneg %p36
      %p260 = pneg %p60
      %p261 = pneg %p57
      %p262 = pneg %p81
      %p263 = pneg %p78
      %p264 = scmp.lt.s32.totalorder %s18, 1
      %s265 = scalar_select %p264, %s18, 1
      %s266 = smul.addr %s265, 8
      %s267 = smul.addr %s266, 4
      %s268 = scalar_lea.vmem %s3, %s267
      %p269 = pneg %p107
      %p270 = pneg %p104
      %p271 = pneg %p128
      %p272 = pneg %p125
      %p273 = pneg %p149
      %p274 = pneg %p146
      %p275 = pneg %p170
      %p276 = pneg %p167
      %p277 = pneg %p196
      %p278 = pneg %p193
      %p279 = scmp.lt.s32.totalorder %s18, 1
      %s280 = scalar_select %p279, %s18, 1
      %s281 = smul.addr %s280, 8
      %s282 = smul.addr %s281, 8
      %s283 = scalar_lea.vmem %s7, %s282
      %p284 = scmp.lt.s32.totalorder %s18, 1
      %s285 = scalar_select %p284, %s18, 1
      %s286 = smul.addr %s285, 8
      %s287 = smul.addr %s286, 4
      %s288 = scalar_lea.vmem %s0, %s287
      %p289 = scmp.lt.s32.totalorder %s18, 1
      %s290 = scalar_select %p289, %s18, 1
      %s291 = smul.addr %s290, 8
      %s292 = smul.addr %s291, 4
      %s293 = scalar_lea.vmem %s3, %s292
      %p294 = scmp.lt.s32.totalorder %s18, 1
      %s295 = scalar_select %p294, %s18, 1
      %s296 = smul.addr %s295, 8
      %s297 = smul.addr %s296, 8
      %s298 = scalar_lea.vmem %s7, %s297
      %v299 = vld [vmem:[%s293] sm:$0xf]
      %v300 = vld [vmem:[%s293 + $0x4] sm:$0xf]
      %v301 = vld [vmem:[%s293 + $0x8] sm:$0xf]
      %v302 = vld [vmem:[%s293 + $0xc] sm:$0xf]
      %v303 = vld [vmem:[%s293 + $0x10] sm:$0xf]
      %v304 = vld [vmem:[%s293 + $0x14] sm:$0xf]
      %v305 = vld [vmem:[%s293 + $0x18] sm:$0xf]
      %v306 = vld [vmem:[%s293 + $0x1c] sm:$0xf]
      %v307 = vld [vmem:[%s4] sm:$0xf]
      %v308 = vld [vmem:[%s4 + $0x4] sm:$0xf]
      %v309 = vld [vmem:[%s4 + $0x8] sm:$0xf]
      %v310 = vld [vmem:[%s4 + $0xc] sm:$0xf]
      %v311 = vld [vmem:[%s4 + $0x10] sm:$0xf]
      %v312 = vld [vmem:[%s4 + $0x14] sm:$0xf]
      %v313 = vld [vmem:[%s4 + $0x18] sm:$0xf]
      %v314 = vld [vmem:[%s4 + $0x1c] sm:$0xf]
      %v315 = vld [vmem:[%s4 + $0x20] sm:$0xf]
      %v316 = vld [vmem:[%s4 + $0x24] sm:$0xf]
      %v317 = vld [vmem:[%s4 + $0x28] sm:$0xf]
      %v318 = vld [vmem:[%s4 + $0x2c] sm:$0xf]
      %v319 = vld [vmem:[%s4 + $0x30] sm:$0xf]
      %v320 = vld [vmem:[%s4 + $0x34] sm:$0xf]
      %v321 = vld [vmem:[%s4 + $0x38] sm:$0xf]
      %v322 = vld [vmem:[%s4 + $0x3c] sm:$0xf]
      %v331 = vunpack.c.l.b16 %v299
      %v332 = vunpack.c.l.b16 %v300
      %v333 = vunpack.c.l.b16 %v301
      %v334 = vunpack.c.l.b16 %v302
      %v335 = vunpack.c.l.b16 %v303
      %v336 = vunpack.c.l.b16 %v304
      %v337 = vunpack.c.l.b16 %v305
      %v338 = vunpack.c.l.b16 %v306
      %v339 = vpack.c.b16 %v332, %v331
      %v340 = vpack.c.b16 %v334, %v333
      %v341 = vpack.c.b16 %v336, %v335
      %v342 = vpack.c.b16 %v338, %v337
      %v363 = vunpack.c.l.b16 %v307
      %v364 = vunpack.c.l.b16 %v308
      %v365 = vunpack.c.l.b16 %v309
      %v366 = vunpack.c.l.b16 %v310
      %v367 = vunpack.c.l.b16 %v311
      %v368 = vunpack.c.l.b16 %v312
      %v369 = vunpack.c.l.b16 %v313
      %v370 = vunpack.c.l.b16 %v314
      %v371 = vunpack.c.l.b16 %v315
      %v372 = vunpack.c.l.b16 %v316
      %v373 = vunpack.c.l.b16 %v317
      %v374 = vunpack.c.l.b16 %v318
      %v375 = vunpack.c.l.b16 %v319
      %v376 = vunpack.c.l.b16 %v320
      %v377 = vunpack.c.l.b16 %v321
      %v378 = vunpack.c.l.b16 %v322
      %v379 = vpack.c.b16 %v364, %v363
      %v380 = vpack.c.b16 %v366, %v365
      %v381 = vpack.c.b16 %v368, %v367
      %v382 = vpack.c.b16 %v370, %v369
      %v383 = vpack.c.b16 %v372, %v371
      %v384 = vpack.c.b16 %v374, %v373
      %v385 = vpack.c.b16 %v376, %v375
      %v386 = vpack.c.b16 %v378, %v377
      %395 = vmatpush.bf16.msra.mxu0 %v386
      %396 = vmatpush.bf16.msra.mxu0 %v385
      %397 = vmatpush.bf16.msra.mxu0 %v384
      %398 = vmatpush.bf16.msra.mxu0 %v383
      %399 = vmatpush.bf16.msra.mxu0 %v382
      %400 = vmatpush.bf16.msra.mxu0 %v381
      %401 = vmatpush.bf16.msra.mxu0 %v380
      %402 = vmatpush.bf16.msra.mxu0 %v379
      %403 = vmatmul.bf16.gmra.mxu0 %v339
      %v404 = vpop.f32.mrf.mxu0
      %v405 = vadd.f32 0.0, %v404
      %v406 = vpop.f32.mrf.mxu0
      %v407 = vadd.f32 0.0, %v406
      %408 = vmatmul.bf16.gmra.mxu0 %v340
      %v409 = vpop.f32.mrf.mxu0
      %v410 = vadd.f32 0.0, %v409
      %v411 = vpop.f32.mrf.mxu0
      %v412 = vadd.f32 0.0, %v411
      %413 = vmatmul.bf16.gmra.mxu0 %v341
      %v414 = vpop.f32.mrf.mxu0
      %v415 = vadd.f32 0.0, %v414
      %v416 = vpop.f32.mrf.mxu0
      %v417 = vadd.f32 0.0, %v416
      %418 = vmatmul.bf16.gmra.mxu0 %v342
      %v419 = vpop.f32.mrf.mxu0
      %v420 = vadd.f32 0.0, %v419
      %v421 = vpop.f32.mrf.mxu0
      %v422 = vadd.f32 0.0, %v421
      %423 = vdwg.mxu0
      %v424 = vld [vmem:[%s5] sm:$0x1]
      %v426 = vperm.slane %v424, 0
      %v428 = vmul.f32 %v426, %v405
      %v429 = vmul.f32 %v426, %v407
      %v430 = vmul.f32 %v426, %v410
      %v431 = vmul.f32 %v426, %v412
      %v432 = vmul.f32 %v426, %v415
      %v433 = vmul.f32 %v426, %v417
      %v434 = vmul.f32 %v426, %v420
      %v435 = vmul.f32 %v426, %v422
      %v436 = vld [vmem:[%s6] sm:$0x1]
      %v438 = vperm.slane %v436, 0
      %v440 = vadd.f32 %v428, %v438
      %v441 = vadd.f32 %v429, %v438
      %v442 = vadd.f32 %v430, %v438
      %v443 = vadd.f32 %v431, %v438
      %v444 = vadd.f32 %v432, %v438
      %v445 = vadd.f32 %v433, %v438
      %v446 = vadd.f32 %v434, %v438
      %v447 = vadd.f32 %v435, %v438
      %v448 = vld [vmem:[%s1] sm:$0x1]
      %v449 = vld [vmem:[%s288] sm:$0xf]
      %v450 = vld [vmem:[%s288 + $0x4] sm:$0xf]
      %v451 = vld [vmem:[%s288 + $0x8] sm:$0xf]
      %v452 = vld [vmem:[%s288 + $0xc] sm:$0xf]
      %v453 = vld [vmem:[%s288 + $0x10] sm:$0xf]
      %v454 = vld [vmem:[%s288 + $0x14] sm:$0xf]
      %v455 = vld [vmem:[%s288 + $0x18] sm:$0xf]
      %v456 = vld [vmem:[%s288 + $0x1c] sm:$0xf]
      %v457 = vunpack.c.l.bf16 %v449
      %v458 = vunpack.c.l.bf16 %v450
      %v459 = vunpack.c.l.bf16 %v451
      %v460 = vunpack.c.l.bf16 %v452
      %v461 = vunpack.c.l.bf16 %v453
      %v462 = vunpack.c.l.bf16 %v454
      %v463 = vunpack.c.l.bf16 %v455
      %v464 = vunpack.c.l.bf16 %v456
      %v466 = vperm.slane %v448, 0
      %v468 = vmul.f32 %v466, %v457
      %v469 = vmul.f32 %v466, %v458
      %v470 = vmul.f32 %v466, %v459
      %v471 = vmul.f32 %v466, %v460
      %v472 = vmul.f32 %v466, %v461
      %v473 = vmul.f32 %v466, %v462
      %v474 = vmul.f32 %v466, %v463
      %v475 = vmul.f32 %v466, %v464
      %v476 = vld [vmem:[%s2] sm:$0x1]
      %v478 = vperm.slane %v476, 0
      %v480 = vadd.f32 %v468, %v478
      %v481 = vadd.f32 %v469, %v478
      %v482 = vadd.f32 %v470, %v478
      %v483 = vadd.f32 %v471, %v478
      %v484 = vadd.f32 %v472, %v478
      %v485 = vadd.f32 %v473, %v478
      %v486 = vadd.f32 %v474, %v478
      %v487 = vadd.f32 %v475, %v478
      %v488 = vadd.f32 %v480, %v440
      %v489 = vadd.f32 %v481, %v441
      %v490 = vadd.f32 %v482, %v442
      %v491 = vadd.f32 %v483, %v443
      %v492 = vadd.f32 %v484, %v444
      %v493 = vadd.f32 %v485, %v445
      %v494 = vadd.f32 %v486, %v446
      %v495 = vadd.f32 %v487, %v447
      %v496 = vmax.f32 %v488, 0.0
      %v497 = vmax.f32 %v489, 0.0
      %v498 = vmax.f32 %v490, 0.0
      %v499 = vmax.f32 %v491, 0.0
      %v500 = vmax.f32 %v492, 0.0
      %v501 = vmax.f32 %v493, 0.0
      %v502 = vmax.f32 %v494, 0.0
      %v503 = vmax.f32 %v495, 0.0
      %504 = vst [vmem:[%s298] sm:$0xff] %v496
      %505 = vst [vmem:[%s298 + $0x8] sm:$0xff] %v497
      %506 = vst [vmem:[%s298 + $0x10] sm:$0xff] %v498
      %507 = vst [vmem:[%s298 + $0x18] sm:$0xff] %v499
      %508 = vst [vmem:[%s298 + $0x20] sm:$0xff] %v500
      %509 = vst [vmem:[%s298 + $0x28] sm:$0xff] %v501
      %510 = vst [vmem:[%s298 + $0x30] sm:$0xff] %v502
      %511 = vst [vmem:[%s298 + $0x38] sm:$0xff] %v503
      %p512 = scmp.lt.s32.totalorder %s18, 1
      %s513 = scalar_select %p512, %s18, 1
      %s514 = smul.addr %s513, 8
      %s515 = smul.addr %s514, 8
      %s516 = scalar_lea.vmem %s7, %s515
      // Predicated region
      $region49: #{basic_block_forward.5} parent=47 // pred_check
        %p517 = pneg %p193
      $region50: #{basic_block_forward.5} parent=47 // pred_check_branch
        %519 = sbr.rel (%p517) target = $region52
      $region51: #{basic_block_forward.5} parent=47 // pred_region
        _
      $region52: #{basic_block_forward.5} parent=47 // pred_fallthru
        _
    $region48: #{basic_block_forward.5} parent=5 // pred_fallthru
      _
    %p520 = scmp.le.s32.totalorder 2, %s13
    // Predicated region
    $region53: #{basic_block_forward.5} parent=5 // pred_check
      %p521 = pneg %p520
    $region54: #{basic_block_forward.5} parent=5 // pred_check_branch
      %523 = sbr.rel (%p521) target = $region56
    $region55: #{basic_block_forward.5} parent=5 // pred_region
      %s524 = ssub.s32 %s13, 2
      // Predicated region
      $region57: #{basic_block_forward.5} parent=55 // pred_check
        %p525 = pneg %p199
      $region58: #{basic_block_forward.5} parent=55 // pred_check_branch
        %527 = sbr.rel (%p525) target = $region60
      $region59: #{basic_block_forward.5} parent=55 // pred_region
        %p528 = scmp.lt.s32.totalorder %s19, 1
        %s529 = scalar_select %p528, %s19, 1
        %s530 = smul.addr %s529, 8
        %s531 = smul.addr %s530, 8
        %s532 = scalar_lea.vmem %s7, %s531
      $region60: #{basic_block_forward.5} parent=55 // pred_fallthru
        _
    $region56: #{basic_block_forward.5} parent=5 // pred_fallthru
      _
  $region6: #{basic_block_forward.5} parent=0 // loop_footer
    %s17 = sadd.s32 1, %s13
  $region7: #{basic_block_forward.5} parent=0 // loop_footer_branch
    %12 = sbr.rel target = $region3
  $region8: #{basic_block_forward.5} parent=0 // loop_exit
    _

// kernel: basic_block_forward.3
$region0: #{basic_block_forward.3}
  #allocation0 [shape = 'u32[]', space=smem, size = 0x4, offset = 0x4, fixed_abs, tag = 'smem constant byte address 0x4 - core index']
  #allocation1 [shape = 'u32[72,128]{1,0:T(1,128)}', space=vmem, size = 0x9000, scoped, tag = 'internal scratch']
  %s0 = inlined_call_operand.vmem [shape: bf16[2,9,2,9,256], index: 0, kind: input, shape index: {}]
  %s1 = inlined_call_operand.vmem [shape: bf16[3,384,128], index: 1, kind: input, shape index: {}]
  %s2 = inlined_call_operand.vmem [shape: bf16[2,8,8,128], index: 2, kind: input, shape index: {}]
  %s3 = inlined_call_operand.vmem [shape: bf16[128,128], index: 3, kind: input, shape index: {}]
  %s4 = inlined_call_operand.vmem [shape: bf16[2,8,8,128], index: 4, kind: output, shape index: {0}]
  %s5 = inlined_call_operand.vmem [shape: f32[2,2,128], index: 5, kind: output, shape index: {1}]
  %s6 = inlined_call_operand.vmem [shape: f32[2,2,128], index: 6, kind: output, shape index: {2}]
  %7 = xla_tuple %s4, %s5, %s6
  %s8 = sld [smem:[#allocation0]]
  $region65: #{basic_block_forward.3} parent=0
    _
  %s10 = ssub.s32 1, %s8
  %s11 = scalar_select 0, %s10, %s8
  loop: start=0, step=1, limit=4
  $region2: #{basic_block_forward.3} parent=0 // loop_pre_header
    _
  $region3: #{basic_block_forward.3} parent=0 // loop_header
    %s13 = sphi 0, %s17
    %p14 = scmp.ge.s32.totalorder %s13, 4
    %s23 = sphi 0, %s25
    %s26 = sphi 0, %s23
    %s27 = sphi 0, %s26
    %s43 = sphi 0, %s27
    %s47 = sphi 0, %s47
    %s49 = sphi 0, %s47
    %s50 = sphi 0, %s49
    %s64 = sphi 0, %s50
    %s70 = sphi 0, %s72
    %s73 = sphi 0, %s70
    %s74 = sphi 0, %s73
    %s90 = sphi 0, %s74
    %s94 = sphi 0, %s94
    %s96 = sphi 0, %s94
    %s97 = sphi 0, %s96
    %s111 = sphi 0, %s97
    %s117 = sphi 0, %s119
    %s120 = sphi 0, %s117
    %s121 = sphi 0, %s120
    %s137 = sphi 0, %s121
    %s143 = sphi 0, %s145
    %s146 = sphi 0, %s143
    %s147 = sphi 0, %s146
    %s163 = sphi 0, %s147
    %s169 = sphi 0, %s171
    %s172 = sphi 0, %s169
    %s173 = sphi 0, %s172
    %s189 = sphi 0, %s173
  $region4: #{basic_block_forward.3} parent=0 // loop_header_branch
    %16 = sbr.rel (%p14) target = $region8
  $region5: #{basic_block_forward.3} parent=0 // loop_body
    %s18 = ssub.s32 %s13, 1
    %s19 = ssub.s32 %s13, 2
    %s20 = sadd.s32 %s13, 1
    %s21 = ssub.s32 %s13, %s20
    %p22 = scmp.eq.s32.totalorder %s21, 0
    %s24 = sadd.s32 %s23, 1
    %s25 = scalar_select %p22, %s23, %s24
    %p28 = pneg %p22
    %p29 = scmp.eq.s32.totalorder %s13, 1
    %p30 = por %p28, %p29
    %p31 = scmp.ne.s32.totalorder %s23, %s26
    %p32 = scmp.eq.s32.totalorder %s13, 0
    %p33 = por %p31, %p32
    %p34 = scmp.ne.s32.totalorder %s23, %s26
    %p35 = scmp.eq.s32.totalorder %s18, 1
    %p36 = por %p34, %p35
    %p37 = scmp.ne.s32.totalorder %s26, %s27
    %p38 = scmp.eq.s32.totalorder %s18, 0
    %p39 = por %p37, %p38
    %p40 = scmp.ne.s32.totalorder %s26, %s27
    %p41 = scmp.eq.s32.totalorder %s19, 1
    %p42 = por %p40, %p41
    %p44 = scmp.ne.s32.totalorder %s27, %s43
    %p45 = scmp.eq.s32.totalorder %s19, 0
    %p46 = por %p44, %p45
    %s48 = sadd.s32 %s47, 1
    %p51 = scmp.eq.s32.totalorder %s13, 1
    %p52 = scmp.ne.s32.totalorder %s47, %s49
    %p53 = scmp.eq.s32.totalorder %s13, 0
    %p54 = por %p52, %p53
    %p55 = scmp.ne.s32.totalorder %s47, %s49
    %p56 = scmp.eq.s32.totalorder %s18, 1
    %p57 = por %p55, %p56
    %p58 = scmp.ne.s32.totalorder %s49, %s50
    %p59 = scmp.eq.s32.totalorder %s18, 0
    %p60 = por %p58, %p59
    %p61 = scmp.ne.s32.totalorder %s49, %s50
    %p62 = scmp.eq.s32.totalorder %s19, 1
    %p63 = por %p61, %p62
    %p65 = scmp.ne.s32.totalorder %s50, %s64
    %p66 = scmp.eq.s32.totalorder %s19, 0
    %p67 = por %p65, %p66
    %s68 = ssub.s32 %s13, %s20
    %p69 = scmp.eq.s32.totalorder %s68, 0
    %s71 = sadd.s32 %s70, 1
    %s72 = scalar_select %p69, %s70, %s71
    %p75 = pneg %p69
    %p76 = scmp.eq.s32.totalorder %s13, 1
    %p77 = por %p75, %p76
    %p78 = scmp.ne.s32.totalorder %s70, %s73
    %p79 = scmp.eq.s32.totalorder %s13, 0
    %p80 = por %p78, %p79
    %p81 = scmp.ne.s32.totalorder %s70, %s73
    %p82 = scmp.eq.s32.totalorder %s18, 1
    %p83 = por %p81, %p82
    %p84 = scmp.ne.s32.totalorder %s73, %s74
    %p85 = scmp.eq.s32.totalorder %s18, 0
    %p86 = por %p84, %p85
    %p87 = scmp.ne.s32.totalorder %s73, %s74
    %p88 = scmp.eq.s32.totalorder %s19, 1
    %p89 = por %p87, %p88
    %p91 = scmp.ne.s32.totalorder %s74, %s90
    %p92 = scmp.eq.s32.totalorder %s19, 0
    %p93 = por %p91, %p92
    %s95 = sadd.s32 %s94, 1
    %p98 = scmp.eq.s32.totalorder %s13, 1
    %p99 = scmp.ne.s32.totalorder %s94, %s96
    %p100 = scmp.eq.s32.totalorder %s13, 0
    %p101 = por %p99, %p100
    %p102 = scmp.ne.s32.totalorder %s94, %s96
    %p103 = scmp.eq.s32.totalorder %s18, 1
    %p104 = por %p102, %p103
    %p105 = scmp.ne.s32.totalorder %s96, %s97
    %p106 = scmp.eq.s32.totalorder %s18, 0
    %p107 = por %p105, %p106
    %p108 = scmp.ne.s32.totalorder %s96, %s97
    %p109 = scmp.eq.s32.totalorder %s19, 1
    %p110 = por %p108, %p109
    %p112 = scmp.ne.s32.totalorder %s97, %s111
    %p113 = scmp.eq.s32.totalorder %s19, 0
    %p114 = por %p112, %p113
    %s115 = ssub.s32 %s13, %s20
    %p116 = scmp.eq.s32.totalorder %s115, 0
    %s118 = sadd.s32 %s117, 1
    %s119 = scalar_select %p116, %s117, %s118
    %p122 = pneg %p116
    %p123 = scmp.eq.s32.totalorder %s13, 1
    %p124 = por %p122, %p123
    %p125 = scmp.ne.s32.totalorder %s117, %s120
    %p126 = scmp.eq.s32.totalorder %s13, 0
    %p127 = por %p125, %p126
    %p128 = scmp.ne.s32.totalorder %s117, %s120
    %p129 = scmp.eq.s32.totalorder %s18, 1
    %p130 = por %p128, %p129
    %p131 = scmp.ne.s32.totalorder %s120, %s121
    %p132 = scmp.eq.s32.totalorder %s18, 0
    %p133 = por %p131, %p132
    %p134 = scmp.ne.s32.totalorder %s120, %s121
    %p135 = scmp.eq.s32.totalorder %s19, 1
    %p136 = por %p134, %p135
    %p138 = scmp.ne.s32.totalorder %s121, %s137
    %p139 = scmp.eq.s32.totalorder %s19, 0
    %p140 = por %p138, %p139
    %s141 = ssub.s32 %s13, %s20
    %p142 = scmp.eq.s32.totalorder %s141, 0
    %s144 = sadd.s32 %s143, 1
    %s145 = scalar_select %p142, %s143, %s144
    %p148 = pneg %p142
    %p149 = scmp.eq.s32.totalorder %s13, 1
    %p150 = por %p148, %p149
    %p151 = scmp.ne.s32.totalorder %s143, %s146
    %p152 = scmp.eq.s32.totalorder %s13, 0
    %p153 = por %p151, %p152
    %p154 = scmp.ne.s32.totalorder %s143, %s146
    %p155 = scmp.eq.s32.totalorder %s18, 1
    %p156 = por %p154, %p155
    %p157 = scmp.ne.s32.totalorder %s146, %s147
    %p158 = scmp.eq.s32.totalorder %s18, 0
    %p159 = por %p157, %p158
    %p160 = scmp.ne.s32.totalorder %s146, %s147
    %p161 = scmp.eq.s32.totalorder %s19, 1
    %p162 = por %p160, %p161
    %p164 = scmp.ne.s32.totalorder %s147, %s163
    %p165 = scmp.eq.s32.totalorder %s19, 0
    %p166 = por %p164, %p165
    %s167 = ssub.s32 %s13, %s20
    %p168 = scmp.eq.s32.totalorder %s167, 0
    %s170 = sadd.s32 %s169, 1
    %s171 = scalar_select %p168, %s169, %s170
    %p174 = pneg %p168
    %p175 = scmp.eq.s32.totalorder %s13, 1
    %p176 = por %p174, %p175
    %p177 = scmp.ne.s32.totalorder %s169, %s172
    %p178 = scmp.eq.s32.totalorder %s13, 0
    %p179 = por %p177, %p178
    %p180 = scmp.ne.s32.totalorder %s169, %s172
    %p181 = scmp.eq.s32.totalorder %s18, 1
    %p182 = por %p180, %p181
    %p183 = scmp.ne.s32.totalorder %s172, %s173
    %p184 = scmp.eq.s32.totalorder %s18, 0
    %p185 = por %p183, %p184
    %p186 = scmp.ne.s32.totalorder %s172, %s173
    %p187 = scmp.eq.s32.totalorder %s19, 1
    %p188 = por %p186, %p187
    %p190 = scmp.ne.s32.totalorder %s173, %s189
    %p191 = scmp.eq.s32.totalorder %s19, 0
    %p192 = por %p190, %p191
    %p193 = scmp.le.s32.totalorder 1, %s13
    %p194 = scmp.lt.s32.totalorder %s13, 3
    %p195 = pnand %p193, %p194
    %p196 = pneg %p195
    // Predicated region
    $region9: #{basic_block_forward.3} parent=5 // pred_check
      _
    $region10: #{basic_block_forward.3} parent=5 // pred_check_branch
      %198 = sbr.rel (%p195) target = $region12
    $region11: #{basic_block_forward.3} parent=5 // pred_region
      %s199 = ssub.s32 %s13, 1
      // Predicated region
      $region13: #{basic_block_forward.3} parent=11 // pred_check
        %p200 = pneg %p60
      $region14: #{basic_block_forward.3} parent=11 // pred_check_branch
        %202 = sbr.rel (%p200) target = $region16
      $region15: #{basic_block_forward.3} parent=11 // pred_region
        _
      $region16: #{basic_block_forward.3} parent=11 // pred_fallthru
        _
      // Predicated region
      $region17: #{basic_block_forward.3} parent=11 // pred_check
        %p203 = pneg %p107
      $region18: #{basic_block_forward.3} parent=11 // pred_check_branch
        %205 = sbr.rel (%p203) target = $region20
      $region19: #{basic_block_forward.3} parent=11 // pred_region
        _
      $region20: #{basic_block_forward.3} parent=11 // pred_fallthru
        _
    $region12: #{basic_block_forward.3} parent=5 // pred_fallthru
      _
    %p206 = scmp.lt.s32.totalorder %s13, 2
    // Predicated region
    $region21: #{basic_block_forward.3} parent=5 // pred_check
      %p207 = pneg %p206
    $region22: #{basic_block_forward.3} parent=5 // pred_check_branch
      %209 = sbr.rel (%p207) target = $region24
    $region23: #{basic_block_forward.3} parent=5 // pred_region
      // Predicated region
      $region25: #{basic_block_forward.3} parent=23 // pred_check
        %p210 = pneg %p33
      $region26: #{basic_block_forward.3} parent=23 // pred_check_branch
        %212 = sbr.rel (%p210) target = $region28
      $region27: #{basic_block_forward.3} parent=23 // pred_region
        %p213 = scmp.lt.s32.totalorder %s13, 1
        %s214 = scalar_select %p213, %s13, 1
        %s215 = smul.addr %s214, 72
        %s216 = smul.addr %s215, 4
        %s217 = scalar_lea.vmem %s0, %s216
      $region28: #{basic_block_forward.3} parent=23 // pred_fallthru
        _
      // Predicated region
      $region29: #{basic_block_forward.3} parent=23 // pred_check
        %p218 = pneg %p80
      $region30: #{basic_block_forward.3} parent=23 // pred_check_branch
        %220 = sbr.rel (%p218) target = $region32
      $region31: #{basic_block_forward.3} parent=23 // pred_region
        %p221 = scmp.lt.s32.totalorder %s13, 1
        %s222 = scalar_select %p221, %s13, 1
        %s223 = smul.addr %s222, 8
        %s224 = smul.addr %s223, 4
        %s225 = scalar_lea.vmem %s2, %s224
      $region32: #{basic_block_forward.3} parent=23 // pred_fallthru
        _
    $region24: #{basic_block_forward.3} parent=5 // pred_fallthru
      _
    %p226 = scmp.le.s32.totalorder 1, %s13
    %p227 = scmp.lt.s32.totalorder %s13, 3
    %p228 = pnand %p226, %p227
    %p229 = pneg %p228
    // Predicated region
    $region33: #{basic_block_forward.3} parent=5 // pred_check
      _
    $region34: #{basic_block_forward.3} parent=5 // pred_check_branch
      %231 = sbr.rel (%p228) target = $region36
    $region35: #{basic_block_forward.3} parent=5 // pred_region
      %s232 = ssub.s32 %s13, 1
      %p233 = scmp.lt.s32.totalorder %s18, 1
      %s234 = scalar_select %p233, %s18, 1
      %s235 = smul.addr %s234, 72
      %s236 = smul.addr %s235, 4
      %s237 = scalar_lea.vmem %s0, %s236
      %p238 = pneg %p39
      %p239 = pneg %p36
      %p240 = pneg %p60
      %p241 = pneg %p57
      %p242 = scmp.lt.s32.totalorder %s18, 1
      %s243 = scalar_select %p242, %s18, 1
      %s244 = smul.addr %s243, 8
      %s245 = smul.addr %s244, 4
      %s246 = scalar_lea.vmem %s2, %s245
      %p247 = pneg %p86
      %p248 = pneg %p83
      %p249 = pneg %p107
      %p250 = pneg %p104
      %p251 = pneg %p133
      %p252 = pneg %p130
      %p253 = scmp.lt.s32.totalorder %s18, 1
      %s254 = scalar_select %p253, %s18, 1
      %s255 = smul.addr %s254, 8
      %s256 = smul.addr %s255, 4
      %s257 = scalar_lea.vmem %s4, %s256
      %p258 = pneg %p159
      %p259 = pneg %p156
      %p260 = scmp.lt.s32.totalorder %s18, 1
      %s261 = scalar_select %p260, %s18, 1
      %s262 = smul.addr %s261, 2
      %s263 = scalar_lea.vmem %s5, %s262
      %p264 = pneg %p185
      %p265 = pneg %p182
      %p266 = scmp.lt.s32.totalorder %s18, 1
      %s267 = scalar_select %p266, %s18, 1
      %s268 = smul.addr %s267, 2
      %s269 = scalar_lea.vmem %s6, %s268
      %p270 = scmp.lt.s32.totalorder %s18, 1
      %s271 = scalar_select %p270, %s18, 1
      %s272 = smul.addr %s271, 72
      %s273 = smul.addr %s272, 4
      %s274 = scalar_lea.vmem %s0, %s273
      %p275 = scmp.lt.s32.totalorder %s18, 1
      %s276 = scalar_select %p275, %s18, 1
      %s277 = smul.addr %s276, 8
      %s278 = smul.addr %s277, 4
      %s279 = scalar_lea.vmem %s2, %s278
      %p280 = scmp.lt.s32.totalorder %s18, 1
      %s281 = scalar_select %p280, %s18, 1
      %s282 = smul.addr %s281, 8
      %s283 = smul.addr %s282, 4
      %s284 = scalar_lea.vmem %s4, %s283
      %p285 = scmp.lt.s32.totalorder %s18, 1
      %s286 = scalar_select %p285, %s18, 1
      %s287 = smul.addr %s286, 2
      %s288 = scalar_lea.vmem %s5, %s287
      %p289 = scmp.lt.s32.totalorder %s18, 1
      %s290 = scalar_select %p289, %s18, 1
      %s291 = smul.addr %s290, 2
      %s292 = scalar_lea.vmem %s6, %s291
      %v293 = vld [vmem:[%s274] sm:$0xf]
      %v294 = vld [vmem:[%s274 + $0x20] sm:$0xf]
      %v295 = vld [vmem:[%s274 + $0x40] sm:$0xf]
      %v296 = vld [vmem:[%s274 + $0x60] sm:$0xf]
      %v297 = vld [vmem:[%s274 + $0x80] sm:$0xf]
      %v298 = vld [vmem:[%s274 + $0xa0] sm:$0xf]
      %v299 = vld [vmem:[%s274 + $0xc0] sm:$0xf]
      %v300 = vld [vmem:[%s274 + $0xe0] sm:$0xf]
      %v301 = vld [vmem:[%s274 + $0x4] sm:$0xf]
      %v302 = vld [vmem:[%s274 + $0x24] sm:$0xf]
      %v303 = vld [vmem:[%s274 + $0x44] sm:$0xf]
      %v304 = vld [vmem:[%s274 + $0x64] sm:$0xf]
      %v305 = vld [vmem:[%s274 + $0x84] sm:$0xf]
      %v306 = vld [vmem:[%s274 + $0xa4] sm:$0xf]
      %v307 = vld [vmem:[%s274 + $0xc4] sm:$0xf]
      %v308 = vld [vmem:[%s274 + $0xe4] sm:$0xf]
      %v309 = vld [vmem:[%s274 + $0x8] sm:$0x1]
      %v310 = vld [vmem:[%s274 + $0x28] sm:$0x1]
      %v311 = vld [vmem:[%s274 + $0x48] sm:$0x1]
      %v312 = vld [vmem:[%s274 + $0x68] sm:$0x1]
      %v313 = vld [vmem:[%s274 + $0x88] sm:$0x1]
      %v314 = vld [vmem:[%s274 + $0xa8] sm:$0x1]
      %v315 = vld [vmem:[%s274 + $0xc8] sm:$0x1]
      %v316 = vld [vmem:[%s274 + $0xe8] sm:$0x1]
      %v333 = vunpack.c.l.b16 %v293
      %v334 = vunpack.c.l.b16 %v309
      %v335 = vunpack.c.l.b16 %v294
      %v336 = vunpack.c.l.b16 %v310
      %v337 = vunpack.c.l.b16 %v295
      %v338 = vunpack.c.l.b16 %v311
      %v339 = vunpack.c.l.b16 %v296
      %v340 = vunpack.c.l.b16 %v312
      %v341 = vunpack.c.l.b16 %v297
      %v342 = vunpack.c.l.b16 %v313
      %v343 = vunpack.c.l.b16 %v298
      %v344 = vunpack.c.l.b16 %v314
      %v345 = vunpack.c.l.b16 %v299
      %v346 = vunpack.c.l.b16 %v315
      %v347 = vunpack.c.l.b16 %v300
      %v348 = vunpack.c.l.b16 %v316
      %v349 = vpack.c.b16 %v334, %v333
      %v350 = vpack.c.b16 %v336, %v335
      %v351 = vpack.c.b16 %v338, %v337
      %v352 = vpack.c.b16 %v340, %v339
      %v353 = vpack.c.b16 %v342, %v341
      %v354 = vpack.c.b16 %v344, %v343
      %v355 = vpack.c.b16 %v346, %v345
      %v356 = vpack.c.b16 %v348, %v347
      %v358 = vshrl.u32 %v349, 16
      %v360 = vshll.u32 %v349, 16
      %v362 = vrot.slane %v360, 1
      %v363 = vor.u32 %v358, %v362
      %v365 = vshrl.u32 %v350, 16
      %v367 = vshll.u32 %v350, 16
      %v369 = vrot.slane %v367, 1
      %v370 = vor.u32 %v365, %v369
      %v372 = vshrl.u32 %v351, 16
      %v374 = vshll.u32 %v351, 16
      %v376 = vrot.slane %v374, 1
      %v377 = vor.u32 %v372, %v376
      %v379 = vshrl.u32 %v352, 16
      %v381 = vshll.u32 %v352, 16
      %v383 = vrot.slane %v381, 1
      %v384 = vor.u32 %v379, %v383
      %v386 = vshrl.u32 %v353, 16
      %v388 = vshll.u32 %v353, 16
      %v390 = vrot.slane %v388, 1
      %v391 = vor.u32 %v386, %v390
      %v393 = vshrl.u32 %v354, 16
      %v395 = vshll.u32 %v354, 16
      %v397 = vrot.slane %v395, 1
      %v398 = vor.u32 %v393, %v397
      %v400 = vshrl.u32 %v355, 16
      %v402 = vshll.u32 %v355, 16
      %v404 = vrot.slane %v402, 1
      %v405 = vor.u32 %v400, %v404
      %v407 = vshrl.u32 %v356, 16
      %v409 = vshll.u32 %v356, 16
      %v411 = vrot.slane %v409, 1
      %v412 = vor.u32 %v407, %v411
      %v421 = vunpack.c.l.b16 %v301
      %v422 = vunpack.c.l.b16 %v363
      %v423 = vunpack.c.l.b16 %v302
      %v424 = vunpack.c.l.b16 %v370
      %v425 = vunpack.c.l.b16 %v303
      %v426 = vunpack.c.l.b16 %v377
      %v427 = vunpack.c.l.b16 %v304
      %v428 = vunpack.c.l.b16 %v384
      %v429 = vunpack.c.l.b16 %v305
      %v430 = vunpack.c.l.b16 %v391
      %v431 = vunpack.c.l.b16 %v306
      %v432 = vunpack.c.l.b16 %v398
      %v433 = vunpack.c.l.b16 %v307
      %v434 = vunpack.c.l.b16 %v405
      %v435 = vunpack.c.l.b16 %v308
      %v436 = vunpack.c.l.b16 %v412
      %v437 = vld [vmem:[%s1] sm:$0xf]
      %v438 = vld [vmem:[%s1 + $0x4] sm:$0xf]
      %v439 = vld [vmem:[%s1 + $0x8] sm:$0xf]
      %v440 = vld [vmem:[%s1 + $0xc] sm:$0xf]
      %v441 = vld [vmem:[%s1 + $0x10] sm:$0xf]
      %v442 = vld [vmem:[%s1 + $0x14] sm:$0xf]
      %v443 = vld [vmem:[%s1 + $0x18] sm:$0xf]
      %v444 = vld [vmem:[%s1 + $0x1c] sm:$0xf]
      %v445 = vld [vmem:[%s1 + $0x20] sm:$0xf]
      %v446 = vld [vmem:[%s1 + $0x24] sm:$0xf]
      %v447 = vld [vmem:[%s1 + $0x28] sm:$0xf]
      %v448 = vld [vmem:[%s1 + $0x2c] sm:$0xf]
      %v449 = vld [vmem:[%s1 + $0x30] sm:$0xf]
      %v450 = vld [vmem:[%s1 + $0x34] sm:$0xf]
      %v451 = vld [vmem:[%s1 + $0x38] sm:$0xf]
      %v452 = vld [vmem:[%s1 + $0x3c] sm:$0xf]
      %v453 = vld [vmem:[%s1 + $0x40] sm:$0xf]
      %v454 = vld [vmem:[%s1 + $0x44] sm:$0xf]
      %v455 = vld [vmem:[%s1 + $0x48] sm:$0xf]
      %v456 = vld [vmem:[%s1 + $0x4c] sm:$0xf]
      %v457 = vld [vmem:[%s1 + $0x50] sm:$0xf]
      %v458 = vld [vmem:[%s1 + $0x54] sm:$0xf]
      %v459 = vld [vmem:[%s1 + $0x58] sm:$0xf]
      %v460 = vld [vmem:[%s1 + $0x5c] sm:$0xf]
      %v461 = vld [vmem:[%s1 + $0x60] sm:$0xf]
      %v462 = vld [vmem:[%s1 + $0x64] sm:$0xf]
      %v463 = vld [vmem:[%s1 + $0x68] sm:$0xf]
      %v464 = vld [vmem:[%s1 + $0x6c] sm:$0xf]
      %v465 = vld [vmem:[%s1 + $0x70] sm:$0xf]
      %v466 = vld [vmem:[%s1 + $0x74] sm:$0xf]
      %v467 = vld [vmem:[%s1 + $0x78] sm:$0xf]
      %v468 = vld [vmem:[%s1 + $0x7c] sm:$0xf]
      %v469 = vld [vmem:[%s1 + $0x80] sm:$0xf]
      %v470 = vld [vmem:[%s1 + $0x84] sm:$0xf]
      %v471 = vld [vmem:[%s1 + $0x88] sm:$0xf]
      %v472 = vld [vmem:[%s1 + $0x8c] sm:$0xf]
      %v473 = vld [vmem:[%s1 + $0x90] sm:$0xf]
      %v474 = vld [vmem:[%s1 + $0x94] sm:$0xf]
      %v475 = vld [vmem:[%s1 + $0x98] sm:$0xf]
      %v476 = vld [vmem:[%s1 + $0x9c] sm:$0xf]
      %v477 = vld [vmem:[%s1 + $0xa0] sm:$0xf]
      %v478 = vld [vmem:[%s1 + $0xa4] sm:$0xf]
      %v479 = vld [vmem:[%s1 + $0xa8] sm:$0xf]
      %v480 = vld [vmem:[%s1 + $0xac] sm:$0xf]
      %v481 = vld [vmem:[%s1 + $0xb0] sm:$0xf]
      %v482 = vld [vmem:[%s1 + $0xb4] sm:$0xf]
      %v483 = vld [vmem:[%s1 + $0xb8] sm:$0xf]
      %v484 = vld [vmem:[%s1 + $0xbc] sm:$0xf]
      %s485 = scalar_lea.vmem %s274, 16
      %v486 = vld [vmem:[%s485] sm:$0xf]
      %v487 = vld [vmem:[%s485 + $0x20] sm:$0xf]
      %v488 = vld [vmem:[%s485 + $0x40] sm:$0xf]
      %v489 = vld [vmem:[%s485 + $0x60] sm:$0xf]
      %v490 = vld [vmem:[%s485 + $0x80] sm:$0xf]
      %v491 = vld [vmem:[%s485 + $0xa0] sm:$0xf]
      %v492 = vld [vmem:[%s485 + $0xc0] sm:$0xf]
      %v493 = vld [vmem:[%s485 + $0xe0] sm:$0xf]
      %v494 = vld [vmem:[%s485 + $0x4] sm:$0xf]
      %v495 = vld [vmem:[%s485 + $0x24] sm:$0xf]
      %v496 = vld [vmem:[%s485 + $0x44] sm:$0xf]
      %v497 = vld [vmem:[%s485 + $0x64] sm:$0xf]
      %v498 = vld [vmem:[%s485 + $0x84] sm:$0xf]
      %v499 = vld [vmem:[%s485 + $0xa4] sm:$0xf]
      %v500 = vld [vmem:[%s485 + $0xc4] sm:$0xf]
      %v501 = vld [vmem:[%s485 + $0xe4] sm:$0xf]
      %v502 = vld [vmem:[%s485 + $0x8] sm:$0x1]
      %v503 = vld [vmem:[%s485 + $0x28] sm:$0x1]
      %v504 = vld [vmem:[%s485 + $0x48] sm:$0x1]
      %v505 = vld [vmem:[%s485 + $0x68] sm:$0x1]
      %v506 = vld [vmem:[%s485 + $0x88] sm:$0x1]
      %v507 = vld [vmem:[%s485 + $0xa8] sm:$0x1]
      %v508 = vld [vmem:[%s485 + $0xc8] sm:$0x1]
      %v509 = vld [vmem:[%s485 + $0xe8] sm:$0x1]
      %v526 = vunpack.c.l.b16 %v486
      %v527 = vunpack.c.l.b16 %v502
      %v528 = vunpack.c.l.b16 %v487
      %v529 = vunpack.c.l.b16 %v503
      %v530 = vunpack.c.l.b16 %v488
      %v531 = vunpack.c.l.b16 %v504
      %v532 = vunpack.c.l.b16 %v489
      %v533 = vunpack.c.l.b16 %v505
      %v534 = vunpack.c.l.b16 %v490
      %v535 = vunpack.c.l.b16 %v506
      %v536 = vunpack.c.l.b16 %v491
      %v537 = vunpack.c.l.b16 %v507
      %v538 = vunpack.c.l.b16 %v492
      %v539 = vunpack.c.l.b16 %v508
      %v540 = vunpack.c.l.b16 %v493
      %v541 = vunpack.c.l.b16 %v509
      %v542 = vpack.c.b16 %v527, %v526
      %v543 = vpack.c.b16 %v529, %v528
      %v544 = vpack.c.b16 %v531, %v530
      %v545 = vpack.c.b16 %v533, %v532
      %v546 = vpack.c.b16 %v535, %v534
      %v547 = vpack.c.b16 %v537, %v536
      %v548 = vpack.c.b16 %v539, %v538
      %v549 = vpack.c.b16 %v541, %v540
      %v551 = vshrl.u32 %v542, 16
      %v553 = vshll.u32 %v542, 16
      %v555 = vrot.slane %v553, 1
      %v556 = vor.u32 %v551, %v555
      %v558 = vshrl.u32 %v543, 16
      %v560 = vshll.u32 %v543, 16
      %v562 = vrot.slane %v560, 1
      %v563 = vor.u32 %v558, %v562
      %v565 = vshrl.u32 %v544, 16
      %v567 = vshll.u32 %v544, 16
      %v569 = vrot.slane %v567, 1
      %v570 = vor.u32 %v565, %v569
      %v572 = vshrl.u32 %v545, 16
      %v574 = vshll.u32 %v545, 16
      %v576 = vrot.slane %v574, 1
      %v577 = vor.u32 %v572, %v576
      %v579 = vshrl.u32 %v546, 16
      %v581 = vshll.u32 %v546, 16
      %v583 = vrot.slane %v581, 1
      %v584 = vor.u32 %v579, %v583
      %v586 = vshrl.u32 %v547, 16
      %v588 = vshll.u32 %v547, 16
      %v590 = vrot.slane %v588, 1
      %v591 = vor.u32 %v586, %v590
      %v593 = vshrl.u32 %v548, 16
      %v595 = vshll.u32 %v548, 16
      %v597 = vrot.slane %v595, 1
      %v598 = vor.u32 %v593, %v597
      %v600 = vshrl.u32 %v549, 16
      %v602 = vshll.u32 %v549, 16
      %v604 = vrot.slane %v602, 1
      %v605 = vor.u32 %v600, %v604
      %v614 = vunpack.c.l.b16 %v494
      %v615 = vunpack.c.l.b16 %v556
      %v616 = vunpack.c.l.b16 %v495
      %v617 = vunpack.c.l.b16 %v563
      %v618 = vunpack.c.l.b16 %v496
      %v619 = vunpack.c.l.b16 %v570
      %v620 = vunpack.c.l.b16 %v497
      %v621 = vunpack.c.l.b16 %v577
      %v622 = vunpack.c.l.b16 %v498
      %v623 = vunpack.c.l.b16 %v584
      %v624 = vunpack.c.l.b16 %v499
      %v625 = vunpack.c.l.b16 %v591
      %v626 = vunpack.c.l.b16 %v500
      %v627 = vunpack.c.l.b16 %v598
      %v628 = vunpack.c.l.b16 %v501
      %v629 = vunpack.c.l.b16 %v605
      %s630 = scalar_lea.vmem %s1, 192
      %v631 = vld [vmem:[%s630] sm:$0xf]
      %v632 = vld [vmem:[%s630 + $0x4] sm:$0xf]
      %v633 = vld [vmem:[%s630 + $0x8] sm:$0xf]
      %v634 = vld [vmem:[%s630 + $0xc] sm:$0xf]
      %v635 = vld [vmem:[%s630 + $0x10] sm:$0xf]
      %v636 = vld [vmem:[%s630 + $0x14] sm:$0xf]
      %v637 = vld [vmem:[%s630 + $0x18] sm:$0xf]
      %v638 = vld [vmem:[%s630 + $0x1c] sm:$0xf]
      %v639 = vld [vmem:[%s630 + $0x20] sm:$0xf]
      %v640 = vld [vmem:[%s630 + $0x24] sm:$0xf]
      %v641 = vld [vmem:[%s630 + $0x28] sm:$0xf]
      %v642 = vld [vmem:[%s630 + $0x2c] sm:$0xf]
      %v643 = vld [vmem:[%s630 + $0x30] sm:$0xf]
      %v644 = vld [vmem:[%s630 + $0x34] sm:$0xf]
      %v645 = vld [vmem:[%s630 + $0x38] sm:$0xf]
      %v646 = vld [vmem:[%s630 + $0x3c] sm:$0xf]
      %v647 = vld [vmem:[%s630 + $0x40] sm:$0xf]
      %v648 = vld [vmem:[%s630 + $0x44] sm:$0xf]
      %v649 = vld [vmem:[%s630 + $0x48] sm:$0xf]
      %v650 = vld [vmem:[%s630 + $0x4c] sm:$0xf]
      %v651 = vld [vmem:[%s630 + $0x50] sm:$0xf]
      %v652 = vld [vmem:[%s630 + $0x54] sm:$0xf]
      %v653 = vld [vmem:[%s630 + $0x58] sm:$0xf]
      %v654 = vld [vmem:[%s630 + $0x5c] sm:$0xf]
      %v655 = vld [vmem:[%s630 + $0x60] sm:$0xf]
      %v656 = vld [vmem:[%s630 + $0x64] sm:$0xf]
      %v657 = vld [vmem:[%s630 + $0x68] sm:$0xf]
      %v658 = vld [vmem:[%s630 + $0x6c] sm:$0xf]
      %v659 = vld [vmem:[%s630 + $0x70] sm:$0xf]
      %v660 = vld [vmem:[%s630 + $0x74] sm:$0xf]
      %v661 = vld [vmem:[%s630 + $0x78] sm:$0xf]
      %v662 = vld [vmem:[%s630 + $0x7c] sm:$0xf]
      %v663 = vld [vmem:[%s630 + $0x80] sm:$0xf]
      %v664 = vld [vmem:[%s630 + $0x84] sm:$0xf]
      %v665 = vld [vmem:[%s630 + $0x88] sm:$0xf]
      %v666 = vld [vmem:[%s630 + $0x8c] sm:$0xf]
      %v667 = vld [vmem:[%s630 + $0x90] sm:$0xf]
      %v668 = vld [vmem:[%s630 + $0x94] sm:$0xf]
      %v669 = vld [vmem:[%s630 + $0x98] sm:$0xf]
      %v670 = vld [vmem:[%s630 + $0x9c] sm:$0xf]
      %v671 = vld [vmem:[%s630 + $0xa0] sm:$0xf]
      %v672 = vld [vmem:[%s630 + $0xa4] sm:$0xf]
      %v673 = vld [vmem:[%s630 + $0xa8] sm:$0xf]
      %v674 = vld [vmem:[%s630 + $0xac] sm:$0xf]
      %v675 = vld [vmem:[%s630 + $0xb0] sm:$0xf]
      %v676 = vld [vmem:[%s630 + $0xb4] sm:$0xf]
      %v677 = vld [vmem:[%s630 + $0xb8] sm:$0xf]
      %v678 = vld [vmem:[%s630 + $0xbc] sm:$0xf]
      %v679 = vpack.c.b16 %v528, %v526
      %v680 = vpack.c.b16 %v616, %v614
      %v681 = vpack.c.b16 %v617, %v615
      %v682 = vpack.c.b16 %v532, %v530
      %v683 = vpack.c.b16 %v620, %v618
      %v684 = vpack.c.b16 %v621, %v619
      %v685 = vpack.c.b16 %v536, %v534
      %v686 = vpack.c.b16 %v624, %v622
      %v687 = vpack.c.b16 %v625, %v623
      %v688 = vpack.c.b16 %v540, %v538
      %v689 = vpack.c.b16 %v628, %v626
      %v690 = vpack.c.b16 %v629, %v627
      %v751 = vunpack.c.l.b16 %v631
      %v752 = vunpack.c.l.b16 %v632
      %v753 = vunpack.c.l.b16 %v633
      %v754 = vunpack.c.l.b16 %v634
      %v755 = vunpack.c.l.b16 %v635
      %v756 = vunpack.c.l.b16 %v636
      %v757 = vunpack.c.l.b16 %v637
      %v758 = vunpack.c.l.b16 %v638
      %v759 = vunpack.c.l.b16 %v639
      %v760 = vunpack.c.l.b16 %v640
      %v761 = vunpack.c.l.b16 %v641
      %v762 = vunpack.c.l.b16 %v642
      %v763 = vunpack.c.l.b16 %v643
      %v764 = vunpack.c.l.b16 %v644
      %v765 = vunpack.c.l.b16 %v645
      %v766 = vunpack.c.l.b16 %v646
      %v767 = vunpack.c.l.b16 %v647
      %v768 = vunpack.c.l.b16 %v648
      %v769 = vunpack.c.l.b16 %v649
      %v770 = vunpack.c.l.b16 %v650
      %v771 = vunpack.c.l.b16 %v651
      %v772 = vunpack.c.l.b16 %v652
      %v773 = vunpack.c.l.b16 %v653
      %v774 = vunpack.c.l.b16 %v654
      %v775 = vunpack.c.l.b16 %v655
      %v776 = vunpack.c.l.b16 %v656
      %v777 = vunpack.c.l.b16 %v657
      %v778 = vunpack.c.l.b16 %v658
      %v779 = vunpack.c.l.b16 %v659
      %v780 = vunpack.c.l.b16 %v660
      %v781 = vunpack.c.l.b16 %v661
      %v782 = vunpack.c.l.b16 %v662
      %v783 = vunpack.c.l.b16 %v663
      %v784 = vunpack.c.l.b16 %v664
      %v785 = vunpack.c.l.b16 %v665
      %v786 = vunpack.c.l.b16 %v666
      %v787 = vunpack.c.l.b16 %v667
      %v788 = vunpack.c.l.b16 %v668
      %v789 = vunpack.c.l.b16 %v669
      %v790 = vunpack.c.l.b16 %v670
      %v791 = vunpack.c.l.b16 %v671
      %v792 = vunpack.c.l.b16 %v672
      %v793 = vunpack.c.l.b16 %v673
      %v794 = vunpack.c.l.b16 %v674
      %v795 = vunpack.c.l.b16 %v675
      %v796 = vunpack.c.l.b16 %v676
      %v797 = vunpack.c.l.b16 %v677
      %v798 = vunpack.c.l.b16 %v678
      %v799 = vpack.c.b16 %v752, %v751
      %v800 = vpack.c.b16 %v754, %v753
      %v801 = vpack.c.b16 %v756, %v755
      %v802 = vpack.c.b16 %v758, %v757
      %v803 = vpack.c.b16 %v760, %v759
      %v804 = vpack.c.b16 %v762, %v761
      %v805 = vpack.c.b16 %v764, %v763
      %v806 = vpack.c.b16 %v766, %v765
      %v807 = vpack.c.b16 %v768, %v767
      %v808 = vpack.c.b16 %v770, %v769
      %v809 = vpack.c.b16 %v772, %v771
      %v810 = vpack.c.b16 %v774, %v773
      %v811 = vpack.c.b16 %v776, %v775
      %v812 = vpack.c.b16 %v778, %v777
      %v813 = vpack.c.b16 %v780, %v779
      %v814 = vpack.c.b16 %v782, %v781
      %v815 = vpack.c.b16 %v784, %v783
      %v816 = vpack.c.b16 %v786, %v785
      %v817 = vpack.c.b16 %v788, %v787
      %v818 = vpack.c.b16 %v790, %v789
      %v819 = vpack.c.b16 %v792, %v791
      %v820 = vpack.c.b16 %v794, %v793
      %v821 = vpack.c.b16 %v796, %v795
      %v822 = vpack.c.b16 %v798, %v797
      %847 = vmatpush.bf16.msra.mxu0 %v806
      %848 = vmatpush.bf16.msra.mxu0 %v805
      %849 = vmatpush.bf16.msra.mxu0 %v804
      %850 = vmatpush.bf16.msra.mxu0 %v803
      %851 = vmatpush.bf16.msra.mxu0 %v802
      %852 = vmatpush.bf16.msra.mxu0 %v801
      %853 = vmatpush.bf16.msra.mxu0 %v800
      %854 = vmatpush.bf16.msra.mxu0 %v799
      %855 = vmatmul.bf16.gmra.mxu0 %v679
      %v856 = vpop.f32.mrf.mxu0
      %v857 = vadd.f32 0.0, %v856
      %v858 = vpop.f32.mrf.mxu0
      %v859 = vadd.f32 0.0, %v858
      %860 = vmatmul.bf16.gmra.mxu0 %v682
      %v861 = vpop.f32.mrf.mxu0
      %v862 = vadd.f32 0.0, %v861
      %v863 = vpop.f32.mrf.mxu0
      %v864 = vadd.f32 0.0, %v863
      %865 = vmatmul.bf16.gmra.mxu0 %v685
      %v866 = vpop.f32.mrf.mxu0
      %v867 = vadd.f32 0.0, %v866
      %v868 = vpop.f32.mrf.mxu0
      %v869 = vadd.f32 0.0, %v868
      %870 = vmatmul.bf16.gmra.mxu0 %v688
      %v871 = vpop.f32.mrf.mxu0
      %v872 = vadd.f32 0.0, %v871
      %v873 = vpop.f32.mrf.mxu0
      %v874 = vadd.f32 0.0, %v873
      %875 = vdwg.mxu0
      %876 = vmatpush.bf16.msra.mxu0 %v814
      %877 = vmatpush.bf16.msra.mxu0 %v813
      %878 = vmatpush.bf16.msra.mxu0 %v812
      %879 = vmatpush.bf16.msra.mxu0 %v811
      %880 = vmatpush.bf16.msra.mxu0 %v810
      %881 = vmatpush.bf16.msra.mxu0 %v809
      %882 = vmatpush.bf16.msra.mxu0 %v808
      %883 = vmatpush.bf16.msra.mxu0 %v807
      %884 = vmatmul.bf16.gmra.mxu0 %v680
      %v885 = vpop.f32.mrf.mxu0
      %v886 = vadd.f32 %v857, %v885
      %v887 = vpop.f32.mrf.mxu0
      %v888 = vadd.f32 %v859, %v887
      %889 = vmatmul.bf16.gmra.mxu0 %v683
      %v890 = vpop.f32.mrf.mxu0
      %v891 = vadd.f32 %v862, %v890
      %v892 = vpop.f32.mrf.mxu0
      %v893 = vadd.f32 %v864, %v892
      %894 = vmatmul.bf16.gmra.mxu0 %v686
      %v895 = vpop.f32.mrf.mxu0
      %v896 = vadd.f32 %v867, %v895
      %v897 = vpop.f32.mrf.mxu0
      %v898 = vadd.f32 %v869, %v897
      %899 = vmatmul.bf16.gmra.mxu0 %v689
      %v900 = vpop.f32.mrf.mxu0
      %v901 = vadd.f32 %v872, %v900
      %v902 = vpop.f32.mrf.mxu0
      %v903 = vadd.f32 %v874, %v902
      %904 = vdwg.mxu0
      %905 = vmatpush.bf16.msra.mxu0 %v822
      %906 = vmatpush.bf16.msra.mxu0 %v821
      %907 = vmatpush.bf16.msra.mxu0 %v820
      %908 = vmatpush.bf16.msra.mxu0 %v819
      %909 = vmatpush.bf16.msra.mxu0 %v818
      %910 = vmatpush.bf16.msra.mxu0 %v817
      %911 = vmatpush.bf16.msra.mxu0 %v816
      %912 = vmatpush.bf16.msra.mxu0 %v815
      %913 = vmatmul.bf16.gmra.mxu0 %v681
      %v914 = vpop.f32.mrf.mxu0
      %v915 = vadd.f32 %v886, %v914
      %v916 = vpop.f32.mrf.mxu0
      %v917 = vadd.f32 %v888, %v916
      %918 = vmatmul.bf16.gmra.mxu0 %v684
      %v919 = vpop.f32.mrf.mxu0
      %v920 = vadd.f32 %v891, %v919
      %v921 = vpop.f32.mrf.mxu0
      %v922 = vadd.f32 %v893, %v921
      %923 = vmatmul.bf16.gmra.mxu0 %v687
      %v924 = vpop.f32.mrf.mxu0
      %v925 = vadd.f32 %v896, %v924
      %v926 = vpop.f32.mrf.mxu0
      %v927 = vadd.f32 %v898, %v926
      %928 = vmatmul.bf16.gmra.mxu0 %v690
      %v929 = vpop.f32.mrf.mxu0
      %v930 = vadd.f32 %v901, %v929
      %v931 = vpop.f32.mrf.mxu0
      %v932 = vadd.f32 %v903, %v931
      %933 = vdwg.mxu0
      %v934 = vpack.c.b16 %v335, %v333
      %v935 = vpack.c.b16 %v423, %v421
      %v936 = vpack.c.b16 %v424, %v422
      %v937 = vpack.c.b16 %v339, %v337
      %v938 = vpack.c.b16 %v427, %v425
      %v939 = vpack.c.b16 %v428, %v426
      %v940 = vpack.c.b16 %v343, %v341
      %v941 = vpack.c.b16 %v431, %v429
      %v942 = vpack.c.b16 %v432, %v430
      %v943 = vpack.c.b16 %v347, %v345
      %v944 = vpack.c.b16 %v435, %v433
      %v945 = vpack.c.b16 %v436, %v434
      %v1006 = vunpack.c.l.b16 %v437
      %v1007 = vunpack.c.l.b16 %v438
      %v1008 = vunpack.c.l.b16 %v439
      %v1009 = vunpack.c.l.b16 %v440
      %v1010 = vunpack.c.l.b16 %v441
      %v1011 = vunpack.c.l.b16 %v442
      %v1012 = vunpack.c.l.b16 %v443
      %v1013 = vunpack.c.l.b16 %v444
      %v1014 = vunpack.c.l.b16 %v445
      %v1015 = vunpack.c.l.b16 %v446
      %v1016 = vunpack.c.l.b16 %v447
      %v1017 = vunpack.c.l.b16 %v448
      %v1018 = vunpack.c.l.b16 %v449
      %v1019 = vunpack.c.l.b16 %v450
      %v1020 = vunpack.c.l.b16 %v451
      %v1021 = vunpack.c.l.b16 %v452
      %v1022 = vunpack.c.l.b16 %v453
      %v1023 = vunpack.c.l.b16 %v454
      %v1024 = vunpack.c.l.b16 %v455
      %v1025 = vunpack.c.l.b16 %v456
      %v1026 = vunpack.c.l.b16 %v457
      %v1027 = vunpack.c.l.b16 %v458
      %v1028 = vunpack.c.l.b16 %v459
      %v1029 = vunpack.c.l.b16 %v460
      %v1030 = vunpack.c.l.b16 %v461
      %v1031 = vunpack.c.l.b16 %v462
      %v1032 = vunpack.c.l.b16 %v463
      %v1033 = vunpack.c.l.b16 %v464
      %v1034 = vunpack.c.l.b16 %v465
      %v1035 = vunpack.c.l.b16 %v466
      %v1036 = vunpack.c.l.b16 %v467
      %v1037 = vunpack.c.l.b16 %v468
      %v1038 = vunpack.c.l.b16 %v469
      %v1039 = vunpack.c.l.b16 %v470
      %v1040 = vunpack.c.l.b16 %v471
      %v1041 = vunpack.c.l.b16 %v472
      %v1042 = vunpack.c.l.b16 %v473
      %v1043 = vunpack.c.l.b16 %v474
      %v1044 = vunpack.c.l.b16 %v475
      %v1045 = vunpack.c.l.b16 %v476
      %v1046 = vunpack.c.l.b16 %v477
      %v1047 = vunpack.c.l.b16 %v478
      %v1048 = vunpack.c.l.b16 %v479
      %v1049 = vunpack.c.l.b16 %v480
      %v1050 = vunpack.c.l.b16 %v481
      %v1051 = vunpack.c.l.b16 %v482
      %v1052 = vunpack.c.l.b16 %v483
      %v1053 = vunpack.c.l.b16 %v484
      %v1054 = vpack.c.b16 %v1007, %v1006
      %v1055 = vpack.c.b16 %v1009, %v1008
      %v1056 = vpack.c.b16 %v1011, %v1010
      %v1057 = vpack.c.b16 %v1013, %v1012
      %v1058 = vpack.c.b16 %v1015, %v1014
      %v1059 = vpack.c.b16 %v1017, %v1016
      %v1060 = vpack.c.b16 %v1019, %v1018
      %v1061 = vpack.c.b16 %v1021, %v1020
      %v1062 = vpack.c.b16 %v1023, %v1022
      %v1063 = vpack.c.b16 %v1025, %v1024
      %v1064 = vpack.c.b16 %v1027, %v1026
      %v1065 = vpack.c.b16 %v1029, %v1028
      %v1066 = vpack.c.b16 %v1031, %v1030
      %v1067 = vpack.c.b16 %v1033, %v1032
      %v1068 = vpack.c.b16 %v1035, %v1034
      %v1069 = vpack.c.b16 %v1037, %v1036
      %v1070 = vpack.c.b16 %v1039, %v1038
      %v1071 = vpack.c.b16 %v1041, %v1040
      %v1072 = vpack.c.b16 %v1043, %v1042
      %v1073 = vpack.c.b16 %v1045, %v1044
      %v1074 = vpack.c.b16 %v1047, %v1046
      %v1075 = vpack.c.b16 %v1049, %v1048
      %v1076 = vpack.c.b16 %v1051, %v1050
      %v1077 = vpack.c.b16 %v1053, %v1052
      %1102 = vmatpush.bf16.msra.mxu0 %v1061
      %1103 = vmatpush.bf16.msra.mxu0 %v1060
      %1104 = vmatpush.bf16.msra.mxu0 %v1059
      %1105 = vmatpush.bf16.msra.mxu0 %v1058
      %1106 = vmatpush.bf16.msra.mxu0 %v1057
      %1107 = vmatpush.bf16.msra.mxu0 %v1056
      %1108 = vmatpush.bf16.msra.mxu0 %v1055
      %1109 = vmatpush.bf16.msra.mxu0 %v1054
      %1110 = vmatmul.bf16.gmra.mxu0 %v934
      %v1111 = vpop.f32.mrf.mxu0
      %v1112 = vadd.f32 %v915, %v1111
      %v1113 = vpop.f32.mrf.mxu0
      %v1114 = vadd.f32 %v917, %v1113
      %1115 = vmatmul.bf16.gmra.mxu0 %v937
      %v1116 = vpop.f32.mrf.mxu0
      %v1117 = vadd.f32 %v920, %v1116
      %v1118 = vpop.f32.mrf.mxu0
      %v1119 = vadd.f32 %v922, %v1118
      %1120 = vmatmul.bf16.gmra.mxu0 %v940
      %v1121 = vpop.f32.mrf.mxu0
      %v1122 = vadd.f32 %v925, %v1121
      %v1123 = vpop.f32.mrf.mxu0
      %v1124 = vadd.f32 %v927, %v1123
      %1125 = vmatmul.bf16.gmra.mxu0 %v943
      %v1126 = vpop.f32.mrf.mxu0
      %v1127 = vadd.f32 %v930, %v1126
      %v1128 = vpop.f32.mrf.mxu0
      %v1129 = vadd.f32 %v932, %v1128
      %1130 = vdwg.mxu0
      %1131 = vmatpush.bf16.msra.mxu0 %v1069
      %1132 = vmatpush.bf16.msra.mxu0 %v1068
      %1133 = vmatpush.bf16.msra.mxu0 %v1067
      %1134 = vmatpush.bf16.msra.mxu0 %v1066
      %1135 = vmatpush.bf16.msra.mxu0 %v1065
      %1136 = vmatpush.bf16.msra.mxu0 %v1064
      %1137 = vmatpush.bf16.msra.mxu0 %v1063
      %1138 = vmatpush.bf16.msra.mxu0 %v1062
      %1139 = vmatmul.bf16.gmra.mxu0 %v935
      %v1140 = vpop.f32.mrf.mxu0
      %v1141 = vadd.f32 %v1112, %v1140
      %v1142 = vpop.f32.mrf.mxu0
      %v1143 = vadd.f32 %v1114, %v1142
      %1144 = vmatmul.bf16.gmra.mxu0 %v938
      %v1145 = vpop.f32.mrf.mxu0
      %v1146 = vadd.f32 %v1117, %v1145
      %v1147 = vpop.f32.mrf.mxu0
      %v1148 = vadd.f32 %v1119, %v1147
      %1149 = vmatmul.bf16.gmra.mxu0 %v941
      %v1150 = vpop.f32.mrf.mxu0
      %v1151 = vadd.f32 %v1122, %v1150
      %v1152 = vpop.f32.mrf.mxu0
      %v1153 = vadd.f32 %v1124, %v1152
      %1154 = vmatmul.bf16.gmra.mxu0 %v944
      %v1155 = vpop.f32.mrf.mxu0
      %v1156 = vadd.f32 %v1127, %v1155
      %v1157 = vpop.f32.mrf.mxu0
      %v1158 = vadd.f32 %v1129, %v1157
      %1159 = vdwg.mxu0
      %1160 = vmatpush.bf16.msra.mxu0 %v1077
      %1161 = vmatpush.bf16.msra.mxu0 %v1076
      %1162 = vmatpush.bf16.msra.mxu0 %v1075
      %1163 = vmatpush.bf16.msra.mxu0 %v1074
      %1164 = vmatpush.bf16.msra.mxu0 %v1073
      %1165 = vmatpush.bf16.msra.mxu0 %v1072
      %1166 = vmatpush.bf16.msra.mxu0 %v1071
      %1167 = vmatpush.bf16.msra.mxu0 %v1070
      %1168 = vmatmul.bf16.gmra.mxu0 %v936
      %v1169 = vpop.f32.mrf.mxu0
      %v1170 = vadd.f32 %v1141, %v1169
      %v1171 = vpop.f32.mrf.mxu0
      %v1172 = vadd.f32 %v1143, %v1171
      %1173 = vmatmul.bf16.gmra.mxu0 %v939
      %v1174 = vpop.f32.mrf.mxu0
      %v1175 = vadd.f32 %v1146, %v1174
      %v1176 = vpop.f32.mrf.mxu0
      %v1177 = vadd.f32 %v1148, %v1176
      %1178 = vmatmul.bf16.gmra.mxu0 %v942
      %v1179 = vpop.f32.mrf.mxu0
      %v1180 = vadd.f32 %v1151, %v1179
      %v1181 = vpop.f32.mrf.mxu0
      %v1182 = vadd.f32 %v1153, %v1181
      %1183 = vmatmul.bf16.gmra.mxu0 %v945
      %v1184 = vpop.f32.mrf.mxu0
      %v1185 = vadd.f32 %v1156, %v1184
      %v1186 = vpop.f32.mrf.mxu0
      %v1187 = vadd.f32 %v1158, %v1186
      %1188 = vdwg.mxu0
      %s1189 = scalar_lea.vmem %s274, 32
      %v1190 = vld [vmem:[%s1189] sm:$0xf]
      %v1191 = vld [vmem:[%s1189 + $0x20] sm:$0xf]
      %v1192 = vld [vmem:[%s1189 + $0x40] sm:$0xf]
      %v1193 = vld [vmem:[%s1189 + $0x60] sm:$0xf]
      %v1194 = vld [vmem:[%s1189 + $0x80] sm:$0xf]
      %v1195 = vld [vmem:[%s1189 + $0xa0] sm:$0xf]
      %v1196 = vld [vmem:[%s1189 + $0xc0] sm:$0xf]
      %v1197 = vld [vmem:[%s1189 + $0xe0] sm:$0xf]
      %v1198 = vld [vmem:[%s1189 + $0x4] sm:$0xf]
      %v1199 = vld [vmem:[%s1189 + $0x24] sm:$0xf]
      %v1200 = vld [vmem:[%s1189 + $0x44] sm:$0xf]
      %v1201 = vld [vmem:[%s1189 + $0x64] sm:$0xf]
      %v1202 = vld [vmem:[%s1189 + $0x84] sm:$0xf]
      %v1203 = vld [vmem:[%s1189 + $0xa4] sm:$0xf]
      %v1204 = vld [vmem:[%s1189 + $0xc4] sm:$0xf]
      %v1205 = vld [vmem:[%s1189 + $0xe4] sm:$0xf]
      %v1206 = vld [vmem:[%s1189 + $0x8] sm:$0x1]
      %v1207 = vld [vmem:[%s1189 + $0x28] sm:$0x1]
      %v1208 = vld [vmem:[%s1189 + $0x48] sm:$0x1]
      %v1209 = vld [vmem:[%s1189 + $0x68] sm:$0x1]
      %v1210 = vld [vmem:[%s1189 + $0x88] sm:$0x1]
      %v1211 = vld [vmem:[%s1189 + $0xa8] sm:$0x1]
      %v1212 = vld [vmem:[%s1189 + $0xc8] sm:$0x1]
      %v1213 = vld [vmem:[%s1189 + $0xe8] sm:$0x1]
      %v1230 = vunpack.c.l.b16 %v1190
      %v1231 = vunpack.c.l.b16 %v1206
      %v1232 = vunpack.c.l.b16 %v1191
      %v1233 = vunpack.c.l.b16 %v1207
      %v1234 = vunpack.c.l.b16 %v1192
      %v1235 = vunpack.c.l.b16 %v1208
      %v1236 = vunpack.c.l.b16 %v1193
      %v1237 = vunpack.c.l.b16 %v1209
      %v1238 = vunpack.c.l.b16 %v1194
      %v1239 = vunpack.c.l.b16 %v1210
      %v1240 = vunpack.c.l.b16 %v1195
      %v1241 = vunpack.c.l.b16 %v1211
      %v1242 = vunpack.c.l.b16 %v1196
      %v1243 = vunpack.c.l.b16 %v1212
      %v1244 = vunpack.c.l.b16 %v1197
      %v1245 = vunpack.c.l.b16 %v1213
      %v1246 = vpack.c.b16 %v1231, %v1230
      %v1247 = vpack.c.b16 %v1233, %v1232
      %v1248 = vpack.c.b16 %v1235, %v1234
      %v1249 = vpack.c.b16 %v1237, %v1236
      %v1250 = vpack.c.b16 %v1239, %v1238
      %v1251 = vpack.c.b16 %v1241, %v1240
      %v1252 = vpack.c.b16 %v1243, %v1242
      %v1253 = vpack.c.b16 %v1245, %v1244
      %v1255 = vshrl.u32 %v1246, 16
      %v1257 = vshll.u32 %v1246, 16
      %v1259 = vrot.slane %v1257, 1
      %v1260 = vor.u32 %v1255, %v1259
      %v1262 = vshrl.u32 %v1247, 16
      %v1264 = vshll.u32 %v1247, 16
      %v1266 = vrot.slane %v1264, 1
      %v1267 = vor.u32 %v1262, %v1266
      %v1269 = vshrl.u32 %v1248, 16
      %v1271 = vshll.u32 %v1248, 16
      %v1273 = vrot.slane %v1271, 1
      %v1274 = vor.u32 %v1269, %v1273
      %v1276 = vshrl.u32 %v1249, 16
      %v1278 = vshll.u32 %v1249, 16
      %v1280 = vrot.slane %v1278, 1
      %v1281 = vor.u32 %v1276, %v1280
      %v1283 = vshrl.u32 %v1250, 16
      %v1285 = vshll.u32 %v1250, 16
      %v1287 = vrot.slane %v1285, 1
      %v1288 = vor.u32 %v1283, %v1287
      %v1290 = vshrl.u32 %v1251, 16
      %v1292 = vshll.u32 %v1251, 16
      %v1294 = vrot.slane %v1292, 1
      %v1295 = vor.u32 %v1290, %v1294
      %v1297 = vshrl.u32 %v1252, 16
      %v1299 = vshll.u32 %v1252, 16
      %v1301 = vrot.slane %v1299, 1
      %v1302 = vor.u32 %v1297, %v1301
      %v1304 = vshrl.u32 %v1253, 16
      %v1306 = vshll.u32 %v1253, 16
      %v1308 = vrot.slane %v1306, 1
      %v1309 = vor.u32 %v1304, %v1308
      %v1318 = vunpack.c.l.b16 %v1198
      %v1319 = vunpack.c.l.b16 %v1260
      %v1320 = vunpack.c.l.b16 %v1199
      %v1321 = vunpack.c.l.b16 %v1267
      %v1322 = vunpack.c.l.b16 %v1200
      %v1323 = vunpack.c.l.b16 %v1274
      %v1324 = vunpack.c.l.b16 %v1201
      %v1325 = vunpack.c.l.b16 %v1281
      %v1326 = vunpack.c.l.b16 %v1202
      %v1327 = vunpack.c.l.b16 %v1288
      %v1328 = vunpack.c.l.b16 %v1203
      %v1329 = vunpack.c.l.b16 %v1295
      %v1330 = vunpack.c.l.b16 %v1204
      %v1331 = vunpack.c.l.b16 %v1302
      %v1332 = vunpack.c.l.b16 %v1205
      %v1333 = vunpack.c.l.b16 %v1309
      %s1334 = scalar_lea.vmem %s1, 384
      %v1335 = vld [vmem:[%s1334] sm:$0xf]
      %v1336 = vld [vmem:[%s1334 + $0x4] sm:$0xf]
      %v1337 = vld [vmem:[%s1334 + $0x8] sm:$0xf]
      %v1338 = vld [vmem:[%s1334 + $0xc] sm:$0xf]
      %v1339 = vld [vmem:[%s1334 + $0x10] sm:$0xf]
      %v1340 = vld [vmem:[%s1334 + $0x14] sm:$0xf]
      %v1341 = vld [vmem:[%s1334 + $0x18] sm:$0xf]
      %v1342 = vld [vmem:[%s1334 + $0x1c] sm:$0xf]
      %v1343 = vld [vmem:[%s1334 + $0x20] sm:$0xf]
      %v1344 = vld [vmem:[%s1334 + $0x24] sm:$0xf]
      %v1345 = vld [vmem:[%s1334 + $0x28] sm:$0xf]
      %v1346 = vld [vmem:[%s1334 + $0x2c] sm:$0xf]
      %v1347 = vld [vmem:[%s1334 + $0x30] sm:$0xf]
      %v1348 = vld [vmem:[%s1334 + $0x34] sm:$0xf]
      %v1349 = vld [vmem:[%s1334 + $0x38] sm:$0xf]
      %v1350 = vld [vmem:[%s1334 + $0x3c] sm:$0xf]
      %v1351 = vld [vmem:[%s1334 + $0x40] sm:$0xf]
      %v1352 = vld [vmem:[%s1334 + $0x44] sm:$0xf]
      %v1353 = vld [vmem:[%s1334 + $0x48] sm:$0xf]
      %v1354 = vld [vmem:[%s1334 + $0x4c] sm:$0xf]
      %v1355 = vld [vmem:[%s1334 + $0x50] sm:$0xf]
      %v1356 = vld [vmem:[%s1334 + $0x54] sm:$0xf]
      %v1357 = vld [vmem:[%s1334 + $0x58] sm:$0xf]
      %v1358 = vld [vmem:[%s1334 + $0x5c] sm:$0xf]
      %v1359 = vld [vmem:[%s1334 + $0x60] sm:$0xf]
      %v1360 = vld [vmem:[%s1334 + $0x64] sm:$0xf]
      %v1361 = vld [vmem:[%s1334 + $0x68] sm:$0xf]
      %v1362 = vld [vmem:[%s1334 + $0x6c] sm:$0xf]
      %v1363 = vld [vmem:[%s1334 + $0x70] sm:$0xf]
      %v1364 = vld [vmem:[%s1334 + $0x74] sm:$0xf]
      %v1365 = vld [vmem:[%s1334 + $0x78] sm:$0xf]
      %v1366 = vld [vmem:[%s1334 + $0x7c] sm:$0xf]
      %v1367 = vld [vmem:[%s1334 + $0x80] sm:$0xf]
      %v1368 = vld [vmem:[%s1334 + $0x84] sm:$0xf]
      %v1369 = vld [vmem:[%s1334 + $0x88] sm:$0xf]
      %v1370 = vld [vmem:[%s1334 + $0x8c] sm:$0xf]
      %v1371 = vld [vmem:[%s1334 + $0x90] sm:$0xf]
      %v1372 = vld [vmem:[%s1334 + $0x94] sm:$0xf]
      %v1373 = vld [vmem:[%s1334 + $0x98] sm:$0xf]
      %v1374 = vld [vmem:[%s1334 + $0x9c] sm:$0xf]
      %v1375 = vld [vmem:[%s1334 + $0xa0] sm:$0xf]
      %v1376 = vld [vmem:[%s1334 + $0xa4] sm:$0xf]
      %v1377 = vld [vmem:[%s1334 + $0xa8] sm:$0xf]
      %v1378 = vld [vmem:[%s1334 + $0xac] sm:$0xf]
      %v1379 = vld [vmem:[%s1334 + $0xb0] sm:$0xf]
      %v1380 = vld [vmem:[%s1334 + $0xb4] sm:$0xf]
      %v1381 = vld [vmem:[%s1334 + $0xb8] sm:$0xf]
      %v1382 = vld [vmem:[%s1334 + $0xbc] sm:$0xf]
      %v1383 = vpack.c.b16 %v1232, %v1230
      %v1384 = vpack.c.b16 %v1320, %v1318
      %v1385 = vpack.c.b16 %v1321, %v1319
      %v1386 = vpack.c.b16 %v1236, %v1234
      %v1387 = vpack.c.b16 %v1324, %v1322
      %v1388 = vpack.c.b16 %v1325, %v1323
      %v1389 = vpack.c.b16 %v1240, %v1238
      %v1390 = vpack.c.b16 %v1328, %v1326
      %v1391 = vpack.c.b16 %v1329, %v1327
      %v1392 = vpack.c.b16 %v1244, %v1242
      %v1393 = vpack.c.b16 %v1332, %v1330
      %v1394 = vpack.c.b16 %v1333, %v1331
      %v1455 = vunpack.c.l.b16 %v1335
      %v1456 = vunpack.c.l.b16 %v1336
      %v1457 = vunpack.c.l.b16 %v1337
      %v1458 = vunpack.c.l.b16 %v1338
      %v1459 = vunpack.c.l.b16 %v1339
      %v1460 = vunpack.c.l.b16 %v1340
      %v1461 = vunpack.c.l.b16 %v1341
      %v1462 = vunpack.c.l.b16 %v1342
      %v1463 = vunpack.c.l.b16 %v1343
      %v1464 = vunpack.c.l.b16 %v1344
      %v1465 = vunpack.c.l.b16 %v1345
      %v1466 = vunpack.c.l.b16 %v1346
      %v1467 = vunpack.c.l.b16 %v1347
      %v1468 = vunpack.c.l.b16 %v1348
      %v1469 = vunpack.c.l.b16 %v1349
      %v1470 = vunpack.c.l.b16 %v1350
      %v1471 = vunpack.c.l.b16 %v1351
      %v1472 = vunpack.c.l.b16 %v1352
      %v1473 = vunpack.c.l.b16 %v1353
      %v1474 = vunpack.c.l.b16 %v1354
      %v1475 = vunpack.c.l.b16 %v1355
      %v1476 = vunpack.c.l.b16 %v1356
      %v1477 = vunpack.c.l.b16 %v1357
      %v1478 = vunpack.c.l.b16 %v1358
      %v1479 = vunpack.c.l.b16 %v1359
      %v1480 = vunpack.c.l.b16 %v1360
      %v1481 = vunpack.c.l.b16 %v1361
      %v1482 = vunpack.c.l.b16 %v1362
      %v1483 = vunpack.c.l.b16 %v1363
      %v1484 = vunpack.c.l.b16 %v1364
      %v1485 = vunpack.c.l.b16 %v1365
      %v1486 = vunpack.c.l.b16 %v1366
      %v1487 = vunpack.c.l.b16 %v1367
      %v1488 = vunpack.c.l.b16 %v1368
      %v1489 = vunpack.c.l.b16 %v1369
      %v1490 = vunpack.c.l.b16 %v1370
      %v1491 = vunpack.c.l.b16 %v1371
      %v1492 = vunpack.c.l.b16 %v1372
      %v1493 = vunpack.c.l.b16 %v1373
      %v1494 = vunpack.c.l.b16 %v1374
      %v1495 = vunpack.c.l.b16 %v1375
      %v1496 = vunpack.c.l.b16 %v1376
      %v1497 = vunpack.c.l.b16 %v1377
      %v1498 = vunpack.c.l.b16 %v1378
      %v1499 = vunpack.c.l.b16 %v1379
      %v1500 = vunpack.c.l.b16 %v1380
      %v1501 = vunpack.c.l.b16 %v1381
      %v1502 = vunpack.c.l.b16 %v1382
      %v1503 = vpack.c.b16 %v1456, %v1455
      %v1504 = vpack.c.b16 %v1458, %v1457
      %v1505 = vpack.c.b16 %v1460, %v1459
      %v1506 = vpack.c.b16 %v1462, %v1461
      %v1507 = vpack.c.b16 %v1464, %v1463
      %v1508 = vpack.c.b16 %v1466, %v1465
      %v1509 = vpack.c.b16 %v1468, %v1467
      %v1510 = vpack.c.b16 %v1470, %v1469
      %v1511 = vpack.c.b16 %v1472, %v1471
      %v1512 = vpack.c.b16 %v1474, %v1473
      %v1513 = vpack.c.b16 %v1476, %v1475
      %v1514 = vpack.c.b16 %v1478, %v1477
      %v1515 = vpack.c.b16 %v1480, %v1479
      %v1516 = vpack.c.b16 %v1482, %v1481
      %v1517 = vpack.c.b16 %v1484, %v1483
      %v1518 = vpack.c.b16 %v1486, %v1485
      %v1519 = vpack.c.b16 %v1488, %v1487
      %v1520 = vpack.c.b16 %v1490, %v1489
      %v1521 = vpack.c.b16 %v1492, %v1491
      %v1522 = vpack.c.b16 %v1494, %v1493
      %v1523 = vpack.c.b16 %v1496, %v1495
      %v1524 = vpack.c.b16 %v1498, %v1497
      %v1525 = vpack.c.b16 %v1500, %v1499
      %v1526 = vpack.c.b16 %v1502, %v1501
      %1551 = vmatpush.bf16.msra.mxu0 %v1510
      %1552 = vmatpush.bf16.msra.mxu0 %v1509
      %1553 = vmatpush.bf16.msra.mxu0 %v1508
      %1554 = vmatpush.bf16.msra.mxu0 %v1507
      %1555 = vmatpush.bf16.msra.mxu0 %v1506
      %1556 = vmatpush.bf16.msra.mxu0 %v1505
      %1557 = vmatpush.bf16.msra.mxu0 %v1504
      %1558 = vmatpush.bf16.msra.mxu0 %v1503
      %1559 = vmatmul.bf16.gmra.mxu0 %v1383
      %v1560 = vpop.f32.mrf.mxu0
      %v1561 = vadd.f32 0.0, %v1560
      %v1562 = vpop.f32.mrf.mxu0
      %v1563 = vadd.f32 0.0, %v1562
      %1564 = vmatmul.bf16.gmra.mxu0 %v1386
      %v1565 = vpop.f32.mrf.mxu0
      %v1566 = vadd.f32 0.0, %v1565
      %v1567 = vpop.f32.mrf.mxu0
      %v1568 = vadd.f32 0.0, %v1567
      %1569 = vmatmul.bf16.gmra.mxu0 %v1389
      %v1570 = vpop.f32.mrf.mxu0
      %v1571 = vadd.f32 0.0, %v1570
      %v1572 = vpop.f32.mrf.mxu0
      %v1573 = vadd.f32 0.0, %v1572
      %1574 = vmatmul.bf16.gmra.mxu0 %v1392
      %v1575 = vpop.f32.mrf.mxu0
      %v1576 = vadd.f32 0.0, %v1575
      %v1577 = vpop.f32.mrf.mxu0
      %v1578 = vadd.f32 0.0, %v1577
      %1579 = vdwg.mxu0
      %1580 = vmatpush.bf16.msra.mxu0 %v1518
      %1581 = vmatpush.bf16.msra.mxu0 %v1517
      %1582 = vmatpush.bf16.msra.mxu0 %v1516
      %1583 = vmatpush.bf16.msra.mxu0 %v1515
      %1584 = vmatpush.bf16.msra.mxu0 %v1514
      %1585 = vmatpush.bf16.msra.mxu0 %v1513
      %1586 = vmatpush.bf16.msra.mxu0 %v1512
      %1587 = vmatpush.bf16.msra.mxu0 %v1511
      %1588 = vmatmul.bf16.gmra.mxu0 %v1384
      %v1589 = vpop.f32.mrf.mxu0
      %v1590 = vadd.f32 %v1561, %v1589
      %v1591 = vpop.f32.mrf.mxu0
      %v1592 = vadd.f32 %v1563, %v1591
      %1593 = vmatmul.bf16.gmra.mxu0 %v1387
      %v1594 = vpop.f32.mrf.mxu0
      %v1595 = vadd.f32 %v1566, %v1594
      %v1596 = vpop.f32.mrf.mxu0
      %v1597 = vadd.f32 %v1568, %v1596
      %1598 = vmatmul.bf16.gmra.mxu0 %v1390
      %v1599 = vpop.f32.mrf.mxu0
      %v1600 = vadd.f32 %v1571, %v1599
      %v1601 = vpop.f32.mrf.mxu0
      %v1602 = vadd.f32 %v1573, %v1601
      %1603 = vmatmul.bf16.gmra.mxu0 %v1393
      %v1604 = vpop.f32.mrf.mxu0
      %v1605 = vadd.f32 %v1576, %v1604
      %v1606 = vpop.f32.mrf.mxu0
      %v1607 = vadd.f32 %v1578, %v1606
      %1608 = vdwg.mxu0
      %1609 = vmatpush.bf16.msra.mxu0 %v1526
      %1610 = vmatpush.bf16.msra.mxu0 %v1525
      %1611 = vmatpush.bf16.msra.mxu0 %v1524
      %1612 = vmatpush.bf16.msra.mxu0 %v1523
      %1613 = vmatpush.bf16.msra.mxu0 %v1522
      %1614 = vmatpush.bf16.msra.mxu0 %v1521
      %1615 = vmatpush.bf16.msra.mxu0 %v1520
      %1616 = vmatpush.bf16.msra.mxu0 %v1519
      %1617 = vmatmul.bf16.gmra.mxu0 %v1385
      %v1618 = vpop.f32.mrf.mxu0
      %v1619 = vadd.f32 %v1590, %v1618
      %v1620 = vpop.f32.mrf.mxu0
      %v1621 = vadd.f32 %v1592, %v1620
      %1622 = vmatmul.bf16.gmra.mxu0 %v1388
      %v1623 = vpop.f32.mrf.mxu0
      %v1624 = vadd.f32 %v1595, %v1623
      %v1625 = vpop.f32.mrf.mxu0
      %v1626 = vadd.f32 %v1597, %v1625
      %1627 = vmatmul.bf16.gmra.mxu0 %v1391
      %v1628 = vpop.f32.mrf.mxu0
      %v1629 = vadd.f32 %v1600, %v1628
      %v1630 = vpop.f32.mrf.mxu0
      %v1631 = vadd.f32 %v1602, %v1630
      %1632 = vmatmul.bf16.gmra.mxu0 %v1394
      %v1633 = vpop.f32.mrf.mxu0
      %v1634 = vadd.f32 %v1605, %v1633
      %v1635 = vpop.f32.mrf.mxu0
      %v1636 = vadd.f32 %v1607, %v1635
      %1637 = vdwg.mxu0
      %v1638 = vadd.f32 %v1170, %v1619
      %v1639 = vadd.f32 %v1172, %v1621
      %v1640 = vadd.f32 %v1175, %v1624
      %v1641 = vadd.f32 %v1177, %v1626
      %v1642 = vadd.f32 %v1180, %v1629
      %v1643 = vadd.f32 %v1182, %v1631
      %v1644 = vadd.f32 %v1185, %v1634
      %v1645 = vadd.f32 %v1187, %v1636
      %v1646 = vpack.c.bf16 %v1638, %v1638
      %v1647 = vpack.c.bf16 %v1639, %v1639
      %v1648 = vpack.c.bf16 %v1640, %v1640
      %v1649 = vpack.c.bf16 %v1641, %v1641
      %v1650 = vpack.c.bf16 %v1642, %v1642
      %v1651 = vpack.c.bf16 %v1643, %v1643
      %v1652 = vpack.c.bf16 %v1644, %v1644
      %v1653 = vpack.c.bf16 %v1645, %v1645
      %1654 = vst [vmem:[%s284] sm:$0xf] %v1646
      %1655 = vst [vmem:[%s284 + $0x4] sm:$0xf] %v1647
      %1656 = vst [vmem:[%s284 + $0x8] sm:$0xf] %v1648
      %1657 = vst [vmem:[%s284 + $0xc] sm:$0xf] %v1649
      %1658 = vst [vmem:[%s284 + $0x10] sm:$0xf] %v1650
      %1659 = vst [vmem:[%s284 + $0x14] sm:$0xf] %v1651
      %1660 = vst [vmem:[%s284 + $0x18] sm:$0xf] %v1652
      %1661 = vst [vmem:[%s284 + $0x1c] sm:$0xf] %v1653
      %v1662 = vadd.f32 %v1638, %v1639
      %v1663 = vadd.f32 %v1662, %v1640
      %v1664 = vadd.f32 %v1663, %v1641
      %v1665 = vadd.f32 %v1664, %v1642
      %v1666 = vadd.f32 %v1665, %v1643
      %v1667 = vadd.f32 %v1666, %v1644
      %v1668 = vadd.f32 %v1667, %v1645
      %v1669 = vrot.slane %v1668, 4
      %v1670 = vadd.f32 %v1668, %v1669
      %v1671 = vrot.slane %v1670, 2
      %v1672 = vadd.f32 %v1670, %v1671
      %v1673 = vrot.slane %v1672, 1
      %v1674 = vadd.f32 %v1672, %v1673
      %v1675 = vmul.f32 %v1674, 0.015625
      %v1676 = vsub.f32 %v1638, %v1675
      %v1677 = vsub.f32 %v1639, %v1675
      %v1678 = vsub.f32 %v1640, %v1675
      %v1679 = vsub.f32 %v1641, %v1675
      %v1680 = vsub.f32 %v1642, %v1675
      %v1681 = vsub.f32 %v1643, %v1675
      %v1682 = vsub.f32 %v1644, %v1675
      %v1683 = vsub.f32 %v1645, %v1675
      %v1684 = vmul.f32 %v1676, %v1676
      %v1685 = vmul.f32 %v1677, %v1677
      %v1686 = vmul.f32 %v1678, %v1678
      %v1687 = vmul.f32 %v1679, %v1679
      %v1688 = vmul.f32 %v1680, %v1680
      %v1689 = vmul.f32 %v1681, %v1681
      %v1690 = vmul.f32 %v1682, %v1682
      %v1691 = vmul.f32 %v1683, %v1683
      %v1692 = vadd.f32 %v1684, %v1685
      %v1693 = vadd.f32 %v1692, %v1686
      %v1694 = vadd.f32 %v1693, %v1687
      %v1695 = vadd.f32 %v1694, %v1688
      %v1696 = vadd.f32 %v1695, %v1689
      %v1697 = vadd.f32 %v1696, %v1690
      %v1698 = vadd.f32 %v1697, %v1691
      %v1699 = vrot.slane %v1698, 4
      %v1700 = vadd.f32 %v1698, %v1699
      %v1701 = vrot.slane %v1700, 2
      %v1702 = vadd.f32 %v1700, %v1701
      %v1703 = vrot.slane %v1702, 1
      %v1704 = vadd.f32 %v1702, %v1703
      %vm1705 = vcmask 1040384
      %v1706 = vsel %vm1705, %v1674, %v1704
      %1707 = vst [vmem:[%s288] sm:$0x3] %v1706
      %v1708 = vld [vmem:[%s279] sm:$0xf]
      %v1709 = vld [vmem:[%s279 + $0x4] sm:$0xf]
      %v1710 = vld [vmem:[%s279 + $0x8] sm:$0xf]
      %v1711 = vld [vmem:[%s279 + $0xc] sm:$0xf]
      %v1712 = vld [vmem:[%s279 + $0x10] sm:$0xf]
      %v1713 = vld [vmem:[%s279 + $0x14] sm:$0xf]
      %v1714 = vld [vmem:[%s279 + $0x18] sm:$0xf]
      %v1715 = vld [vmem:[%s279 + $0x1c] sm:$0xf]
      %v1716 = vld [vmem:[%s3] sm:$0xf]
      %v1717 = vld [vmem:[%s3 + $0x4] sm:$0xf]
      %v1718 = vld [vmem:[%s3 + $0x8] sm:$0xf]
      %v1719 = vld [vmem:[%s3 + $0xc] sm:$0xf]
      %v1720 = vld [vmem:[%s3 + $0x10] sm:$0xf]
      %v1721 = vld [vmem:[%s3 + $0x14] sm:$0xf]
      %v1722 = vld [vmem:[%s3 + $0x18] sm:$0xf]
      %v1723 = vld [vmem:[%s3 + $0x1c] sm:$0xf]
      %v1724 = vld [vmem:[%s3 + $0x20] sm:$0xf]
      %v1725 = vld [vmem:[%s3 + $0x24] sm:$0xf]
      %v1726 = vld [vmem:[%s3 + $0x28] sm:$0xf]
      %v1727 = vld [vmem:[%s3 + $0x2c] sm:$0xf]
      %v1728 = vld [vmem:[%s3 + $0x30] sm:$0xf]
      %v1729 = vld [vmem:[%s3 + $0x34] sm:$0xf]
      %v1730 = vld [vmem:[%s3 + $0x38] sm:$0xf]
      %v1731 = vld [vmem:[%s3 + $0x3c] sm:$0xf]
      %v1740 = vunpack.c.l.b16 %v1708
      %v1741 = vunpack.c.l.b16 %v1709
      %v1742 = vunpack.c.l.b16 %v1710
      %v1743 = vunpack.c.l.b16 %v1711
      %v1744 = vunpack.c.l.b16 %v1712
      %v1745 = vunpack.c.l.b16 %v1713
      %v1746 = vunpack.c.l.b16 %v1714
      %v1747 = vunpack.c.l.b16 %v1715
      %v1748 = vpack.c.b16 %v1741, %v1740
      %v1749 = vpack.c.b16 %v1743, %v1742
      %v1750 = vpack.c.b16 %v1745, %v1744
      %v1751 = vpack.c.b16 %v1747, %v1746
      %v1772 = vunpack.c.l.b16 %v1716
      %v1773 = vunpack.c.l.b16 %v1717
      %v1774 = vunpack.c.l.b16 %v1718
      %v1775 = vunpack.c.l.b16 %v1719
      %v1776 = vunpack.c.l.b16 %v1720
      %v1777 = vunpack.c.l.b16 %v1721
      %v1778 = vunpack.c.l.b16 %v1722
      %v1779 = vunpack.c.l.b16 %v1723
      %v1780 = vunpack.c.l.b16 %v1724
      %v1781 = vunpack.c.l.b16 %v1725
      %v1782 = vunpack.c.l.b16 %v1726
      %v1783 = vunpack.c.l.b16 %v1727
      %v1784 = vunpack.c.l.b16 %v1728
      %v1785 = vunpack.c.l.b16 %v1729
      %v1786 = vunpack.c.l.b16 %v1730
      %v1787 = vunpack.c.l.b16 %v1731
      %v1788 = vpack.c.b16 %v1773, %v1772
      %v1789 = vpack.c.b16 %v1775, %v1774
      %v1790 = vpack.c.b16 %v1777, %v1776
      %v1791 = vpack.c.b16 %v1779, %v1778
      %v1792 = vpack.c.b16 %v1781, %v1780
      %v1793 = vpack.c.b16 %v1783, %v1782
      %v1794 = vpack.c.b16 %v1785, %v1784
      %v1795 = vpack.c.b16 %v1787, %v1786
      %1804 = vmatpush.bf16.msra.mxu0 %v1795
      %1805 = vmatpush.bf16.msra.mxu0 %v1794
      %1806 = vmatpush.bf16.msra.mxu0 %v1793
      %1807 = vmatpush.bf16.msra.mxu0 %v1792
      %1808 = vmatpush.bf16.msra.mxu0 %v1791
      %1809 = vmatpush.bf16.msra.mxu0 %v1790
      %1810 = vmatpush.bf16.msra.mxu0 %v1789
      %1811 = vmatpush.bf16.msra.mxu0 %v1788
      %1812 = vmatmul.bf16.gmra.mxu0 %v1748
      %v1813 = vpop.f32.mrf.mxu0
      %v1814 = vadd.f32 0.0, %v1813
      %v1815 = vpop.f32.mrf.mxu0
      %v1816 = vadd.f32 0.0, %v1815
      %1817 = vmatmul.bf16.gmra.mxu0 %v1749
      %v1818 = vpop.f32.mrf.mxu0
      %v1819 = vadd.f32 0.0, %v1818
      %v1820 = vpop.f32.mrf.mxu0
      %v1821 = vadd.f32 0.0, %v1820
      %1822 = vmatmul.bf16.gmra.mxu0 %v1750
      %v1823 = vpop.f32.mrf.mxu0
      %v1824 = vadd.f32 0.0, %v1823
      %v1825 = vpop.f32.mrf.mxu0
      %v1826 = vadd.f32 0.0, %v1825
      %1827 = vmatmul.bf16.gmra.mxu0 %v1751
      %v1828 = vpop.f32.mrf.mxu0
      %v1829 = vadd.f32 0.0, %v1828
      %v1830 = vpop.f32.mrf.mxu0
      %v1831 = vadd.f32 0.0, %v1830
      %1832 = vdwg.mxu0
      %v1833 = vadd.f32 %v1814, %v1816
      %v1834 = vadd.f32 %v1833, %v1819
      %v1835 = vadd.f32 %v1834, %v1821
      %v1836 = vadd.f32 %v1835, %v1824
      %v1837 = vadd.f32 %v1836, %v1826
      %v1838 = vadd.f32 %v1837, %v1829
      %v1839 = vadd.f32 %v1838, %v1831
      %v1840 = vrot.slane %v1839, 4
      %v1841 = vadd.f32 %v1839, %v1840
      %v1842 = vrot.slane %v1841, 2
      %v1843 = vadd.f32 %v1841, %v1842
      %v1844 = vrot.slane %v1843, 1
      %v1845 = vadd.f32 %v1843, %v1844
      %v1846 = vmul.f32 %v1845, 0.015625
      %v1847 = vsub.f32 %v1814, %v1846
      %v1848 = vsub.f32 %v1816, %v1846
      %v1849 = vsub.f32 %v1819, %v1846
      %v1850 = vsub.f32 %v1821, %v1846
      %v1851 = vsub.f32 %v1824, %v1846
      %v1852 = vsub.f32 %v1826, %v1846
      %v1853 = vsub.f32 %v1829, %v1846
      %v1854 = vsub.f32 %v1831, %v1846
      %v1855 = vmul.f32 %v1847, %v1847
      %v1856 = vmul.f32 %v1848, %v1848
      %v1857 = vmul.f32 %v1849, %v1849
      %v1858 = vmul.f32 %v1850, %v1850
      %v1859 = vmul.f32 %v1851, %v1851
      %v1860 = vmul.f32 %v1852, %v1852
      %v1861 = vmul.f32 %v1853, %v1853
      %v1862 = vmul.f32 %v1854, %v1854
      %v1863 = vadd.f32 %v1855, %v1856
      %v1864 = vadd.f32 %v1863, %v1857
      %v1865 = vadd.f32 %v1864, %v1858
      %v1866 = vadd.f32 %v1865, %v1859
      %v1867 = vadd.f32 %v1866, %v1860
      %v1868 = vadd.f32 %v1867, %v1861
      %v1869 = vadd.f32 %v1868, %v1862
      %v1870 = vrot.slane %v1869, 4
      %v1871 = vadd.f32 %v1869, %v1870
      %v1872 = vrot.slane %v1871, 2
      %v1873 = vadd.f32 %v1871, %v1872
      %v1874 = vrot.slane %v1873, 1
      %v1875 = vadd.f32 %v1873, %v1874
      %v1876 = vsel %vm1705, %v1845, %v1875
      %1877 = vst [vmem:[%s292] sm:$0x3] %v1876
      %p1878 = scmp.lt.s32.totalorder %s18, 1
      %s1879 = scalar_select %p1878, %s18, 1
      %s1880 = smul.addr %s1879, 8
      %s1881 = smul.addr %s1880, 4
      %s1882 = scalar_lea.vmem %s4, %s1881
      %p1883 = scmp.lt.s32.totalorder %s18, 1
      %s1884 = scalar_select %p1883, %s18, 1
      %s1885 = smul.addr %s1884, 2
      %s1886 = scalar_lea.vmem %s5, %s1885
      %p1887 = scmp.lt.s32.totalorder %s18, 1
      %s1888 = scalar_select %p1887, %s18, 1
      %s1889 = smul.addr %s1888, 2
      %s1890 = scalar_lea.vmem %s6, %s1889
      // Predicated region
      $region37: #{basic_block_forward.3} parent=35 // pred_check
        %p1891 = pneg %p130
      $region38: #{basic_block_forward.3} parent=35 // pred_check_branch
        %1893 = sbr.rel (%p1891) target = $region40
      $region39: #{basic_block_forward.3} parent=35 // pred_region
        _
      $region40: #{basic_block_forward.3} parent=35 // pred_fallthru
        _
      // Predicated region
      $region41: #{basic_block_forward.3} parent=35 // pred_check
        %p1894 = pneg %p156
      $region42: #{basic_block_forward.3} parent=35 // pred_check_branch
        %1896 = sbr.rel (%p1894) target = $region44
      $region43: #{basic_block_forward.3} parent=35 // pred_region
        _
      $region44: #{basic_block_forward.3} parent=35 // pred_fallthru
        _
      // Predicated region
      $region45: #{basic_block_forward.3} parent=35 // pred_check
        %p1897 = pneg %p182
      $region46: #{basic_block_forward.3} parent=35 // pred_check_branch
        %1899 = sbr.rel (%p1897) target = $region48
      $region47: #{basic_block_forward.3} parent=35 // pred_region
        _
      $region48: #{basic_block_forward.3} parent=35 // pred_fallthru
        _
    $region36: #{basic_block_forward.3} parent=5 // pred_fallthru
      _
    %p1900 = scmp.le.s32.totalorder 2, %s13
    // Predicated region
    $region49: #{basic_block_forward.3} parent=5 // pred_check
      %p1901 = pneg %p1900
    $region50: #{basic_block_forward.3} parent=5 // pred_check_branch
      %1903 = sbr.rel (%p1901) target = $region52
    $region51: #{basic_block_forward.3} parent=5 // pred_region
      %s1904 = ssub.s32 %s13, 2
      // Predicated region
      $region53: #{basic_block_forward.3} parent=51 // pred_check
        %p1905 = pneg %p136
      $region54: #{basic_block_forward.3} parent=51 // pred_check_branch
        %1907 = sbr.rel (%p1905) target = $region56
      $region55: #{basic_block_forward.3} parent=51 // pred_region
        %p1908 = scmp.lt.s32.totalorder %s19, 1
        %s1909 = scalar_select %p1908, %s19, 1
        %s1910 = smul.addr %s1909, 8
        %s1911 = smul.addr %s1910, 4
        %s1912 = scalar_lea.vmem %s4, %s1911
      $region56: #{basic_block_forward.3} parent=51 // pred_fallthru
        _
      // Predicated region
      $region57: #{basic_block_forward.3} parent=51 // pred_check
        %p1913 = pneg %p162
      $region58: #{basic_block_forward.3} parent=51 // pred_check_branch
        %1915 = sbr.rel (%p1913) target = $region60
      $region59: #{basic_block_forward.3} parent=51 // pred_region
        %p1916 = scmp.lt.s32.totalorder %s19, 1
        %s1917 = scalar_select %p1916, %s19, 1
        %s1918 = smul.addr %s1917, 2
        %s1919 = scalar_lea.vmem %s5, %s1918
      $region60: #{basic_block_forward.3} parent=51 // pred_fallthru
        _
      // Predicated region
      $region61: #{basic_block_forward.3} parent=51 // pred_check
        %p1920 = pneg %p188
      $region62: #{basic_block_forward.3} parent=51 // pred_check_branch
        %1922 = sbr.rel (%p1920) target = $region64
      $region63: #{basic_block_forward.3} parent=51 // pred_region
        %p1923 = scmp.lt.s32.totalorder %s19, 1
        %s1924 = scalar_select %p1923, %s19, 1
        %s1925 = smul.addr %s1924, 2
        %s1926 = scalar_lea.vmem %s6, %s1925
      $region64: #{basic_block_forward.3} parent=51 // pred_fallthru
        _
    $region52: #{basic_block_forward.3} parent=5 // pred_fallthru
      _
  $region6: #{basic_block_forward.3} parent=0 // loop_footer
    %s17 = sadd.s32 1, %s13
  $region7: #{basic_block_forward.3} parent=0 // loop_footer_branch
    %12 = sbr.rel target = $region3
  $region8: #{basic_block_forward.3} parent=0 // loop_exit
    _

// kernel: basic_block_forward.4
$region0: #{basic_block_forward.4}
  #allocation0 [shape = 'u32[]', space=smem, size = 0x4, offset = 0x4, fixed_abs, tag = 'smem constant byte address 0x4 - core index']
  #allocation1 [shape = 'u32[72,128]{1,0:T(1,128)}', space=vmem, size = 0x9000, scoped, tag = 'internal scratch']
  #allocation2 [shape = 'bf16[10,10,128]{2,1,0:T(8,128)(2,1)}', space=vmem, size = 0xa000, scoped, tag = 'scratch operand']
  %s0 = inlined_call_operand.vmem [shape: bf16[2,8,8,128], index: 0, kind: input, shape index: {}]
  %s1 = inlined_call_operand.vmem [shape: f32[1,128], index: 1, kind: input, shape index: {}]
  %s2 = inlined_call_operand.vmem [shape: f32[1,128], index: 2, kind: input, shape index: {}]
  %s3 = inlined_call_operand.vmem [shape: bf16[3,384,128], index: 3, kind: input, shape index: {}]
  %s4 = inlined_call_operand.vmem [shape: bf16[2,8,8,128], index: 4, kind: output, shape index: {0}]
  %s5 = inlined_call_operand.vmem [shape: f32[2,2,128], index: 5, kind: output, shape index: {1}]
  %6 = xla_tuple %s4, %s5
  %s7 = sld [smem:[#allocation0]]
  $region57: #{basic_block_forward.4} parent=0
    _
  %s9 = ssub.s32 1, %s7
  %s10 = scalar_select 0, %s9, %s7
  loop: start=0, step=1, limit=4
  $region2: #{basic_block_forward.4} parent=0 // loop_pre_header
    _
  $region3: #{basic_block_forward.4} parent=0 // loop_header
    %s12 = sphi 0, %s16
    %p13 = scmp.ge.s32.totalorder %s12, 4
    %s22 = sphi 0, %s24
    %s25 = sphi 0, %s22
    %s26 = sphi 0, %s25
    %s42 = sphi 0, %s26
    %s46 = sphi 0, %s46
    %s48 = sphi 0, %s46
    %s49 = sphi 0, %s48
    %s63 = sphi 0, %s49
    %s67 = sphi 0, %s67
    %s69 = sphi 0, %s67
    %s70 = sphi 0, %s69
    %s84 = sphi 0, %s70
    %s88 = sphi 0, %s88
    %s90 = sphi 0, %s88
    %s91 = sphi 0, %s90
    %s105 = sphi 0, %s91
    %s111 = sphi 0, %s113
    %s114 = sphi 0, %s111
    %s115 = sphi 0, %s114
    %s131 = sphi 0, %s115
    %s137 = sphi 0, %s139
    %s140 = sphi 0, %s137
    %s141 = sphi 0, %s140
    %s157 = sphi 0, %s141
  $region4: #{basic_block_forward.4} parent=0 // loop_header_branch
    %15 = sbr.rel (%p13) target = $region8
  $region5: #{basic_block_forward.4} parent=0 // loop_body
    %s17 = ssub.s32 %s12, 1
    %s18 = ssub.s32 %s12, 2
    %s19 = sadd.s32 %s12, 1
    %s20 = ssub.s32 %s12, %s19
    %p21 = scmp.eq.s32.totalorder %s20, 0
    %s23 = sadd.s32 %s22, 1
    %s24 = scalar_select %p21, %s22, %s23
    %p27 = pneg %p21
    %p28 = scmp.eq.s32.totalorder %s12, 1
    %p29 = por %p27, %p28
    %p30 = scmp.ne.s32.totalorder %s22, %s25
    %p31 = scmp.eq.s32.totalorder %s12, 0
    %p32 = por %p30, %p31
    %p33 = scmp.ne.s32.totalorder %s22, %s25
    %p34 = scmp.eq.s32.totalorder %s17, 1
    %p35 = por %p33, %p34
    %p36 = scmp.ne.s32.totalorder %s25, %s26
    %p37 = scmp.eq.s32.totalorder %s17, 0
    %p38 = por %p36, %p37
    %p39 = scmp.ne.s32.totalorder %s25, %s26
    %p40 = scmp.eq.s32.totalorder %s18, 1
    %p41 = por %p39, %p40
    %p43 = scmp.ne.s32.totalorder %s26, %s42
    %p44 = scmp.eq.s32.totalorder %s18, 0
    %p45 = por %p43, %p44
    %s47 = sadd.s32 %s46, 1
    %p50 = scmp.eq.s32.totalorder %s12, 1
    %p51 = scmp.ne.s32.totalorder %s46, %s48
    %p52 = scmp.eq.s32.totalorder %s12, 0
    %p53 = por %p51, %p52
    %p54 = scmp.ne.s32.totalorder %s46, %s48
    %p55 = scmp.eq.s32.totalorder %s17, 1
    %p56 = por %p54, %p55
    %p57 = scmp.ne.s32.totalorder %s48, %s49
    %p58 = scmp.eq.s32.totalorder %s17, 0
    %p59 = por %p57, %p58
    %p60 = scmp.ne.s32.totalorder %s48, %s49
    %p61 = scmp.eq.s32.totalorder %s18, 1
    %p62 = por %p60, %p61
    %p64 = scmp.ne.s32.totalorder %s49, %s63
    %p65 = scmp.eq.s32.totalorder %s18, 0
    %p66 = por %p64, %p65
    %s68 = sadd.s32 %s67, 1
    %p71 = scmp.eq.s32.totalorder %s12, 1
    %p72 = scmp.ne.s32.totalorder %s67, %s69
    %p73 = scmp.eq.s32.totalorder %s12, 0
    %p74 = por %p72, %p73
    %p75 = scmp.ne.s32.totalorder %s67, %s69
    %p76 = scmp.eq.s32.totalorder %s17, 1
    %p77 = por %p75, %p76
    %p78 = scmp.ne.s32.totalorder %s69, %s70
    %p79 = scmp.eq.s32.totalorder %s17, 0
    %p80 = por %p78, %p79
    %p81 = scmp.ne.s32.totalorder %s69, %s70
    %p82 = scmp.eq.s32.totalorder %s18, 1
    %p83 = por %p81, %p82
    %p85 = scmp.ne.s32.totalorder %s70, %s84
    %p86 = scmp.eq.s32.totalorder %s18, 0
    %p87 = por %p85, %p86
    %s89 = sadd.s32 %s88, 1
    %p92 = scmp.eq.s32.totalorder %s12, 1
    %p93 = scmp.ne.s32.totalorder %s88, %s90
    %p94 = scmp.eq.s32.totalorder %s12, 0
    %p95 = por %p93, %p94
    %p96 = scmp.ne.s32.totalorder %s88, %s90
    %p97 = scmp.eq.s32.totalorder %s17, 1
    %p98 = por %p96, %p97
    %p99 = scmp.ne.s32.totalorder %s90, %s91
    %p100 = scmp.eq.s32.totalorder %s17, 0
    %p101 = por %p99, %p100
    %p102 = scmp.ne.s32.totalorder %s90, %s91
    %p103 = scmp.eq.s32.totalorder %s18, 1
    %p104 = por %p102, %p103
    %p106 = scmp.ne.s32.totalorder %s91, %s105
    %p107 = scmp.eq.s32.totalorder %s18, 0
    %p108 = por %p106, %p107
    %s109 = ssub.s32 %s12, %s19
    %p110 = scmp.eq.s32.totalorder %s109, 0
    %s112 = sadd.s32 %s111, 1
    %s113 = scalar_select %p110, %s111, %s112
    %p116 = pneg %p110
    %p117 = scmp.eq.s32.totalorder %s12, 1
    %p118 = por %p116, %p117
    %p119 = scmp.ne.s32.totalorder %s111, %s114
    %p120 = scmp.eq.s32.totalorder %s12, 0
    %p121 = por %p119, %p120
    %p122 = scmp.ne.s32.totalorder %s111, %s114
    %p123 = scmp.eq.s32.totalorder %s17, 1
    %p124 = por %p122, %p123
    %p125 = scmp.ne.s32.totalorder %s114, %s115
    %p126 = scmp.eq.s32.totalorder %s17, 0
    %p127 = por %p125, %p126
    %p128 = scmp.ne.s32.totalorder %s114, %s115
    %p129 = scmp.eq.s32.totalorder %s18, 1
    %p130 = por %p128, %p129
    %p132 = scmp.ne.s32.totalorder %s115, %s131
    %p133 = scmp.eq.s32.totalorder %s18, 0
    %p134 = por %p132, %p133
    %s135 = ssub.s32 %s12, %s19
    %p136 = scmp.eq.s32.totalorder %s135, 0
    %s138 = sadd.s32 %s137, 1
    %s139 = scalar_select %p136, %s137, %s138
    %p142 = pneg %p136
    %p143 = scmp.eq.s32.totalorder %s12, 1
    %p144 = por %p142, %p143
    %p145 = scmp.ne.s32.totalorder %s137, %s140
    %p146 = scmp.eq.s32.totalorder %s12, 0
    %p147 = por %p145, %p146
    %p148 = scmp.ne.s32.totalorder %s137, %s140
    %p149 = scmp.eq.s32.totalorder %s17, 1
    %p150 = por %p148, %p149
    %p151 = scmp.ne.s32.totalorder %s140, %s141
    %p152 = scmp.eq.s32.totalorder %s17, 0
    %p153 = por %p151, %p152
    %p154 = scmp.ne.s32.totalorder %s140, %s141
    %p155 = scmp.eq.s32.totalorder %s18, 1
    %p156 = por %p154, %p155
    %p158 = scmp.ne.s32.totalorder %s141, %s157
    %p159 = scmp.eq.s32.totalorder %s18, 0
    %p160 = por %p158, %p159
    %p161 = scmp.le.s32.totalorder 1, %s12
    %p162 = scmp.lt.s32.totalorder %s12, 3
    %p163 = pnand %p161, %p162
    %p164 = pneg %p163
    // Predicated region
    $region9: #{basic_block_forward.4} parent=5 // pred_check
      _
    $region10: #{basic_block_forward.4} parent=5 // pred_check_branch
      %166 = sbr.rel (%p163) target = $region12
    $region11: #{basic_block_forward.4} parent=5 // pred_region
      %s167 = ssub.s32 %s12, 1
      // Predicated region
      $region13: #{basic_block_forward.4} parent=11 // pred_check
        %p168 = pneg %p59
      $region14: #{basic_block_forward.4} parent=11 // pred_check_branch
        %170 = sbr.rel (%p168) target = $region16
      $region15: #{basic_block_forward.4} parent=11 // pred_region
        _
      $region16: #{basic_block_forward.4} parent=11 // pred_fallthru
        _
      // Predicated region
      $region17: #{basic_block_forward.4} parent=11 // pred_check
        %p171 = pneg %p80
      $region18: #{basic_block_forward.4} parent=11 // pred_check_branch
        %173 = sbr.rel (%p171) target = $region20
      $region19: #{basic_block_forward.4} parent=11 // pred_region
        _
      $region20: #{basic_block_forward.4} parent=11 // pred_fallthru
        _
      // Predicated region
      $region21: #{basic_block_forward.4} parent=11 // pred_check
        %p174 = pneg %p101
      $region22: #{basic_block_forward.4} parent=11 // pred_check_branch
        %176 = sbr.rel (%p174) target = $region24
      $region23: #{basic_block_forward.4} parent=11 // pred_region
        _
      $region24: #{basic_block_forward.4} parent=11 // pred_fallthru
        _
    $region12: #{basic_block_forward.4} parent=5 // pred_fallthru
      _
    %p177 = scmp.lt.s32.totalorder %s12, 2
    // Predicated region
    $region25: #{basic_block_forward.4} parent=5 // pred_check
      %p178 = pneg %p177
    $region26: #{basic_block_forward.4} parent=5 // pred_check_branch
      %180 = sbr.rel (%p178) target = $region28
    $region27: #{basic_block_forward.4} parent=5 // pred_region
      // Predicated region
      $region29: #{basic_block_forward.4} parent=27 // pred_check
        %p181 = pneg %p32
      $region30: #{basic_block_forward.4} parent=27 // pred_check_branch
        %183 = sbr.rel (%p181) target = $region32
      $region31: #{basic_block_forward.4} parent=27 // pred_region
        %p184 = scmp.lt.s32.totalorder %s12, 1
        %s185 = scalar_select %p184, %s12, 1
        %s186 = smul.addr %s185, 8
        %s187 = smul.addr %s186, 4
        %s188 = scalar_lea.vmem %s0, %s187
      $region32: #{basic_block_forward.4} parent=27 // pred_fallthru
        _
    $region28: #{basic_block_forward.4} parent=5 // pred_fallthru
      _
    %p189 = scmp.le.s32.totalorder 1, %s12
    %p190 = scmp.lt.s32.totalorder %s12, 3
    %p191 = pnand %p189, %p190
    %p192 = pneg %p191
    // Predicated region
    $region33: #{basic_block_forward.4} parent=5 // pred_check
      _
    $region34: #{basic_block_forward.4} parent=5 // pred_check_branch
      %194 = sbr.rel (%p191) target = $region36
    $region35: #{basic_block_forward.4} parent=5 // pred_region
      %s195 = ssub.s32 %s12, 1
      %p196 = scmp.lt.s32.totalorder %s17, 1
      %s197 = scalar_select %p196, %s17, 1
      %s198 = smul.addr %s197, 8
      %s199 = smul.addr %s198, 4
      %s200 = scalar_lea.vmem %s0, %s199
      %p201 = pneg %p38
      %p202 = pneg %p35
      %p203 = pneg %p59
      %p204 = pneg %p56
      %p205 = pneg %p80
      %p206 = pneg %p77
      %p207 = pneg %p101
      %p208 = pneg %p98
      %p209 = pneg %p127
      %p210 = pneg %p124
      %p211 = scmp.lt.s32.totalorder %s17, 1
      %s212 = scalar_select %p211, %s17, 1
      %s213 = smul.addr %s212, 8
      %s214 = smul.addr %s213, 4
      %s215 = scalar_lea.vmem %s4, %s214
      %p216 = pneg %p153
      %p217 = pneg %p150
      %p218 = scmp.lt.s32.totalorder %s17, 1
      %s219 = scalar_select %p218, %s17, 1
      %s220 = smul.addr %s219, 2
      %s221 = scalar_lea.vmem %s5, %s220
      %p222 = scmp.lt.s32.totalorder %s17, 1
      %s223 = scalar_select %p222, %s17, 1
      %s224 = smul.addr %s223, 8
      %s225 = smul.addr %s224, 4
      %s226 = scalar_lea.vmem %s0, %s225
      %p227 = scmp.lt.s32.totalorder %s17, 1
      %s228 = scalar_select %p227, %s17, 1
      %s229 = smul.addr %s228, 8
      %s230 = smul.addr %s229, 4
      %s231 = scalar_lea.vmem %s4, %s230
      %p232 = scmp.lt.s32.totalorder %s17, 1
      %s233 = scalar_select %p232, %s17, 1
      %s234 = smul.addr %s233, 2
      %s235 = scalar_lea.vmem %s5, %s234
      %237 = vst [vmem:[#allocation2] sm:$0xf] 0
      %238 = vst [vmem:[#allocation2 + $0x4] sm:$0x1] 0
      %s239 = scalar_lea.vmem [#allocation2], 72
      %240 = vst [vmem:[%s239] sm:$0xf] 0
      %241 = vst [vmem:[%s239 + $0x4] sm:$0x1] 0
      %s242 = scalar_lea.vmem [#allocation2], 8
      %vm243 = vcmask 1040384
      %vm244 = vsmask.f32 256
      %vm245 = vmand %vm243, %vm244
      %v246 = vld [vmem:[%s242] sm:$0x1]
      %v247 = vsel %vm245, 0, %v246
      %248 = vst [vmem:[%s242] sm:$0x1] %v247
      %v249 = vld [vmem:[%s242 + $0x8] sm:$0x1]
      %v250 = vsel %vm245, 0, %v249
      %251 = vst [vmem:[%s242 + $0x8] sm:$0x1] %v250
      %v252 = vld [vmem:[%s242 + $0x10] sm:$0x1]
      %v253 = vsel %vm245, 0, %v252
      %254 = vst [vmem:[%s242 + $0x10] sm:$0x1] %v253
      %v255 = vld [vmem:[%s242 + $0x18] sm:$0x1]
      %v256 = vsel %vm245, 0, %v255
      %257 = vst [vmem:[%s242 + $0x18] sm:$0x1] %v256
      %v258 = vld [vmem:[%s242 + $0x20] sm:$0x1]
      %v259 = vsel %vm245, 0, %v258
      %260 = vst [vmem:[%s242 + $0x20] sm:$0x1] %v259
      %v261 = vld [vmem:[%s242 + $0x28] sm:$0x1]
      %v262 = vsel %vm245, 0, %v261
      %263 = vst [vmem:[%s242 + $0x28] sm:$0x1] %v262
      %v264 = vld [vmem:[%s242 + $0x30] sm:$0x1]
      %v265 = vsel %vm245, 0, %v264
      %266 = vst [vmem:[%s242 + $0x30] sm:$0x1] %v265
      %v267 = vld [vmem:[%s242 + $0x38] sm:$0x1]
      %v268 = vsel %vm245, 0, %v267
      %269 = vst [vmem:[%s242 + $0x38] sm:$0x1] %v268
      %vm270 = vsmask.f32 7938
      %vm271 = vmand %vm243, %vm270
      %v272 = vld [vmem:[%s242 + $0x4] sm:$0x1]
      %v273 = vsel %vm271, 0, %v272
      %274 = vst [vmem:[%s242 + $0x4] sm:$0x1] %v273
      %v275 = vld [vmem:[%s242 + $0xc] sm:$0x1]
      %v276 = vsel %vm271, 0, %v275
      %277 = vst [vmem:[%s242 + $0xc] sm:$0x1] %v276
      %v278 = vld [vmem:[%s242 + $0x14] sm:$0x1]
      %v279 = vsel %vm271, 0, %v278
      %280 = vst [vmem:[%s242 + $0x14] sm:$0x1] %v279
      %v281 = vld [vmem:[%s242 + $0x1c] sm:$0x1]
      %v282 = vsel %vm271, 0, %v281
      %283 = vst [vmem:[%s242 + $0x1c] sm:$0x1] %v282
      %v284 = vld [vmem:[%s242 + $0x24] sm:$0x1]
      %v285 = vsel %vm271, 0, %v284
      %286 = vst [vmem:[%s242 + $0x24] sm:$0x1] %v285
      %v287 = vld [vmem:[%s242 + $0x2c] sm:$0x1]
      %v288 = vsel %vm271, 0, %v287
      %289 = vst [vmem:[%s242 + $0x2c] sm:$0x1] %v288
      %v290 = vld [vmem:[%s242 + $0x34] sm:$0x1]
      %v291 = vsel %vm271, 0, %v290
      %292 = vst [vmem:[%s242 + $0x34] sm:$0x1] %v291
      %v293 = vld [vmem:[%s242 + $0x3c] sm:$0x1]
      %v294 = vsel %vm271, 0, %v293
      %295 = vst [vmem:[%s242 + $0x3c] sm:$0x1] %v294
      %v296 = vld [vmem:[%s1] sm:$0x1]
      %v297 = vld [vmem:[%s226] sm:$0xf]
      %v298 = vld [vmem:[%s226 + $0x4] sm:$0xf]
      %v299 = vld [vmem:[%s226 + $0x8] sm:$0xf]
      %v300 = vld [vmem:[%s226 + $0xc] sm:$0xf]
      %v301 = vld [vmem:[%s226 + $0x10] sm:$0xf]
      %v302 = vld [vmem:[%s226 + $0x14] sm:$0xf]
      %v303 = vld [vmem:[%s226 + $0x18] sm:$0xf]
      %v304 = vld [vmem:[%s226 + $0x1c] sm:$0xf]
      %v305 = vunpack.c.l.bf16 %v297
      %v306 = vunpack.c.l.bf16 %v298
      %v307 = vunpack.c.l.bf16 %v299
      %v308 = vunpack.c.l.bf16 %v300
      %v309 = vunpack.c.l.bf16 %v301
      %v310 = vunpack.c.l.bf16 %v302
      %v311 = vunpack.c.l.bf16 %v303
      %v312 = vunpack.c.l.bf16 %v304
      %v314 = vperm.slane %v296, 0
      %v316 = vmul.f32 %v314, %v305
      %v317 = vmul.f32 %v314, %v306
      %v318 = vmul.f32 %v314, %v307
      %v319 = vmul.f32 %v314, %v308
      %v320 = vmul.f32 %v314, %v309
      %v321 = vmul.f32 %v314, %v310
      %v322 = vmul.f32 %v314, %v311
      %v323 = vmul.f32 %v314, %v312
      %v324 = vld [vmem:[%s2] sm:$0x1]
      %v326 = vperm.slane %v324, 0
      %v328 = vadd.f32 %v316, %v326
      %v329 = vadd.f32 %v317, %v326
      %v330 = vadd.f32 %v318, %v326
      %v331 = vadd.f32 %v319, %v326
      %v332 = vadd.f32 %v320, %v326
      %v333 = vadd.f32 %v321, %v326
      %v334 = vadd.f32 %v322, %v326
      %v335 = vadd.f32 %v323, %v326
      %v336 = vmax.f32 %v328, 0.0
      %v337 = vmax.f32 %v329, 0.0
      %v338 = vmax.f32 %v330, 0.0
      %v339 = vmax.f32 %v331, 0.0
      %v340 = vmax.f32 %v332, 0.0
      %v341 = vmax.f32 %v333, 0.0
      %v342 = vmax.f32 %v334, 0.0
      %v343 = vmax.f32 %v335, 0.0
      %v344 = vpack.c.bf16 %v336, %v336
      %v345 = vpack.c.bf16 %v337, %v337
      %v346 = vpack.c.bf16 %v338, %v338
      %v347 = vpack.c.bf16 %v339, %v339
      %v348 = vpack.c.bf16 %v340, %v340
      %v349 = vpack.c.bf16 %v341, %v341
      %v350 = vpack.c.bf16 %v342, %v342
      %v351 = vpack.c.bf16 %v343, %v343
      %v353 = vshrl.u32 %v344, 16
      %v355 = vrot.slane %v353, 7
      %v356 = vshll.u32 %v344, 16
      %v358 = vor.u32 %v355, %v356
      %v359 = vrot.slane %v355, 4
      %v361 = vshrl.u32 %v345, 16
      %v363 = vrot.slane %v361, 7
      %v364 = vshll.u32 %v345, 16
      %v366 = vor.u32 %v363, %v364
      %v367 = vrot.slane %v363, 4
      %v369 = vshrl.u32 %v346, 16
      %v371 = vrot.slane %v369, 7
      %v372 = vshll.u32 %v346, 16
      %v374 = vor.u32 %v371, %v372
      %v375 = vrot.slane %v371, 4
      %v377 = vshrl.u32 %v347, 16
      %v379 = vrot.slane %v377, 7
      %v380 = vshll.u32 %v347, 16
      %v382 = vor.u32 %v379, %v380
      %v383 = vrot.slane %v379, 4
      %v385 = vshrl.u32 %v348, 16
      %v387 = vrot.slane %v385, 7
      %v388 = vshll.u32 %v348, 16
      %v390 = vor.u32 %v387, %v388
      %v391 = vrot.slane %v387, 4
      %v393 = vshrl.u32 %v349, 16
      %v395 = vrot.slane %v393, 7
      %v396 = vshll.u32 %v349, 16
      %v398 = vor.u32 %v395, %v396
      %v399 = vrot.slane %v395, 4
      %v401 = vshrl.u32 %v350, 16
      %v403 = vrot.slane %v401, 7
      %v404 = vshll.u32 %v350, 16
      %v406 = vor.u32 %v403, %v404
      %v407 = vrot.slane %v403, 4
      %v409 = vshrl.u32 %v351, 16
      %v411 = vrot.slane %v409, 7
      %v412 = vshll.u32 %v351, 16
      %v414 = vor.u32 %v411, %v412
      %v415 = vrot.slane %v411, 4
      %vm432 = vcmask 1043456
      %vm433 = vmand %vm432, %vm270
      %v434 = vld [vmem:[%s242] sm:$0xf]
      %v435 = vsel %vm433, %v358, %v434
      %436 = vst [vmem:[%s242] sm:$0xf] %v435
      %v437 = vld [vmem:[%s242 + $0x4] sm:$0x1]
      %v438 = vsel %vm245, %v359, %v437
      %439 = vst [vmem:[%s242 + $0x4] sm:$0x1] %v438
      %v440 = vld [vmem:[%s242 + $0x8] sm:$0xf]
      %v441 = vsel %vm433, %v366, %v440
      %442 = vst [vmem:[%s242 + $0x8] sm:$0xf] %v441
      %v443 = vld [vmem:[%s242 + $0xc] sm:$0x1]
      %v444 = vsel %vm245, %v367, %v443
      %445 = vst [vmem:[%s242 + $0xc] sm:$0x1] %v444
      %v446 = vld [vmem:[%s242 + $0x10] sm:$0xf]
      %v447 = vsel %vm433, %v374, %v446
      %448 = vst [vmem:[%s242 + $0x10] sm:$0xf] %v447
      %v449 = vld [vmem:[%s242 + $0x14] sm:$0x1]
      %v450 = vsel %vm245, %v375, %v449
      %451 = vst [vmem:[%s242 + $0x14] sm:$0x1] %v450
      %v452 = vld [vmem:[%s242 + $0x18] sm:$0xf]
      %v453 = vsel %vm433, %v382, %v452
      %454 = vst [vmem:[%s242 + $0x18] sm:$0xf] %v453
      %v455 = vld [vmem:[%s242 + $0x1c] sm:$0x1]
      %v456 = vsel %vm245, %v383, %v455
      %457 = vst [vmem:[%s242 + $0x1c] sm:$0x1] %v456
      %v458 = vld [vmem:[%s242 + $0x20] sm:$0xf]
      %v459 = vsel %vm433, %v390, %v458
      %460 = vst [vmem:[%s242 + $0x20] sm:$0xf] %v459
      %v461 = vld [vmem:[%s242 + $0x24] sm:$0x1]
      %v462 = vsel %vm245, %v391, %v461
      %463 = vst [vmem:[%s242 + $0x24] sm:$0x1] %v462
      %v464 = vld [vmem:[%s242 + $0x28] sm:$0xf]
      %v465 = vsel %vm433, %v398, %v464
      %466 = vst [vmem:[%s242 + $0x28] sm:$0xf] %v465
      %v467 = vld [vmem:[%s242 + $0x2c] sm:$0x1]
      %v468 = vsel %vm245, %v399, %v467
      %469 = vst [vmem:[%s242 + $0x2c] sm:$0x1] %v468
      %v470 = vld [vmem:[%s242 + $0x30] sm:$0xf]
      %v471 = vsel %vm433, %v406, %v470
      %472 = vst [vmem:[%s242 + $0x30] sm:$0xf] %v471
      %v473 = vld [vmem:[%s242 + $0x34] sm:$0x1]
      %v474 = vsel %vm245, %v407, %v473
      %475 = vst [vmem:[%s242 + $0x34] sm:$0x1] %v474
      %v476 = vld [vmem:[%s242 + $0x38] sm:$0xf]
      %v477 = vsel %vm433, %v414, %v476
      %478 = vst [vmem:[%s242 + $0x38] sm:$0xf] %v477
      %v479 = vld [vmem:[%s242 + $0x3c] sm:$0x1]
      %v480 = vsel %vm245, %v415, %v479
      %481 = vst [vmem:[%s242 + $0x3c] sm:$0x1] %v480
      %v482 = vld [vmem:[#allocation2] sm:$0xf]
      %v483 = vld [vmem:[#allocation2 + $0x8] sm:$0xf]
      %v484 = vld [vmem:[#allocation2 + $0x10] sm:$0xf]
      %v485 = vld [vmem:[#allocation2 + $0x18] sm:$0xf]
      %v486 = vld [vmem:[#allocation2 + $0x20] sm:$0xf]
      %v487 = vld [vmem:[#allocation2 + $0x28] sm:$0xf]
      %v488 = vld [vmem:[#allocation2 + $0x30] sm:$0xf]
      %v489 = vld [vmem:[#allocation2 + $0x38] sm:$0xf]
      %v490 = vld [vmem:[#allocation2 + $0x4] sm:$0x1]
      %v491 = vld [vmem:[#allocation2 + $0xc] sm:$0x1]
      %v492 = vld [vmem:[#allocation2 + $0x14] sm:$0x1]
      %v493 = vld [vmem:[#allocation2 + $0x1c] sm:$0x1]
      %v494 = vld [vmem:[#allocation2 + $0x24] sm:$0x1]
      %v495 = vld [vmem:[#allocation2 + $0x2c] sm:$0x1]
      %v496 = vld [vmem:[#allocation2 + $0x34] sm:$0x1]
      %v497 = vld [vmem:[#allocation2 + $0x3c] sm:$0x1]
      %v498 = vld [vmem:[#allocation2] sm:$0xe]
      %v499 = vld [vmem:[#allocation2 + $0x8] sm:$0xe]
      %v500 = vld [vmem:[#allocation2 + $0x10] sm:$0xe]
      %v501 = vld [vmem:[#allocation2 + $0x18] sm:$0xe]
      %v502 = vld [vmem:[#allocation2 + $0x20] sm:$0xe]
      %v503 = vld [vmem:[#allocation2 + $0x28] sm:$0xe]
      %v504 = vld [vmem:[#allocation2 + $0x30] sm:$0xe]
      %v505 = vld [vmem:[#allocation2 + $0x38] sm:$0xe]
      %v522 = vunpack.c.l.b16 %v482
      %v523 = vunpack.c.l.b16 %v490
      %v524 = vunpack.c.l.b16 %v483
      %v525 = vunpack.c.l.b16 %v491
      %v526 = vunpack.c.l.b16 %v484
      %v527 = vunpack.c.l.b16 %v492
      %v528 = vunpack.c.l.b16 %v485
      %v529 = vunpack.c.l.b16 %v493
      %v530 = vunpack.c.l.b16 %v486
      %v531 = vunpack.c.l.b16 %v494
      %v532 = vunpack.c.l.b16 %v487
      %v533 = vunpack.c.l.b16 %v495
      %v534 = vunpack.c.l.b16 %v488
      %v535 = vunpack.c.l.b16 %v496
      %v536 = vunpack.c.l.b16 %v489
      %v537 = vunpack.c.l.b16 %v497
      %v538 = vpack.c.b16 %v523, %v522
      %v539 = vpack.c.b16 %v525, %v524
      %v540 = vpack.c.b16 %v527, %v526
      %v541 = vpack.c.b16 %v529, %v528
      %v542 = vpack.c.b16 %v531, %v530
      %v543 = vpack.c.b16 %v533, %v532
      %v544 = vpack.c.b16 %v535, %v534
      %v545 = vpack.c.b16 %v537, %v536
      %v547 = vshrl.u32 %v538, 16
      %v549 = vshll.u32 %v538, 16
      %v551 = vrot.slane %v549, 1
      %v552 = vor.u32 %v547, %v551
      %v554 = vshrl.u32 %v539, 16
      %v556 = vshll.u32 %v539, 16
      %v558 = vrot.slane %v556, 1
      %v559 = vor.u32 %v554, %v558
      %v561 = vshrl.u32 %v540, 16
      %v563 = vshll.u32 %v540, 16
      %v565 = vrot.slane %v563, 1
      %v566 = vor.u32 %v561, %v565
      %v568 = vshrl.u32 %v541, 16
      %v570 = vshll.u32 %v541, 16
      %v572 = vrot.slane %v570, 1
      %v573 = vor.u32 %v568, %v572
      %v575 = vshrl.u32 %v542, 16
      %v577 = vshll.u32 %v542, 16
      %v579 = vrot.slane %v577, 1
      %v580 = vor.u32 %v575, %v579
      %v582 = vshrl.u32 %v543, 16
      %v584 = vshll.u32 %v543, 16
      %v586 = vrot.slane %v584, 1
      %v587 = vor.u32 %v582, %v586
      %v589 = vshrl.u32 %v544, 16
      %v591 = vshll.u32 %v544, 16
      %v593 = vrot.slane %v591, 1
      %v594 = vor.u32 %v589, %v593
      %v596 = vshrl.u32 %v545, 16
      %v598 = vshll.u32 %v545, 16
      %v600 = vrot.slane %v598, 1
      %v601 = vor.u32 %v596, %v600
      %v610 = vunpack.c.l.b16 %v498
      %v611 = vunpack.c.l.b16 %v499
      %v612 = vunpack.c.l.b16 %v500
      %v613 = vunpack.c.l.b16 %v501
      %v614 = vunpack.c.l.b16 %v502
      %v615 = vunpack.c.l.b16 %v503
      %v616 = vunpack.c.l.b16 %v504
      %v617 = vunpack.c.l.b16 %v505
      %v618 = vpack.c.b16 %v523, %v610
      %v619 = vpack.c.b16 %v525, %v611
      %v620 = vpack.c.b16 %v527, %v612
      %v621 = vpack.c.b16 %v529, %v613
      %v622 = vpack.c.b16 %v531, %v614
      %v623 = vpack.c.b16 %v533, %v615
      %v624 = vpack.c.b16 %v535, %v616
      %v625 = vpack.c.b16 %v537, %v617
      %v626 = vrot.slane %v618, 1
      %v627 = vrot.slane %v619, 1
      %v628 = vrot.slane %v620, 1
      %v629 = vrot.slane %v621, 1
      %v630 = vrot.slane %v622, 1
      %v631 = vrot.slane %v623, 1
      %v632 = vrot.slane %v624, 1
      %v633 = vrot.slane %v625, 1
      %v634 = vunpack.c.l.b16 %v552
      %v635 = vunpack.c.l.b16 %v626
      %v636 = vunpack.c.l.b16 %v559
      %v637 = vunpack.c.l.b16 %v627
      %v638 = vunpack.c.l.b16 %v566
      %v639 = vunpack.c.l.b16 %v628
      %v640 = vunpack.c.l.b16 %v573
      %v641 = vunpack.c.l.b16 %v629
      %v642 = vunpack.c.l.b16 %v580
      %v643 = vunpack.c.l.b16 %v630
      %v644 = vunpack.c.l.b16 %v587
      %v645 = vunpack.c.l.b16 %v631
      %v646 = vunpack.c.l.b16 %v594
      %v647 = vunpack.c.l.b16 %v632
      %v648 = vunpack.c.l.b16 %v601
      %v649 = vunpack.c.l.b16 %v633
      %v650 = vld [vmem:[%s3] sm:$0xf]
      %v651 = vld [vmem:[%s3 + $0x4] sm:$0xf]
      %v652 = vld [vmem:[%s3 + $0x8] sm:$0xf]
      %v653 = vld [vmem:[%s3 + $0xc] sm:$0xf]
      %v654 = vld [vmem:[%s3 + $0x10] sm:$0xf]
      %v655 = vld [vmem:[%s3 + $0x14] sm:$0xf]
      %v656 = vld [vmem:[%s3 + $0x18] sm:$0xf]
      %v657 = vld [vmem:[%s3 + $0x1c] sm:$0xf]
      %v658 = vld [vmem:[%s3 + $0x20] sm:$0xf]
      %v659 = vld [vmem:[%s3 + $0x24] sm:$0xf]
      %v660 = vld [vmem:[%s3 + $0x28] sm:$0xf]
      %v661 = vld [vmem:[%s3 + $0x2c] sm:$0xf]
      %v662 = vld [vmem:[%s3 + $0x30] sm:$0xf]
      %v663 = vld [vmem:[%s3 + $0x34] sm:$0xf]
      %v664 = vld [vmem:[%s3 + $0x38] sm:$0xf]
      %v665 = vld [vmem:[%s3 + $0x3c] sm:$0xf]
      %v666 = vld [vmem:[%s3 + $0x40] sm:$0xf]
      %v667 = vld [vmem:[%s3 + $0x44] sm:$0xf]
      %v668 = vld [vmem:[%s3 + $0x48] sm:$0xf]
      %v669 = vld [vmem:[%s3 + $0x4c] sm:$0xf]
      %v670 = vld [vmem:[%s3 + $0x50] sm:$0xf]
      %v671 = vld [vmem:[%s3 + $0x54] sm:$0xf]
      %v672 = vld [vmem:[%s3 + $0x58] sm:$0xf]
      %v673 = vld [vmem:[%s3 + $0x5c] sm:$0xf]
      %v674 = vld [vmem:[%s3 + $0x60] sm:$0xf]
      %v675 = vld [vmem:[%s3 + $0x64] sm:$0xf]
      %v676 = vld [vmem:[%s3 + $0x68] sm:$0xf]
      %v677 = vld [vmem:[%s3 + $0x6c] sm:$0xf]
      %v678 = vld [vmem:[%s3 + $0x70] sm:$0xf]
      %v679 = vld [vmem:[%s3 + $0x74] sm:$0xf]
      %v680 = vld [vmem:[%s3 + $0x78] sm:$0xf]
      %v681 = vld [vmem:[%s3 + $0x7c] sm:$0xf]
      %v682 = vld [vmem:[%s3 + $0x80] sm:$0xf]
      %v683 = vld [vmem:[%s3 + $0x84] sm:$0xf]
      %v684 = vld [vmem:[%s3 + $0x88] sm:$0xf]
      %v685 = vld [vmem:[%s3 + $0x8c] sm:$0xf]
      %v686 = vld [vmem:[%s3 + $0x90] sm:$0xf]
      %v687 = vld [vmem:[%s3 + $0x94] sm:$0xf]
      %v688 = vld [vmem:[%s3 + $0x98] sm:$0xf]
      %v689 = vld [vmem:[%s3 + $0x9c] sm:$0xf]
      %v690 = vld [vmem:[%s3 + $0xa0] sm:$0xf]
      %v691 = vld [vmem:[%s3 + $0xa4] sm:$0xf]
      %v692 = vld [vmem:[%s3 + $0xa8] sm:$0xf]
      %v693 = vld [vmem:[%s3 + $0xac] sm:$0xf]
      %v694 = vld [vmem:[%s3 + $0xb0] sm:$0xf]
      %v695 = vld [vmem:[%s3 + $0xb4] sm:$0xf]
      %v696 = vld [vmem:[%s3 + $0xb8] sm:$0xf]
      %v697 = vld [vmem:[%s3 + $0xbc] sm:$0xf]
      %v698 = vld [vmem:[%s242] sm:$0xf]
      %v699 = vld [vmem:[%s242 + $0x8] sm:$0xf]
      %v700 = vld [vmem:[%s242 + $0x10] sm:$0xf]
      %v701 = vld [vmem:[%s242 + $0x18] sm:$0xf]
      %v702 = vld [vmem:[%s242 + $0x20] sm:$0xf]
      %v703 = vld [vmem:[%s242 + $0x28] sm:$0xf]
      %v704 = vld [vmem:[%s242 + $0x30] sm:$0xf]
      %v705 = vld [vmem:[%s242 + $0x38] sm:$0xf]
      %v706 = vld [vmem:[%s242 + $0x4] sm:$0x1]
      %v707 = vld [vmem:[%s242 + $0xc] sm:$0x1]
      %v708 = vld [vmem:[%s242 + $0x14] sm:$0x1]
      %v709 = vld [vmem:[%s242 + $0x1c] sm:$0x1]
      %v710 = vld [vmem:[%s242 + $0x24] sm:$0x1]
      %v711 = vld [vmem:[%s242 + $0x2c] sm:$0x1]
      %v712 = vld [vmem:[%s242 + $0x34] sm:$0x1]
      %v713 = vld [vmem:[%s242 + $0x3c] sm:$0x1]
      %v714 = vld [vmem:[%s242] sm:$0xe]
      %v715 = vld [vmem:[%s242 + $0x8] sm:$0xe]
      %v716 = vld [vmem:[%s242 + $0x10] sm:$0xe]
      %v717 = vld [vmem:[%s242 + $0x18] sm:$0xe]
      %v718 = vld [vmem:[%s242 + $0x20] sm:$0xe]
      %v719 = vld [vmem:[%s242 + $0x28] sm:$0xe]
      %v720 = vld [vmem:[%s242 + $0x30] sm:$0xe]
      %v721 = vld [vmem:[%s242 + $0x38] sm:$0xe]
      %v738 = vunpack.c.l.b16 %v698
      %v739 = vunpack.c.l.b16 %v706
      %v740 = vunpack.c.l.b16 %v699
      %v741 = vunpack.c.l.b16 %v707
      %v742 = vunpack.c.l.b16 %v700
      %v743 = vunpack.c.l.b16 %v708
      %v744 = vunpack.c.l.b16 %v701
      %v745 = vunpack.c.l.b16 %v709
      %v746 = vunpack.c.l.b16 %v702
      %v747 = vunpack.c.l.b16 %v710
      %v748 = vunpack.c.l.b16 %v703
      %v749 = vunpack.c.l.b16 %v711
      %v750 = vunpack.c.l.b16 %v704
      %v751 = vunpack.c.l.b16 %v712
      %v752 = vunpack.c.l.b16 %v705
      %v753 = vunpack.c.l.b16 %v713
      %v754 = vpack.c.b16 %v739, %v738
      %v755 = vpack.c.b16 %v741, %v740
      %v756 = vpack.c.b16 %v743, %v742
      %v757 = vpack.c.b16 %v745, %v744
      %v758 = vpack.c.b16 %v747, %v746
      %v759 = vpack.c.b16 %v749, %v748
      %v760 = vpack.c.b16 %v751, %v750
      %v761 = vpack.c.b16 %v753, %v752
      %v763 = vshrl.u32 %v754, 16
      %v765 = vshll.u32 %v754, 16
      %v767 = vrot.slane %v765, 1
      %v768 = vor.u32 %v763, %v767
      %v770 = vshrl.u32 %v755, 16
      %v772 = vshll.u32 %v755, 16
      %v774 = vrot.slane %v772, 1
      %v775 = vor.u32 %v770, %v774
      %v777 = vshrl.u32 %v756, 16
      %v779 = vshll.u32 %v756, 16
      %v781 = vrot.slane %v779, 1
      %v782 = vor.u32 %v777, %v781
      %v784 = vshrl.u32 %v757, 16
      %v786 = vshll.u32 %v757, 16
      %v788 = vrot.slane %v786, 1
      %v789 = vor.u32 %v784, %v788
      %v791 = vshrl.u32 %v758, 16
      %v793 = vshll.u32 %v758, 16
      %v795 = vrot.slane %v793, 1
      %v796 = vor.u32 %v791, %v795
      %v798 = vshrl.u32 %v759, 16
      %v800 = vshll.u32 %v759, 16
      %v802 = vrot.slane %v800, 1
      %v803 = vor.u32 %v798, %v802
      %v805 = vshrl.u32 %v760, 16
      %v807 = vshll.u32 %v760, 16
      %v809 = vrot.slane %v807, 1
      %v810 = vor.u32 %v805, %v809
      %v812 = vshrl.u32 %v761, 16
      %v814 = vshll.u32 %v761, 16
      %v816 = vrot.slane %v814, 1
      %v817 = vor.u32 %v812, %v816
      %v826 = vunpack.c.l.b16 %v714
      %v827 = vunpack.c.l.b16 %v715
      %v828 = vunpack.c.l.b16 %v716
      %v829 = vunpack.c.l.b16 %v717
      %v830 = vunpack.c.l.b16 %v718
      %v831 = vunpack.c.l.b16 %v719
      %v832 = vunpack.c.l.b16 %v720
      %v833 = vunpack.c.l.b16 %v721
      %v834 = vpack.c.b16 %v739, %v826
      %v835 = vpack.c.b16 %v741, %v827
      %v836 = vpack.c.b16 %v743, %v828
      %v837 = vpack.c.b16 %v745, %v829
      %v838 = vpack.c.b16 %v747, %v830
      %v839 = vpack.c.b16 %v749, %v831
      %v840 = vpack.c.b16 %v751, %v832
      %v841 = vpack.c.b16 %v753, %v833
      %v842 = vrot.slane %v834, 1
      %v843 = vrot.slane %v835, 1
      %v844 = vrot.slane %v836, 1
      %v845 = vrot.slane %v837, 1
      %v846 = vrot.slane %v838, 1
      %v847 = vrot.slane %v839, 1
      %v848 = vrot.slane %v840, 1
      %v849 = vrot.slane %v841, 1
      %v850 = vunpack.c.l.b16 %v768
      %v851 = vunpack.c.l.b16 %v842
      %v852 = vunpack.c.l.b16 %v775
      %v853 = vunpack.c.l.b16 %v843
      %v854 = vunpack.c.l.b16 %v782
      %v855 = vunpack.c.l.b16 %v844
      %v856 = vunpack.c.l.b16 %v789
      %v857 = vunpack.c.l.b16 %v845
      %v858 = vunpack.c.l.b16 %v796
      %v859 = vunpack.c.l.b16 %v846
      %v860 = vunpack.c.l.b16 %v803
      %v861 = vunpack.c.l.b16 %v847
      %v862 = vunpack.c.l.b16 %v810
      %v863 = vunpack.c.l.b16 %v848
      %v864 = vunpack.c.l.b16 %v817
      %v865 = vunpack.c.l.b16 %v849
      %s866 = scalar_lea.vmem %s3, 192
      %v867 = vld [vmem:[%s866] sm:$0xf]
      %v868 = vld [vmem:[%s866 + $0x4] sm:$0xf]
      %v869 = vld [vmem:[%s866 + $0x8] sm:$0xf]
      %v870 = vld [vmem:[%s866 + $0xc] sm:$0xf]
      %v871 = vld [vmem:[%s866 + $0x10] sm:$0xf]
      %v872 = vld [vmem:[%s866 + $0x14] sm:$0xf]
      %v873 = vld [vmem:[%s866 + $0x18] sm:$0xf]
      %v874 = vld [vmem:[%s866 + $0x1c] sm:$0xf]
      %v875 = vld [vmem:[%s866 + $0x20] sm:$0xf]
      %v876 = vld [vmem:[%s866 + $0x24] sm:$0xf]
      %v877 = vld [vmem:[%s866 + $0x28] sm:$0xf]
      %v878 = vld [vmem:[%s866 + $0x2c] sm:$0xf]
      %v879 = vld [vmem:[%s866 + $0x30] sm:$0xf]
      %v880 = vld [vmem:[%s866 + $0x34] sm:$0xf]
      %v881 = vld [vmem:[%s866 + $0x38] sm:$0xf]
      %v882 = vld [vmem:[%s866 + $0x3c] sm:$0xf]
      %v883 = vld [vmem:[%s866 + $0x40] sm:$0xf]
      %v884 = vld [vmem:[%s866 + $0x44] sm:$0xf]
      %v885 = vld [vmem:[%s866 + $0x48] sm:$0xf]
      %v886 = vld [vmem:[%s866 + $0x4c] sm:$0xf]
      %v887 = vld [vmem:[%s866 + $0x50] sm:$0xf]
      %v888 = vld [vmem:[%s866 + $0x54] sm:$0xf]
      %v889 = vld [vmem:[%s866 + $0x58] sm:$0xf]
      %v890 = vld [vmem:[%s866 + $0x5c] sm:$0xf]
      %v891 = vld [vmem:[%s866 + $0x60] sm:$0xf]
      %v892 = vld [vmem:[%s866 + $0x64] sm:$0xf]
      %v893 = vld [vmem:[%s866 + $0x68] sm:$0xf]
      %v894 = vld [vmem:[%s866 + $0x6c] sm:$0xf]
      %v895 = vld [vmem:[%s866 + $0x70] sm:$0xf]
      %v896 = vld [vmem:[%s866 + $0x74] sm:$0xf]
      %v897 = vld [vmem:[%s866 + $0x78] sm:$0xf]
      %v898 = vld [vmem:[%s866 + $0x7c] sm:$0xf]
      %v899 = vld [vmem:[%s866 + $0x80] sm:$0xf]
      %v900 = vld [vmem:[%s866 + $0x84] sm:$0xf]
      %v901 = vld [vmem:[%s866 + $0x88] sm:$0xf]
      %v902 = vld [vmem:[%s866 + $0x8c] sm:$0xf]
      %v903 = vld [vmem:[%s866 + $0x90] sm:$0xf]
      %v904 = vld [vmem:[%s866 + $0x94] sm:$0xf]
      %v905 = vld [vmem:[%s866 + $0x98] sm:$0xf]
      %v906 = vld [vmem:[%s866 + $0x9c] sm:$0xf]
      %v907 = vld [vmem:[%s866 + $0xa0] sm:$0xf]
      %v908 = vld [vmem:[%s866 + $0xa4] sm:$0xf]
      %v909 = vld [vmem:[%s866 + $0xa8] sm:$0xf]
      %v910 = vld [vmem:[%s866 + $0xac] sm:$0xf]
      %v911 = vld [vmem:[%s866 + $0xb0] sm:$0xf]
      %v912 = vld [vmem:[%s866 + $0xb4] sm:$0xf]
      %v913 = vld [vmem:[%s866 + $0xb8] sm:$0xf]
      %v914 = vld [vmem:[%s866 + $0xbc] sm:$0xf]
      %v915 = vpack.c.b16 %v740, %v738
      %v916 = vpack.c.b16 %v852, %v850
      %v917 = vpack.c.b16 %v853, %v851
      %v918 = vpack.c.b16 %v744, %v742
      %v919 = vpack.c.b16 %v856, %v854
      %v920 = vpack.c.b16 %v857, %v855
      %v921 = vpack.c.b16 %v748, %v746
      %v922 = vpack.c.b16 %v860, %v858
      %v923 = vpack.c.b16 %v861, %v859
      %v924 = vpack.c.b16 %v752, %v750
      %v925 = vpack.c.b16 %v864, %v862
      %v926 = vpack.c.b16 %v865, %v863
      %v987 = vunpack.c.l.b16 %v867
      %v988 = vunpack.c.l.b16 %v868
      %v989 = vunpack.c.l.b16 %v869
      %v990 = vunpack.c.l.b16 %v870
      %v991 = vunpack.c.l.b16 %v871
      %v992 = vunpack.c.l.b16 %v872
      %v993 = vunpack.c.l.b16 %v873
      %v994 = vunpack.c.l.b16 %v874
      %v995 = vunpack.c.l.b16 %v875
      %v996 = vunpack.c.l.b16 %v876
      %v997 = vunpack.c.l.b16 %v877
      %v998 = vunpack.c.l.b16 %v878
      %v999 = vunpack.c.l.b16 %v879
      %v1000 = vunpack.c.l.b16 %v880
      %v1001 = vunpack.c.l.b16 %v881
      %v1002 = vunpack.c.l.b16 %v882
      %v1003 = vunpack.c.l.b16 %v883
      %v1004 = vunpack.c.l.b16 %v884
      %v1005 = vunpack.c.l.b16 %v885
      %v1006 = vunpack.c.l.b16 %v886
      %v1007 = vunpack.c.l.b16 %v887
      %v1008 = vunpack.c.l.b16 %v888
      %v1009 = vunpack.c.l.b16 %v889
      %v1010 = vunpack.c.l.b16 %v890
      %v1011 = vunpack.c.l.b16 %v891
      %v1012 = vunpack.c.l.b16 %v892
      %v1013 = vunpack.c.l.b16 %v893
      %v1014 = vunpack.c.l.b16 %v894
      %v1015 = vunpack.c.l.b16 %v895
      %v1016 = vunpack.c.l.b16 %v896
      %v1017 = vunpack.c.l.b16 %v897
      %v1018 = vunpack.c.l.b16 %v898
      %v1019 = vunpack.c.l.b16 %v899
      %v1020 = vunpack.c.l.b16 %v900
      %v1021 = vunpack.c.l.b16 %v901
      %v1022 = vunpack.c.l.b16 %v902
      %v1023 = vunpack.c.l.b16 %v903
      %v1024 = vunpack.c.l.b16 %v904
      %v1025 = vunpack.c.l.b16 %v905
      %v1026 = vunpack.c.l.b16 %v906
      %v1027 = vunpack.c.l.b16 %v907
      %v1028 = vunpack.c.l.b16 %v908
      %v1029 = vunpack.c.l.b16 %v909
      %v1030 = vunpack.c.l.b16 %v910
      %v1031 = vunpack.c.l.b16 %v911
      %v1032 = vunpack.c.l.b16 %v912
      %v1033 = vunpack.c.l.b16 %v913
      %v1034 = vunpack.c.l.b16 %v914
      %v1035 = vpack.c.b16 %v988, %v987
      %v1036 = vpack.c.b16 %v990, %v989
      %v1037 = vpack.c.b16 %v992, %v991
      %v1038 = vpack.c.b16 %v994, %v993
      %v1039 = vpack.c.b16 %v996, %v995
      %v1040 = vpack.c.b16 %v998, %v997
      %v1041 = vpack.c.b16 %v1000, %v999
      %v1042 = vpack.c.b16 %v1002, %v1001
      %v1043 = vpack.c.b16 %v1004, %v1003
      %v1044 = vpack.c.b16 %v1006, %v1005
      %v1045 = vpack.c.b16 %v1008, %v1007
      %v1046 = vpack.c.b16 %v1010, %v1009
      %v1047 = vpack.c.b16 %v1012, %v1011
      %v1048 = vpack.c.b16 %v1014, %v1013
      %v1049 = vpack.c.b16 %v1016, %v1015
      %v1050 = vpack.c.b16 %v1018, %v1017
      %v1051 = vpack.c.b16 %v1020, %v1019
      %v1052 = vpack.c.b16 %v1022, %v1021
      %v1053 = vpack.c.b16 %v1024, %v1023
      %v1054 = vpack.c.b16 %v1026, %v1025
      %v1055 = vpack.c.b16 %v1028, %v1027
      %v1056 = vpack.c.b16 %v1030, %v1029
      %v1057 = vpack.c.b16 %v1032, %v1031
      %v1058 = vpack.c.b16 %v1034, %v1033
      %1083 = vmatpush.bf16.msra.mxu0 %v1042
      %1084 = vmatpush.bf16.msra.mxu0 %v1041
      %1085 = vmatpush.bf16.msra.mxu0 %v1040
      %1086 = vmatpush.bf16.msra.mxu0 %v1039
      %1087 = vmatpush.bf16.msra.mxu0 %v1038
      %1088 = vmatpush.bf16.msra.mxu0 %v1037
      %1089 = vmatpush.bf16.msra.mxu0 %v1036
      %1090 = vmatpush.bf16.msra.mxu0 %v1035
      %1091 = vmatmul.bf16.gmra.mxu0 %v915
      %v1092 = vpop.f32.mrf.mxu0
      %v1093 = vadd.f32 0.0, %v1092
      %v1094 = vpop.f32.mrf.mxu0
      %v1095 = vadd.f32 0.0, %v1094
      %1096 = vmatmul.bf16.gmra.mxu0 %v918
      %v1097 = vpop.f32.mrf.mxu0
      %v1098 = vadd.f32 0.0, %v1097
      %v1099 = vpop.f32.mrf.mxu0
      %v1100 = vadd.f32 0.0, %v1099
      %1101 = vmatmul.bf16.gmra.mxu0 %v921
      %v1102 = vpop.f32.mrf.mxu0
      %v1103 = vadd.f32 0.0, %v1102
      %v1104 = vpop.f32.mrf.mxu0
      %v1105 = vadd.f32 0.0, %v1104
      %1106 = vmatmul.bf16.gmra.mxu0 %v924
      %v1107 = vpop.f32.mrf.mxu0
      %v1108 = vadd.f32 0.0, %v1107
      %v1109 = vpop.f32.mrf.mxu0
      %v1110 = vadd.f32 0.0, %v1109
      %1111 = vdwg.mxu0
      %1112 = vmatpush.bf16.msra.mxu0 %v1050
      %1113 = vmatpush.bf16.msra.mxu0 %v1049
      %1114 = vmatpush.bf16.msra.mxu0 %v1048
      %1115 = vmatpush.bf16.msra.mxu0 %v1047
      %1116 = vmatpush.bf16.msra.mxu0 %v1046
      %1117 = vmatpush.bf16.msra.mxu0 %v1045
      %1118 = vmatpush.bf16.msra.mxu0 %v1044
      %1119 = vmatpush.bf16.msra.mxu0 %v1043
      %1120 = vmatmul.bf16.gmra.mxu0 %v916
      %v1121 = vpop.f32.mrf.mxu0
      %v1122 = vadd.f32 %v1093, %v1121
      %v1123 = vpop.f32.mrf.mxu0
      %v1124 = vadd.f32 %v1095, %v1123
      %1125 = vmatmul.bf16.gmra.mxu0 %v919
      %v1126 = vpop.f32.mrf.mxu0
      %v1127 = vadd.f32 %v1098, %v1126
      %v1128 = vpop.f32.mrf.mxu0
      %v1129 = vadd.f32 %v1100, %v1128
      %1130 = vmatmul.bf16.gmra.mxu0 %v922
      %v1131 = vpop.f32.mrf.mxu0
      %v1132 = vadd.f32 %v1103, %v1131
      %v1133 = vpop.f32.mrf.mxu0
      %v1134 = vadd.f32 %v1105, %v1133
      %1135 = vmatmul.bf16.gmra.mxu0 %v925
      %v1136 = vpop.f32.mrf.mxu0
      %v1137 = vadd.f32 %v1108, %v1136
      %v1138 = vpop.f32.mrf.mxu0
      %v1139 = vadd.f32 %v1110, %v1138
      %1140 = vdwg.mxu0
      %1141 = vmatpush.bf16.msra.mxu0 %v1058
      %1142 = vmatpush.bf16.msra.mxu0 %v1057
      %1143 = vmatpush.bf16.msra.mxu0 %v1056
      %1144 = vmatpush.bf16.msra.mxu0 %v1055
      %1145 = vmatpush.bf16.msra.mxu0 %v1054
      %1146 = vmatpush.bf16.msra.mxu0 %v1053
      %1147 = vmatpush.bf16.msra.mxu0 %v1052
      %1148 = vmatpush.bf16.msra.mxu0 %v1051
      %1149 = vmatmul.bf16.gmra.mxu0 %v917
      %v1150 = vpop.f32.mrf.mxu0
      %v1151 = vadd.f32 %v1122, %v1150
      %v1152 = vpop.f32.mrf.mxu0
      %v1153 = vadd.f32 %v1124, %v1152
      %1154 = vmatmul.bf16.gmra.mxu0 %v920
      %v1155 = vpop.f32.mrf.mxu0
      %v1156 = vadd.f32 %v1127, %v1155
      %v1157 = vpop.f32.mrf.mxu0
      %v1158 = vadd.f32 %v1129, %v1157
      %1159 = vmatmul.bf16.gmra.mxu0 %v923
      %v1160 = vpop.f32.mrf.mxu0
      %v1161 = vadd.f32 %v1132, %v1160
      %v1162 = vpop.f32.mrf.mxu0
      %v1163 = vadd.f32 %v1134, %v1162
      %1164 = vmatmul.bf16.gmra.mxu0 %v926
      %v1165 = vpop.f32.mrf.mxu0
      %v1166 = vadd.f32 %v1137, %v1165
      %v1167 = vpop.f32.mrf.mxu0
      %v1168 = vadd.f32 %v1139, %v1167
      %1169 = vdwg.mxu0
      %v1170 = vpack.c.b16 %v524, %v522
      %v1171 = vpack.c.b16 %v636, %v634
      %v1172 = vpack.c.b16 %v637, %v635
      %v1173 = vpack.c.b16 %v528, %v526
      %v1174 = vpack.c.b16 %v640, %v638
      %v1175 = vpack.c.b16 %v641, %v639
      %v1176 = vpack.c.b16 %v532, %v530
      %v1177 = vpack.c.b16 %v644, %v642
      %v1178 = vpack.c.b16 %v645, %v643
      %v1179 = vpack.c.b16 %v536, %v534
      %v1180 = vpack.c.b16 %v648, %v646
      %v1181 = vpack.c.b16 %v649, %v647
      %v1242 = vunpack.c.l.b16 %v650
      %v1243 = vunpack.c.l.b16 %v651
      %v1244 = vunpack.c.l.b16 %v652
      %v1245 = vunpack.c.l.b16 %v653
      %v1246 = vunpack.c.l.b16 %v654
      %v1247 = vunpack.c.l.b16 %v655
      %v1248 = vunpack.c.l.b16 %v656
      %v1249 = vunpack.c.l.b16 %v657
      %v1250 = vunpack.c.l.b16 %v658
      %v1251 = vunpack.c.l.b16 %v659
      %v1252 = vunpack.c.l.b16 %v660
      %v1253 = vunpack.c.l.b16 %v661
      %v1254 = vunpack.c.l.b16 %v662
      %v1255 = vunpack.c.l.b16 %v663
      %v1256 = vunpack.c.l.b16 %v664
      %v1257 = vunpack.c.l.b16 %v665
      %v1258 = vunpack.c.l.b16 %v666
      %v1259 = vunpack.c.l.b16 %v667
      %v1260 = vunpack.c.l.b16 %v668
      %v1261 = vunpack.c.l.b16 %v669
      %v1262 = vunpack.c.l.b16 %v670
      %v1263 = vunpack.c.l.b16 %v671
      %v1264 = vunpack.c.l.b16 %v672
      %v1265 = vunpack.c.l.b16 %v673
      %v1266 = vunpack.c.l.b16 %v674
      %v1267 = vunpack.c.l.b16 %v675
      %v1268 = vunpack.c.l.b16 %v676
      %v1269 = vunpack.c.l.b16 %v677
      %v1270 = vunpack.c.l.b16 %v678
      %v1271 = vunpack.c.l.b16 %v679
      %v1272 = vunpack.c.l.b16 %v680
      %v1273 = vunpack.c.l.b16 %v681
      %v1274 = vunpack.c.l.b16 %v682
      %v1275 = vunpack.c.l.b16 %v683
      %v1276 = vunpack.c.l.b16 %v684
      %v1277 = vunpack.c.l.b16 %v685
      %v1278 = vunpack.c.l.b16 %v686
      %v1279 = vunpack.c.l.b16 %v687
      %v1280 = vunpack.c.l.b16 %v688
      %v1281 = vunpack.c.l.b16 %v689
      %v1282 = vunpack.c.l.b16 %v690
      %v1283 = vunpack.c.l.b16 %v691
      %v1284 = vunpack.c.l.b16 %v692
      %v1285 = vunpack.c.l.b16 %v693
      %v1286 = vunpack.c.l.b16 %v694
      %v1287 = vunpack.c.l.b16 %v695
      %v1288 = vunpack.c.l.b16 %v696
      %v1289 = vunpack.c.l.b16 %v697
      %v1290 = vpack.c.b16 %v1243, %v1242
      %v1291 = vpack.c.b16 %v1245, %v1244
      %v1292 = vpack.c.b16 %v1247, %v1246
      %v1293 = vpack.c.b16 %v1249, %v1248
      %v1294 = vpack.c.b16 %v1251, %v1250
      %v1295 = vpack.c.b16 %v1253, %v1252
      %v1296 = vpack.c.b16 %v1255, %v1254
      %v1297 = vpack.c.b16 %v1257, %v1256
      %v1298 = vpack.c.b16 %v1259, %v1258
      %v1299 = vpack.c.b16 %v1261, %v1260
      %v1300 = vpack.c.b16 %v1263, %v1262
      %v1301 = vpack.c.b16 %v1265, %v1264
      %v1302 = vpack.c.b16 %v1267, %v1266
      %v1303 = vpack.c.b16 %v1269, %v1268
      %v1304 = vpack.c.b16 %v1271, %v1270
      %v1305 = vpack.c.b16 %v1273, %v1272
      %v1306 = vpack.c.b16 %v1275, %v1274
      %v1307 = vpack.c.b16 %v1277, %v1276
      %v1308 = vpack.c.b16 %v1279, %v1278
      %v1309 = vpack.c.b16 %v1281, %v1280
      %v1310 = vpack.c.b16 %v1283, %v1282
      %v1311 = vpack.c.b16 %v1285, %v1284
      %v1312 = vpack.c.b16 %v1287, %v1286
      %v1313 = vpack.c.b16 %v1289, %v1288
      %1338 = vmatpush.bf16.msra.mxu0 %v1297
      %1339 = vmatpush.bf16.msra.mxu0 %v1296
      %1340 = vmatpush.bf16.msra.mxu0 %v1295
      %1341 = vmatpush.bf16.msra.mxu0 %v1294
      %1342 = vmatpush.bf16.msra.mxu0 %v1293
      %1343 = vmatpush.bf16.msra.mxu0 %v1292
      %1344 = vmatpush.bf16.msra.mxu0 %v1291
      %1345 = vmatpush.bf16.msra.mxu0 %v1290
      %1346 = vmatmul.bf16.gmra.mxu0 %v1170
      %v1347 = vpop.f32.mrf.mxu0
      %v1348 = vadd.f32 %v1151, %v1347
      %v1349 = vpop.f32.mrf.mxu0
      %v1350 = vadd.f32 %v1153, %v1349
      %1351 = vmatmul.bf16.gmra.mxu0 %v1173
      %v1352 = vpop.f32.mrf.mxu0
      %v1353 = vadd.f32 %v1156, %v1352
      %v1354 = vpop.f32.mrf.mxu0
      %v1355 = vadd.f32 %v1158, %v1354
      %1356 = vmatmul.bf16.gmra.mxu0 %v1176
      %v1357 = vpop.f32.mrf.mxu0
      %v1358 = vadd.f32 %v1161, %v1357
      %v1359 = vpop.f32.mrf.mxu0
      %v1360 = vadd.f32 %v1163, %v1359
      %1361 = vmatmul.bf16.gmra.mxu0 %v1179
      %v1362 = vpop.f32.mrf.mxu0
      %v1363 = vadd.f32 %v1166, %v1362
      %v1364 = vpop.f32.mrf.mxu0
      %v1365 = vadd.f32 %v1168, %v1364
      %1366 = vdwg.mxu0
      %1367 = vmatpush.bf16.msra.mxu0 %v1305
      %1368 = vmatpush.bf16.msra.mxu0 %v1304
      %1369 = vmatpush.bf16.msra.mxu0 %v1303
      %1370 = vmatpush.bf16.msra.mxu0 %v1302
      %1371 = vmatpush.bf16.msra.mxu0 %v1301
      %1372 = vmatpush.bf16.msra.mxu0 %v1300
      %1373 = vmatpush.bf16.msra.mxu0 %v1299
      %1374 = vmatpush.bf16.msra.mxu0 %v1298
      %1375 = vmatmul.bf16.gmra.mxu0 %v1171
      %v1376 = vpop.f32.mrf.mxu0
      %v1377 = vadd.f32 %v1348, %v1376
      %v1378 = vpop.f32.mrf.mxu0
      %v1379 = vadd.f32 %v1350, %v1378
      %1380 = vmatmul.bf16.gmra.mxu0 %v1174
      %v1381 = vpop.f32.mrf.mxu0
      %v1382 = vadd.f32 %v1353, %v1381
      %v1383 = vpop.f32.mrf.mxu0
      %v1384 = vadd.f32 %v1355, %v1383
      %1385 = vmatmul.bf16.gmra.mxu0 %v1177
      %v1386 = vpop.f32.mrf.mxu0
      %v1387 = vadd.f32 %v1358, %v1386
      %v1388 = vpop.f32.mrf.mxu0
      %v1389 = vadd.f32 %v1360, %v1388
      %1390 = vmatmul.bf16.gmra.mxu0 %v1180
      %v1391 = vpop.f32.mrf.mxu0
      %v1392 = vadd.f32 %v1363, %v1391
      %v1393 = vpop.f32.mrf.mxu0
      %v1394 = vadd.f32 %v1365, %v1393
      %1395 = vdwg.mxu0
      %1396 = vmatpush.bf16.msra.mxu0 %v1313
      %1397 = vmatpush.bf16.msra.mxu0 %v1312
      %1398 = vmatpush.bf16.msra.mxu0 %v1311
      %1399 = vmatpush.bf16.msra.mxu0 %v1310
      %1400 = vmatpush.bf16.msra.mxu0 %v1309
      %1401 = vmatpush.bf16.msra.mxu0 %v1308
      %1402 = vmatpush.bf16.msra.mxu0 %v1307
      %1403 = vmatpush.bf16.msra.mxu0 %v1306
      %1404 = vmatmul.bf16.gmra.mxu0 %v1172
      %v1405 = vpop.f32.mrf.mxu0
      %v1406 = vadd.f32 %v1377, %v1405
      %v1407 = vpop.f32.mrf.mxu0
      %v1408 = vadd.f32 %v1379, %v1407
      %1409 = vmatmul.bf16.gmra.mxu0 %v1175
      %v1410 = vpop.f32.mrf.mxu0
      %v1411 = vadd.f32 %v1382, %v1410
      %v1412 = vpop.f32.mrf.mxu0
      %v1413 = vadd.f32 %v1384, %v1412
      %1414 = vmatmul.bf16.gmra.mxu0 %v1178
      %v1415 = vpop.f32.mrf.mxu0
      %v1416 = vadd.f32 %v1387, %v1415
      %v1417 = vpop.f32.mrf.mxu0
      %v1418 = vadd.f32 %v1389, %v1417
      %1419 = vmatmul.bf16.gmra.mxu0 %v1181
      %v1420 = vpop.f32.mrf.mxu0
      %v1421 = vadd.f32 %v1392, %v1420
      %v1422 = vpop.f32.mrf.mxu0
      %v1423 = vadd.f32 %v1394, %v1422
      %1424 = vdwg.mxu0
      %s1425 = scalar_lea.vmem [#allocation2], 16
      %v1426 = vld [vmem:[%s1425] sm:$0xf]
      %v1427 = vld [vmem:[%s1425 + $0x8] sm:$0xf]
      %v1428 = vld [vmem:[%s1425 + $0x10] sm:$0xf]
      %v1429 = vld [vmem:[%s1425 + $0x18] sm:$0xf]
      %v1430 = vld [vmem:[%s1425 + $0x20] sm:$0xf]
      %v1431 = vld [vmem:[%s1425 + $0x28] sm:$0xf]
      %v1432 = vld [vmem:[%s1425 + $0x30] sm:$0xf]
      %v1433 = vld [vmem:[%s1425 + $0x38] sm:$0xf]
      %v1434 = vld [vmem:[%s1425 + $0x4] sm:$0x1]
      %v1435 = vld [vmem:[%s1425 + $0xc] sm:$0x1]
      %v1436 = vld [vmem:[%s1425 + $0x14] sm:$0x1]
      %v1437 = vld [vmem:[%s1425 + $0x1c] sm:$0x1]
      %v1438 = vld [vmem:[%s1425 + $0x24] sm:$0x1]
      %v1439 = vld [vmem:[%s1425 + $0x2c] sm:$0x1]
      %v1440 = vld [vmem:[%s1425 + $0x34] sm:$0x1]
      %v1441 = vld [vmem:[%s1425 + $0x3c] sm:$0x1]
      %v1442 = vld [vmem:[%s1425] sm:$0xe]
      %v1443 = vld [vmem:[%s1425 + $0x8] sm:$0xe]
      %v1444 = vld [vmem:[%s1425 + $0x10] sm:$0xe]
      %v1445 = vld [vmem:[%s1425 + $0x18] sm:$0xe]
      %v1446 = vld [vmem:[%s1425 + $0x20] sm:$0xe]
      %v1447 = vld [vmem:[%s1425 + $0x28] sm:$0xe]
      %v1448 = vld [vmem:[%s1425 + $0x30] sm:$0xe]
      %v1449 = vld [vmem:[%s1425 + $0x38] sm:$0xe]
      %v1466 = vunpack.c.l.b16 %v1426
      %v1467 = vunpack.c.l.b16 %v1434
      %v1468 = vunpack.c.l.b16 %v1427
      %v1469 = vunpack.c.l.b16 %v1435
      %v1470 = vunpack.c.l.b16 %v1428
      %v1471 = vunpack.c.l.b16 %v1436
      %v1472 = vunpack.c.l.b16 %v1429
      %v1473 = vunpack.c.l.b16 %v1437
      %v1474 = vunpack.c.l.b16 %v1430
      %v1475 = vunpack.c.l.b16 %v1438
      %v1476 = vunpack.c.l.b16 %v1431
      %v1477 = vunpack.c.l.b16 %v1439
      %v1478 = vunpack.c.l.b16 %v1432
      %v1479 = vunpack.c.l.b16 %v1440
      %v1480 = vunpack.c.l.b16 %v1433
      %v1481 = vunpack.c.l.b16 %v1441
      %v1482 = vpack.c.b16 %v1467, %v1466
      %v1483 = vpack.c.b16 %v1469, %v1468
      %v1484 = vpack.c.b16 %v1471, %v1470
      %v1485 = vpack.c.b16 %v1473, %v1472
      %v1486 = vpack.c.b16 %v1475, %v1474
      %v1487 = vpack.c.b16 %v1477, %v1476
      %v1488 = vpack.c.b16 %v1479, %v1478
      %v1489 = vpack.c.b16 %v1481, %v1480
      %v1491 = vshrl.u32 %v1482, 16
      %v1493 = vshll.u32 %v1482, 16
      %v1495 = vrot.slane %v1493, 1
      %v1496 = vor.u32 %v1491, %v1495
      %v1498 = vshrl.u32 %v1483, 16
      %v1500 = vshll.u32 %v1483, 16
      %v1502 = vrot.slane %v1500, 1
      %v1503 = vor.u32 %v1498, %v1502
      %v1505 = vshrl.u32 %v1484, 16
      %v1507 = vshll.u32 %v1484, 16
      %v1509 = vrot.slane %v1507, 1
      %v1510 = vor.u32 %v1505, %v1509
      %v1512 = vshrl.u32 %v1485, 16
      %v1514 = vshll.u32 %v1485, 16
      %v1516 = vrot.slane %v1514, 1
      %v1517 = vor.u32 %v1512, %v1516
      %v1519 = vshrl.u32 %v1486, 16
      %v1521 = vshll.u32 %v1486, 16
      %v1523 = vrot.slane %v1521, 1
      %v1524 = vor.u32 %v1519, %v1523
      %v1526 = vshrl.u32 %v1487, 16
      %v1528 = vshll.u32 %v1487, 16
      %v1530 = vrot.slane %v1528, 1
      %v1531 = vor.u32 %v1526, %v1530
      %v1533 = vshrl.u32 %v1488, 16
      %v1535 = vshll.u32 %v1488, 16
      %v1537 = vrot.slane %v1535, 1
      %v1538 = vor.u32 %v1533, %v1537
      %v1540 = vshrl.u32 %v1489, 16
      %v1542 = vshll.u32 %v1489, 16
      %v1544 = vrot.slane %v1542, 1
      %v1545 = vor.u32 %v1540, %v1544
      %v1554 = vunpack.c.l.b16 %v1442
      %v1555 = vunpack.c.l.b16 %v1443
      %v1556 = vunpack.c.l.b16 %v1444
      %v1557 = vunpack.c.l.b16 %v1445
      %v1558 = vunpack.c.l.b16 %v1446
      %v1559 = vunpack.c.l.b16 %v1447
      %v1560 = vunpack.c.l.b16 %v1448
      %v1561 = vunpack.c.l.b16 %v1449
      %v1562 = vpack.c.b16 %v1467, %v1554
      %v1563 = vpack.c.b16 %v1469, %v1555
      %v1564 = vpack.c.b16 %v1471, %v1556
      %v1565 = vpack.c.b16 %v1473, %v1557
      %v1566 = vpack.c.b16 %v1475, %v1558
      %v1567 = vpack.c.b16 %v1477, %v1559
      %v1568 = vpack.c.b16 %v1479, %v1560
      %v1569 = vpack.c.b16 %v1481, %v1561
      %v1570 = vrot.slane %v1562, 1
      %v1571 = vrot.slane %v1563, 1
      %v1572 = vrot.slane %v1564, 1
      %v1573 = vrot.slane %v1565, 1
      %v1574 = vrot.slane %v1566, 1
      %v1575 = vrot.slane %v1567, 1
      %v1576 = vrot.slane %v1568, 1
      %v1577 = vrot.slane %v1569, 1
      %v1578 = vunpack.c.l.b16 %v1496
      %v1579 = vunpack.c.l.b16 %v1570
      %v1580 = vunpack.c.l.b16 %v1503
      %v1581 = vunpack.c.l.b16 %v1571
      %v1582 = vunpack.c.l.b16 %v1510
      %v1583 = vunpack.c.l.b16 %v1572
      %v1584 = vunpack.c.l.b16 %v1517
      %v1585 = vunpack.c.l.b16 %v1573
      %v1586 = vunpack.c.l.b16 %v1524
      %v1587 = vunpack.c.l.b16 %v1574
      %v1588 = vunpack.c.l.b16 %v1531
      %v1589 = vunpack.c.l.b16 %v1575
      %v1590 = vunpack.c.l.b16 %v1538
      %v1591 = vunpack.c.l.b16 %v1576
      %v1592 = vunpack.c.l.b16 %v1545
      %v1593 = vunpack.c.l.b16 %v1577
      %s1594 = scalar_lea.vmem %s3, 384
      %v1595 = vld [vmem:[%s1594] sm:$0xf]
      %v1596 = vld [vmem:[%s1594 + $0x4] sm:$0xf]
      %v1597 = vld [vmem:[%s1594 + $0x8] sm:$0xf]
      %v1598 = vld [vmem:[%s1594 + $0xc] sm:$0xf]
      %v1599 = vld [vmem:[%s1594 + $0x10] sm:$0xf]
      %v1600 = vld [vmem:[%s1594 + $0x14] sm:$0xf]
      %v1601 = vld [vmem:[%s1594 + $0x18] sm:$0xf]
      %v1602 = vld [vmem:[%s1594 + $0x1c] sm:$0xf]
      %v1603 = vld [vmem:[%s1594 + $0x20] sm:$0xf]
      %v1604 = vld [vmem:[%s1594 + $0x24] sm:$0xf]
      %v1605 = vld [vmem:[%s1594 + $0x28] sm:$0xf]
      %v1606 = vld [vmem:[%s1594 + $0x2c] sm:$0xf]
      %v1607 = vld [vmem:[%s1594 + $0x30] sm:$0xf]
      %v1608 = vld [vmem:[%s1594 + $0x34] sm:$0xf]
      %v1609 = vld [vmem:[%s1594 + $0x38] sm:$0xf]
      %v1610 = vld [vmem:[%s1594 + $0x3c] sm:$0xf]
      %v1611 = vld [vmem:[%s1594 + $0x40] sm:$0xf]
      %v1612 = vld [vmem:[%s1594 + $0x44] sm:$0xf]
      %v1613 = vld [vmem:[%s1594 + $0x48] sm:$0xf]
      %v1614 = vld [vmem:[%s1594 + $0x4c] sm:$0xf]
      %v1615 = vld [vmem:[%s1594 + $0x50] sm:$0xf]
      %v1616 = vld [vmem:[%s1594 + $0x54] sm:$0xf]
      %v1617 = vld [vmem:[%s1594 + $0x58] sm:$0xf]
      %v1618 = vld [vmem:[%s1594 + $0x5c] sm:$0xf]
      %v1619 = vld [vmem:[%s1594 + $0x60] sm:$0xf]
      %v1620 = vld [vmem:[%s1594 + $0x64] sm:$0xf]
      %v1621 = vld [vmem:[%s1594 + $0x68] sm:$0xf]
      %v1622 = vld [vmem:[%s1594 + $0x6c] sm:$0xf]
      %v1623 = vld [vmem:[%s1594 + $0x70] sm:$0xf]
      %v1624 = vld [vmem:[%s1594 + $0x74] sm:$0xf]
      %v1625 = vld [vmem:[%s1594 + $0x78] sm:$0xf]
      %v1626 = vld [vmem:[%s1594 + $0x7c] sm:$0xf]
      %v1627 = vld [vmem:[%s1594 + $0x80] sm:$0xf]
      %v1628 = vld [vmem:[%s1594 + $0x84] sm:$0xf]
      %v1629 = vld [vmem:[%s1594 + $0x88] sm:$0xf]
      %v1630 = vld [vmem:[%s1594 + $0x8c] sm:$0xf]
      %v1631 = vld [vmem:[%s1594 + $0x90] sm:$0xf]
      %v1632 = vld [vmem:[%s1594 + $0x94] sm:$0xf]
      %v1633 = vld [vmem:[%s1594 + $0x98] sm:$0xf]
      %v1634 = vld [vmem:[%s1594 + $0x9c] sm:$0xf]
      %v1635 = vld [vmem:[%s1594 + $0xa0] sm:$0xf]
      %v1636 = vld [vmem:[%s1594 + $0xa4] sm:$0xf]
      %v1637 = vld [vmem:[%s1594 + $0xa8] sm:$0xf]
      %v1638 = vld [vmem:[%s1594 + $0xac] sm:$0xf]
      %v1639 = vld [vmem:[%s1594 + $0xb0] sm:$0xf]
      %v1640 = vld [vmem:[%s1594 + $0xb4] sm:$0xf]
      %v1641 = vld [vmem:[%s1594 + $0xb8] sm:$0xf]
      %v1642 = vld [vmem:[%s1594 + $0xbc] sm:$0xf]
      %v1643 = vpack.c.b16 %v1468, %v1466
      %v1644 = vpack.c.b16 %v1580, %v1578
      %v1645 = vpack.c.b16 %v1581, %v1579
      %v1646 = vpack.c.b16 %v1472, %v1470
      %v1647 = vpack.c.b16 %v1584, %v1582
      %v1648 = vpack.c.b16 %v1585, %v1583
      %v1649 = vpack.c.b16 %v1476, %v1474
      %v1650 = vpack.c.b16 %v1588, %v1586
      %v1651 = vpack.c.b16 %v1589, %v1587
      %v1652 = vpack.c.b16 %v1480, %v1478
      %v1653 = vpack.c.b16 %v1592, %v1590
      %v1654 = vpack.c.b16 %v1593, %v1591
      %v1715 = vunpack.c.l.b16 %v1595
      %v1716 = vunpack.c.l.b16 %v1596
      %v1717 = vunpack.c.l.b16 %v1597
      %v1718 = vunpack.c.l.b16 %v1598
      %v1719 = vunpack.c.l.b16 %v1599
      %v1720 = vunpack.c.l.b16 %v1600
      %v1721 = vunpack.c.l.b16 %v1601
      %v1722 = vunpack.c.l.b16 %v1602
      %v1723 = vunpack.c.l.b16 %v1603
      %v1724 = vunpack.c.l.b16 %v1604
      %v1725 = vunpack.c.l.b16 %v1605
      %v1726 = vunpack.c.l.b16 %v1606
      %v1727 = vunpack.c.l.b16 %v1607
      %v1728 = vunpack.c.l.b16 %v1608
      %v1729 = vunpack.c.l.b16 %v1609
      %v1730 = vunpack.c.l.b16 %v1610
      %v1731 = vunpack.c.l.b16 %v1611
      %v1732 = vunpack.c.l.b16 %v1612
      %v1733 = vunpack.c.l.b16 %v1613
      %v1734 = vunpack.c.l.b16 %v1614
      %v1735 = vunpack.c.l.b16 %v1615
      %v1736 = vunpack.c.l.b16 %v1616
      %v1737 = vunpack.c.l.b16 %v1617
      %v1738 = vunpack.c.l.b16 %v1618
      %v1739 = vunpack.c.l.b16 %v1619
      %v1740 = vunpack.c.l.b16 %v1620
      %v1741 = vunpack.c.l.b16 %v1621
      %v1742 = vunpack.c.l.b16 %v1622
      %v1743 = vunpack.c.l.b16 %v1623
      %v1744 = vunpack.c.l.b16 %v1624
      %v1745 = vunpack.c.l.b16 %v1625
      %v1746 = vunpack.c.l.b16 %v1626
      %v1747 = vunpack.c.l.b16 %v1627
      %v1748 = vunpack.c.l.b16 %v1628
      %v1749 = vunpack.c.l.b16 %v1629
      %v1750 = vunpack.c.l.b16 %v1630
      %v1751 = vunpack.c.l.b16 %v1631
      %v1752 = vunpack.c.l.b16 %v1632
      %v1753 = vunpack.c.l.b16 %v1633
      %v1754 = vunpack.c.l.b16 %v1634
      %v1755 = vunpack.c.l.b16 %v1635
      %v1756 = vunpack.c.l.b16 %v1636
      %v1757 = vunpack.c.l.b16 %v1637
      %v1758 = vunpack.c.l.b16 %v1638
      %v1759 = vunpack.c.l.b16 %v1639
      %v1760 = vunpack.c.l.b16 %v1640
      %v1761 = vunpack.c.l.b16 %v1641
      %v1762 = vunpack.c.l.b16 %v1642
      %v1763 = vpack.c.b16 %v1716, %v1715
      %v1764 = vpack.c.b16 %v1718, %v1717
      %v1765 = vpack.c.b16 %v1720, %v1719
      %v1766 = vpack.c.b16 %v1722, %v1721
      %v1767 = vpack.c.b16 %v1724, %v1723
      %v1768 = vpack.c.b16 %v1726, %v1725
      %v1769 = vpack.c.b16 %v1728, %v1727
      %v1770 = vpack.c.b16 %v1730, %v1729
      %v1771 = vpack.c.b16 %v1732, %v1731
      %v1772 = vpack.c.b16 %v1734, %v1733
      %v1773 = vpack.c.b16 %v1736, %v1735
      %v1774 = vpack.c.b16 %v1738, %v1737
      %v1775 = vpack.c.b16 %v1740, %v1739
      %v1776 = vpack.c.b16 %v1742, %v1741
      %v1777 = vpack.c.b16 %v1744, %v1743
      %v1778 = vpack.c.b16 %v1746, %v1745
      %v1779 = vpack.c.b16 %v1748, %v1747
      %v1780 = vpack.c.b16 %v1750, %v1749
      %v1781 = vpack.c.b16 %v1752, %v1751
      %v1782 = vpack.c.b16 %v1754, %v1753
      %v1783 = vpack.c.b16 %v1756, %v1755
      %v1784 = vpack.c.b16 %v1758, %v1757
      %v1785 = vpack.c.b16 %v1760, %v1759
      %v1786 = vpack.c.b16 %v1762, %v1761
      %1811 = vmatpush.bf16.msra.mxu0 %v1770
      %1812 = vmatpush.bf16.msra.mxu0 %v1769
      %1813 = vmatpush.bf16.msra.mxu0 %v1768
      %1814 = vmatpush.bf16.msra.mxu0 %v1767
      %1815 = vmatpush.bf16.msra.mxu0 %v1766
      %1816 = vmatpush.bf16.msra.mxu0 %v1765
      %1817 = vmatpush.bf16.msra.mxu0 %v1764
      %1818 = vmatpush.bf16.msra.mxu0 %v1763
      %1819 = vmatmul.bf16.gmra.mxu0 %v1643
      %v1820 = vpop.f32.mrf.mxu0
      %v1821 = vadd.f32 0.0, %v1820
      %v1822 = vpop.f32.mrf.mxu0
      %v1823 = vadd.f32 0.0, %v1822
      %1824 = vmatmul.bf16.gmra.mxu0 %v1646
      %v1825 = vpop.f32.mrf.mxu0
      %v1826 = vadd.f32 0.0, %v1825
      %v1827 = vpop.f32.mrf.mxu0
      %v1828 = vadd.f32 0.0, %v1827
      %1829 = vmatmul.bf16.gmra.mxu0 %v1649
      %v1830 = vpop.f32.mrf.mxu0
      %v1831 = vadd.f32 0.0, %v1830
      %v1832 = vpop.f32.mrf.mxu0
      %v1833 = vadd.f32 0.0, %v1832
      %1834 = vmatmul.bf16.gmra.mxu0 %v1652
      %v1835 = vpop.f32.mrf.mxu0
      %v1836 = vadd.f32 0.0, %v1835
      %v1837 = vpop.f32.mrf.mxu0
      %v1838 = vadd.f32 0.0, %v1837
      %1839 = vdwg.mxu0
      %1840 = vmatpush.bf16.msra.mxu0 %v1778
      %1841 = vmatpush.bf16.msra.mxu0 %v1777
      %1842 = vmatpush.bf16.msra.mxu0 %v1776
      %1843 = vmatpush.bf16.msra.mxu0 %v1775
      %1844 = vmatpush.bf16.msra.mxu0 %v1774
      %1845 = vmatpush.bf16.msra.mxu0 %v1773
      %1846 = vmatpush.bf16.msra.mxu0 %v1772
      %1847 = vmatpush.bf16.msra.mxu0 %v1771
      %1848 = vmatmul.bf16.gmra.mxu0 %v1644
      %v1849 = vpop.f32.mrf.mxu0
      %v1850 = vadd.f32 %v1821, %v1849
      %v1851 = vpop.f32.mrf.mxu0
      %v1852 = vadd.f32 %v1823, %v1851
      %1853 = vmatmul.bf16.gmra.mxu0 %v1647
      %v1854 = vpop.f32.mrf.mxu0
      %v1855 = vadd.f32 %v1826, %v1854
      %v1856 = vpop.f32.mrf.mxu0
      %v1857 = vadd.f32 %v1828, %v1856
      %1858 = vmatmul.bf16.gmra.mxu0 %v1650
      %v1859 = vpop.f32.mrf.mxu0
      %v1860 = vadd.f32 %v1831, %v1859
      %v1861 = vpop.f32.mrf.mxu0
      %v1862 = vadd.f32 %v1833, %v1861
      %1863 = vmatmul.bf16.gmra.mxu0 %v1653
      %v1864 = vpop.f32.mrf.mxu0
      %v1865 = vadd.f32 %v1836, %v1864
      %v1866 = vpop.f32.mrf.mxu0
      %v1867 = vadd.f32 %v1838, %v1866
      %1868 = vdwg.mxu0
      %1869 = vmatpush.bf16.msra.mxu0 %v1786
      %1870 = vmatpush.bf16.msra.mxu0 %v1785
      %1871 = vmatpush.bf16.msra.mxu0 %v1784
      %1872 = vmatpush.bf16.msra.mxu0 %v1783
      %1873 = vmatpush.bf16.msra.mxu0 %v1782
      %1874 = vmatpush.bf16.msra.mxu0 %v1781
      %1875 = vmatpush.bf16.msra.mxu0 %v1780
      %1876 = vmatpush.bf16.msra.mxu0 %v1779
      %1877 = vmatmul.bf16.gmra.mxu0 %v1645
      %v1878 = vpop.f32.mrf.mxu0
      %v1879 = vadd.f32 %v1850, %v1878
      %v1880 = vpop.f32.mrf.mxu0
      %v1881 = vadd.f32 %v1852, %v1880
      %1882 = vmatmul.bf16.gmra.mxu0 %v1648
      %v1883 = vpop.f32.mrf.mxu0
      %v1884 = vadd.f32 %v1855, %v1883
      %v1885 = vpop.f32.mrf.mxu0
      %v1886 = vadd.f32 %v1857, %v1885
      %1887 = vmatmul.bf16.gmra.mxu0 %v1651
      %v1888 = vpop.f32.mrf.mxu0
      %v1889 = vadd.f32 %v1860, %v1888
      %v1890 = vpop.f32.mrf.mxu0
      %v1891 = vadd.f32 %v1862, %v1890
      %1892 = vmatmul.bf16.gmra.mxu0 %v1654
      %v1893 = vpop.f32.mrf.mxu0
      %v1894 = vadd.f32 %v1865, %v1893
      %v1895 = vpop.f32.mrf.mxu0
      %v1896 = vadd.f32 %v1867, %v1895
      %1897 = vdwg.mxu0
      %v1898 = vadd.f32 %v1406, %v1879
      %v1899 = vadd.f32 %v1408, %v1881
      %v1900 = vadd.f32 %v1411, %v1884
      %v1901 = vadd.f32 %v1413, %v1886
      %v1902 = vadd.f32 %v1416, %v1889
      %v1903 = vadd.f32 %v1418, %v1891
      %v1904 = vadd.f32 %v1421, %v1894
      %v1905 = vadd.f32 %v1423, %v1896
      %v1906 = vpack.c.bf16 %v1898, %v1898
      %v1907 = vpack.c.bf16 %v1899, %v1899
      %v1908 = vpack.c.bf16 %v1900, %v1900
      %v1909 = vpack.c.bf16 %v1901, %v1901
      %v1910 = vpack.c.bf16 %v1902, %v1902
      %v1911 = vpack.c.bf16 %v1903, %v1903
      %v1912 = vpack.c.bf16 %v1904, %v1904
      %v1913 = vpack.c.bf16 %v1905, %v1905
      %1914 = vst [vmem:[%s231] sm:$0xf] %v1906
      %1915 = vst [vmem:[%s231 + $0x4] sm:$0xf] %v1907
      %1916 = vst [vmem:[%s231 + $0x8] sm:$0xf] %v1908
      %1917 = vst [vmem:[%s231 + $0xc] sm:$0xf] %v1909
      %1918 = vst [vmem:[%s231 + $0x10] sm:$0xf] %v1910
      %1919 = vst [vmem:[%s231 + $0x14] sm:$0xf] %v1911
      %1920 = vst [vmem:[%s231 + $0x18] sm:$0xf] %v1912
      %1921 = vst [vmem:[%s231 + $0x1c] sm:$0xf] %v1913
      %v1922 = vadd.f32 %v1898, %v1899
      %v1923 = vadd.f32 %v1922, %v1900
      %v1924 = vadd.f32 %v1923, %v1901
      %v1925 = vadd.f32 %v1924, %v1902
      %v1926 = vadd.f32 %v1925, %v1903
      %v1927 = vadd.f32 %v1926, %v1904
      %v1928 = vadd.f32 %v1927, %v1905
      %v1929 = vrot.slane %v1928, 4
      %v1930 = vadd.f32 %v1928, %v1929
      %v1931 = vrot.slane %v1930, 2
      %v1932 = vadd.f32 %v1930, %v1931
      %v1933 = vrot.slane %v1932, 1
      %v1934 = vadd.f32 %v1932, %v1933
      %v1935 = vmul.f32 %v1934, 0.015625
      %v1936 = vsub.f32 %v1898, %v1935
      %v1937 = vsub.f32 %v1899, %v1935
      %v1938 = vsub.f32 %v1900, %v1935
      %v1939 = vsub.f32 %v1901, %v1935
      %v1940 = vsub.f32 %v1902, %v1935
      %v1941 = vsub.f32 %v1903, %v1935
      %v1942 = vsub.f32 %v1904, %v1935
      %v1943 = vsub.f32 %v1905, %v1935
      %v1944 = vmul.f32 %v1936, %v1936
      %v1945 = vmul.f32 %v1937, %v1937
      %v1946 = vmul.f32 %v1938, %v1938
      %v1947 = vmul.f32 %v1939, %v1939
      %v1948 = vmul.f32 %v1940, %v1940
      %v1949 = vmul.f32 %v1941, %v1941
      %v1950 = vmul.f32 %v1942, %v1942
      %v1951 = vmul.f32 %v1943, %v1943
      %v1952 = vadd.f32 %v1944, %v1945
      %v1953 = vadd.f32 %v1952, %v1946
      %v1954 = vadd.f32 %v1953, %v1947
      %v1955 = vadd.f32 %v1954, %v1948
      %v1956 = vadd.f32 %v1955, %v1949
      %v1957 = vadd.f32 %v1956, %v1950
      %v1958 = vadd.f32 %v1957, %v1951
      %v1959 = vrot.slane %v1958, 4
      %v1960 = vadd.f32 %v1958, %v1959
      %v1961 = vrot.slane %v1960, 2
      %v1962 = vadd.f32 %v1960, %v1961
      %v1963 = vrot.slane %v1962, 1
      %v1964 = vadd.f32 %v1962, %v1963
      %vm1965 = vcmask 1040384
      %v1966 = vsel %vm1965, %v1934, %v1964
      %1967 = vst [vmem:[%s235] sm:$0x3] %v1966
      %p1968 = scmp.lt.s32.totalorder %s17, 1
      %s1969 = scalar_select %p1968, %s17, 1
      %s1970 = smul.addr %s1969, 8
      %s1971 = smul.addr %s1970, 4
      %s1972 = scalar_lea.vmem %s4, %s1971
      %p1973 = scmp.lt.s32.totalorder %s17, 1
      %s1974 = scalar_select %p1973, %s17, 1
      %s1975 = smul.addr %s1974, 2
      %s1976 = scalar_lea.vmem %s5, %s1975
      // Predicated region
      $region37: #{basic_block_forward.4} parent=35 // pred_check
        %p1977 = pneg %p124
      $region38: #{basic_block_forward.4} parent=35 // pred_check_branch
        %1979 = sbr.rel (%p1977) target = $region40
      $region39: #{basic_block_forward.4} parent=35 // pred_region
        _
      $region40: #{basic_block_forward.4} parent=35 // pred_fallthru
        _
      // Predicated region
      $region41: #{basic_block_forward.4} parent=35 // pred_check
        %p1980 = pneg %p150
      $region42: #{basic_block_forward.4} parent=35 // pred_check_branch
        %1982 = sbr.rel (%p1980) target = $region44
      $region43: #{basic_block_forward.4} parent=35 // pred_region
        _
      $region44: #{basic_block_forward.4} parent=35 // pred_fallthru
        _
    $region36: #{basic_block_forward.4} parent=5 // pred_fallthru
      _
    %p1983 = scmp.le.s32.totalorder 2, %s12
    // Predicated region
    $region45: #{basic_block_forward.4} parent=5 // pred_check
      %p1984 = pneg %p1983
    $region46: #{basic_block_forward.4} parent=5 // pred_check_branch
      %1986 = sbr.rel (%p1984) target = $region48
    $region47: #{basic_block_forward.4} parent=5 // pred_region
      %s1987 = ssub.s32 %s12, 2
      // Predicated region
      $region49: #{basic_block_forward.4} parent=47 // pred_check
        %p1988 = pneg %p130
      $region50: #{basic_block_forward.4} parent=47 // pred_check_branch
        %1990 = sbr.rel (%p1988) target = $region52
      $region51: #{basic_block_forward.4} parent=47 // pred_region
        %p1991 = scmp.lt.s32.totalorder %s18, 1
        %s1992 = scalar_select %p1991, %s18, 1
        %s1993 = smul.addr %s1992, 8
        %s1994 = smul.addr %s1993, 4
        %s1995 = scalar_lea.vmem %s4, %s1994
      $region52: #{basic_block_forward.4} parent=47 // pred_fallthru
        _
      // Predicated region
      $region53: #{basic_block_forward.4} parent=47 // pred_check
        %p1996 = pneg %p156
      $region54: #{basic_block_forward.4} parent=47 // pred_check_branch
        %1998 = sbr.rel (%p1996) target = $region56
      $region55: #{basic_block_forward.4} parent=47 // pred_region
        %p1999 = scmp.lt.s32.totalorder %s18, 1
        %s2000 = scalar_select %p1999, %s18, 1
        %s2001 = smul.addr %s2000, 2
        %s2002 = scalar_lea.vmem %s5, %s2001
      $region56: #{basic_block_forward.4} parent=47 // pred_fallthru
        _
    $region48: #{basic_block_forward.4} parent=5 // pred_fallthru
      _
  $region6: #{basic_block_forward.4} parent=0 // loop_footer
    %s16 = sadd.s32 1, %s12
  $region7: #{basic_block_forward.4} parent=0 // loop_footer_branch
    %11 = sbr.rel target = $region3
  $region8: #{basic_block_forward.4} parent=0 // loop_exit
    _

</llo_original>
